<compile_context>
chip_gen: v5e
topology: v5e:2x2
jax: 0.10.0
libtpu: 0.0.40
codegen_flags: <defaults>
</compile_context>

<pallas_src>
import functools
from typing import NamedTuple

import numpy as np
import jax
import jax.numpy as jnp
from jax import lax
from jax.experimental import pallas as pl
from jax.experimental.pallas import tpu as pltpu

PAD = 0           # constants.PAD
NEG_INF = -1e9    # large negative for masked logits (finite => no NaNs)
LN_EPS = 1e-6
ACT_DTYPE = jnp.bfloat16   # storage dtype for weights/activations (f32 accumulation)


class DecoderConfig(NamedTuple):
    d_model: int
    n_head: int
    d_k: int
    d_v: int
    d_inner: int
    n_layers: int


def _itemsize(dt):
    return np.dtype(dt).itemsize


# --------------------- feature probes / small helpers ---------------------

_BUFFERED1_OK = None


def _buffered_one_supported():
    """Probe whether pl.BlockSpec(..., pipeline_mode=pl.Buffered(1)) lowers on
    this JAX / libtpu build.  Single-buffering grid-invariant weights halves
    their VMEM footprint (matters on v7x's 64 MiB VMEM)."""
    global _BUFFERED1_OK
    if _BUFFERED1_OK is None:
        try:
            def _k(x_ref, w_ref, o_ref):
                o_ref[...] = x_ref[...] + w_ref[...]

            x = jnp.zeros((8, 128), jnp.float32)
            out = pl.pallas_call(
                _k,
                out_shape=jax.ShapeDtypeStruct((8, 128), jnp.float32),
                grid=(2,),
                in_specs=[pl.BlockSpec((8, 128), lambda i: (0, 0)),
                          pl.BlockSpec((8, 128), lambda i: (0, 0),
                                       pipeline_mode=pl.Buffered(1))],
                out_specs=pl.BlockSpec((8, 128), lambda i: (0, 0)),
            )(x, x)
            jax.block_until_ready(out)
            _BUFFERED1_OK = True
        except Exception:
            _BUFFERED1_OK = False
    return _BUFFERED1_OK


def _weight_spec(shape):
    """BlockSpec for a grid-invariant 2-D weight operand (index_map constant
    across the grid): single-buffered when supported."""
    if _buffered_one_supported():
        return pl.BlockSpec(shape, lambda b, t: (0, 0),
                            pipeline_mode=pl.Buffered(1))
    return pl.BlockSpec(shape, lambda b, t: (0, 0))


def _vmem_capacity_bytes():
    try:
        return int(pltpu.get_tpu_info().vmem_capacity_bytes)
    except Exception:
        return 64 << 20   # conservative (v7x per-core VMEM)


def _pick_tile(L, target=256):
    """Largest query tile <= target that divides L (multiple of 8 when tiling)."""
    if L <= target:
        return L
    for t_ in range(target - target % 8, 0, -8):
        if L % t_ == 0:
            return t_
    return L


# ------------------------------ kernel body ------------------------------

def _layer_norm(y, g, b, eps):
    mu = jnp.mean(y, axis=-1, keepdims=True)
    var = jnp.mean(jnp.square(y - mu), axis=-1, keepdims=True)
    return (y - mu) * lax.rsqrt(var + eps) * g + b


def _attention_heads(q, k, v, bias, ctx_ref, *, n_head, d_k, d_v):
    """Per-head scaled-dot-product attention.

    q: (tq, H*dk) f32 (already scaled), k/v: (Lk, H*dk)/(Lk, H*dv) in ACT_DTYPE,
    bias: broadcastable to (tq, Lk), f32.  Head outputs are written into the
    lane slices of the VMEM scratch `ctx_ref` (no concat -> no lane repacking,
    only one head's temporaries live at a time).
    """
    q = q.astype(ctx_ref.dtype)
    for h in range(n_head):                                  # static small loop
        q_h = q[:, h * d_k:(h + 1) * d_k]
        k_h = k[:, h * d_k:(h + 1) * d_k]
        v_h = v[:, h * d_v:(h + 1) * d_v]
        # contract last dims directly (no explicit transpose), accumulate in f32
        s = lax.dot_general(q_h, k_h, (((1,), (1,)), ((), ())),
                            preferred_element_type=jnp.float32)
        s = s + bias
        m = jnp.max(s, axis=-1, keepdims=True)
        e = jnp.exp(s - m)
        p = e * pl.reciprocal(jnp.sum(e, axis=-1, keepdims=True), approx=True)
        ctx_ref[:, h * d_v:(h + 1) * d_v] = jnp.dot(
            p.astype(ctx_ref.dtype), v_h,
            preferred_element_type=jnp.float32).astype(ctx_ref.dtype)


def _decoder_layer_kernel(
        x_ref, enc_ref, spad_ref, epad_ref,
        s_wqkv_ref, s_wo_ref, s_bo_ref, s_g_ref, s_b_ref,
        c_wq_ref, c_wkv_ref, c_wo_ref, c_bo_ref, c_g_ref, c_b_ref,
        f_w1_ref, f_b1_ref, f_w2_ref, f_b2_ref, f_g_ref, f_b_ref,
        o_ref, ctx_ref,
        *, n_head, d_k, d_v, tq, scale, eps, single_tile):
    """One fused decoder layer for one (batch, query-tile) grid cell.

    x_ref  : (1, Lt, d)  layer input (K/V source; the query tile is a slice)
    enc_ref: (1, Ls, d)  encoder output (cross-attn K/V source)
    spad/epad: (1, 1, L) additive key-pad biases (0 or NEG_INF), f32
    ctx_ref: (tq, H*dv)  VMEM scratch for the merged head outputs
    """
    H, dk, dv = n_head, d_k, d_v
    x_full = x_ref[0]                                   # (Lt, d) ACT_DTYPE
    Lt = x_full.shape[0]

    t = pl.program_id(1)
    if single_tile:
        q0 = 0
        x_tile = x_full                                 # (tq, d) == (Lt, d)
    else:
        q0 = pl.multiple_of(t * tq, tq)
        x_tile = x_ref[0, pl.ds(q0, tq), :]             # (tq, d)

    # ---------------- masked self-attention ----------------
    # additive bias built in-kernel: key padding + causal upper triangle
    row = lax.broadcasted_iota(jnp.int32, (tq, Lt), 0) + q0
    col = lax.broadcasted_iota(jnp.int32, (tq, Lt), 1)
    s_bias = spad_ref[0] + jnp.where(col > row, jnp.float32(NEG_INF),
                                     jnp.float32(0.0))  # (tq, Lt)

    w_qkv = s_wqkv_ref[...]                             # (d, H*(2dk+dv)) [Wq|Wk|Wv]
    if single_tile:
        qkv = jnp.dot(x_full, w_qkv, preferred_element_type=jnp.float32)
        q = qkv[:, :H * dk]
        kv = qkv[:, H * dk:]
    else:
        q = jnp.dot(x_tile, w_qkv[:, :H * dk], preferred_element_type=jnp.float32)
        kv = jnp.dot(x_full, w_qkv[:, H * dk:], preferred_element_type=jnp.float32)
    q = q * scale                                       # fold 1/sqrt(d_model) into q
    k = kv[:, :H * dk].astype(x_full.dtype)
    v = kv[:, H * dk:].astype(x_full.dtype)
    _attention_heads(q, k, v, s_bias, ctx_ref, n_head=H, d_k=dk, d_v=dv)

    attn = jnp.dot(ctx_ref[...], s_wo_ref[...],
                   preferred_element_type=jnp.float32) + s_bo_ref[...]
    y1 = _layer_norm(attn + x_tile.astype(jnp.float32),
                     s_g_ref[...], s_b_ref[...], eps)   # (tq, d) f32

    # ---------------- encoder-decoder attention ----------------
    enc = enc_ref[0]                                    # (Ls, d) ACT_DTYPE
    y1_act = y1.astype(x_full.dtype)
    q2 = jnp.dot(y1_act, c_wq_ref[...], preferred_element_type=jnp.float32) * scale
    kv2 = jnp.dot(enc, c_wkv_ref[...], preferred_element_type=jnp.float32)
    k2 = kv2[:, :H * dk].astype(x_full.dtype)
    v2 = kv2[:, H * dk:].astype(x_full.dtype)
    _attention_heads(q2, k2, v2, epad_ref[0], ctx_ref, n_head=H, d_k=dk, d_v=dv)

    attn2 = jnp.dot(ctx_ref[...], c_wo_ref[...],
                    preferred_element_type=jnp.float32) + c_bo_ref[...]
    y2 = _layer_norm(attn2 + y1, c_g_ref[...], c_b_ref[...], eps)

    # ---------------- position-wise FFN (Conv1d k=1 == matmul) ----------------
    h1 = jnp.dot(y2.astype(x_full.dtype), f_w1_ref[...],
                 preferred_element_type=jnp.float32) + f_b1_ref[...]
    h1 = jnp.maximum(h1, 0.0).astype(x_full.dtype)
    out = jnp.dot(h1, f_w2_ref[...],
                  preferred_element_type=jnp.float32) + f_b2_ref[...]
    y3 = _layer_norm(out + y2, f_g_ref[...], f_b_ref[...], eps)

    o_ref[0] = y3.astype(o_ref.dtype)


# --------------------------- fused-layer wrapper ---------------------------

def decoder_layer_fused(p, x, enc_out, slf_pad, enc_pad, cfg):
    """x:(B,Lt,d), enc_out:(B,Ls,d) in ACT_DTYPE; pad biases:(B,1,L*) f32."""
    B, Lt, d = x.shape
    Ls = enc_out.shape[1]
    H, dk, dv, d_inner = cfg.n_head, cfg.d_k, cfg.d_v, cfg.d_inner
    tq = _pick_tile(Lt)
    n_qt = Lt // tq
    assert tq * n_qt == Lt
    # reference ScaledDotProductAttention uses temper = d_model ** 0.5
    scale = 1.0 / float(np.power(d, 0.5))

    kernel = functools.partial(
        _decoder_layer_kernel, n_head=H, d_k=dk, d_v=dv, tq=tq,
        scale=scale, eps=LN_EPS, single_tile=(n_qt == 1))

    ps, pc, pf = p["slf_attn"], p["enc_attn"], p["pos_ffn"]
    operands = (x, enc_out, slf_pad, enc_pad,
                ps["w_qkv"], ps["w_o"], ps["b_o"], ps["ln_g"], ps["ln_b"],
                pc["w_q"], pc["w_kv"], pc["w_o"], pc["b_o"], pc["ln_g"], pc["ln_b"],
                pf["w1"], pf["b1"], pf["w2"], pf["b2"], pf["ln_g"], pf["ln_b"])

    in_specs = [
        pl.BlockSpec((1, Lt, d), lambda b, t: (b, 0, 0)),   # x (K/V source + residual tile)
        pl.BlockSpec((1, Ls, d), lambda b, t: (b, 0, 0)),   # encoder output
        pl.BlockSpec((1, 1, Lt), lambda b, t: (b, 0, 0)),   # self-attn key pad bias
        pl.BlockSpec((1, 1, Ls), lambda b, t: (b, 0, 0)),   # enc-attn key pad bias
    ] + [_weight_spec(op.shape) for op in operands[4:]]     # grid-invariant weights

    # ----- explicit VMEM budget (defaults are only 16/32 MiB scoped) -----
    wbytes = sum(int(np.prod(op.shape)) * _itemsize(op.dtype) for op in operands[4:])
    wbytes *= 1 if _buffered_one_supported() else 2
    abytes = 2 * ((Lt * d + Ls * d + tq * d) * _itemsize(ACT_DTYPE) + (Lt + Ls) * 4)
    scratch_b = tq * H * dv * _itemsize(ACT_DTYPE)
    temps = 4 * tq * (2 * max(Lt, Ls) + d_inner + 8 * d)    # rough f32 live-temp bound
    vmem_limit = int(max(wbytes + abytes + scratch_b + temps + (4 << 20), 32 << 20))
    vmem_limit = int(min(vmem_limit, int(0.9 * _vmem_capacity_bytes())))

    # ----- advisory cost estimate so XLA schedules glue around the call -----
    flops = 2 * B * (
        Lt * d * H * (2 * dk + dv)             # self-attn fused QKV projection
        + H * Lt * Lt * (dk + dv)              # self-attn scores + context
        + Lt * (H * dv) * d                    # self-attn output projection
        + Lt * d * (H * dk)                    # cross-attn Q projection
        + n_qt * Ls * d * H * (dk + dv)        # cross-attn K/V projection
        + H * Lt * Ls * (dk + dv)              # cross-attn scores + context
        + Lt * (H * dv) * d                    # cross-attn output projection
        + 2 * Lt * d * d_inner)                # FFN
    transcendentals = B * H * Lt * (Lt + Ls)   # softmax exps
    bytes_accessed = (sum(int(np.prod(op.shape)) * _itemsize(op.dtype)
                          for op in operands)
                      + B * Lt * d * _itemsize(ACT_DTYPE))
    cost = pl.CostEstimate(flops=int(flops), transcendentals=int(transcendentals),
                           bytes_accessed=int(bytes_accessed))

    return pl.pallas_call(
        kernel,
        out_shape=jax.ShapeDtypeStruct((B, Lt, d), ACT_DTYPE),
        grid=(B, n_qt),
        in_specs=in_specs,
        out_specs=pl.BlockSpec((1, tq, d), lambda b, t: (b, t, 0)),
        scratch_shapes=[pltpu.VMEM((tq, H * dv), ACT_DTYPE)],
        compiler_params=pltpu.CompilerParams(
            dimension_semantics=("parallel", "parallel"),
            vmem_limit_bytes=vmem_limit),
        cost_estimate=cost,
    )(*operands)


# ------------------------------- forward --------------------------------

def decoder_forward(params, tgt_seq, tgt_pos, src_seq, enc_output, *, cfg, scale=True):
    d_model = cfg.d_model
    B, Lt = tgt_seq.shape
    Ls = src_seq.shape[1]

    # Embedding lookups (data-dependent gathers) + scaling + sinusoid positions
    # stay in XLA glue; everything else runs in one fused Pallas kernel per layer.
    dec_input = params["tgt_word_emb"][tgt_seq]
    if scale:
        dec_input = dec_input * jnp.float32(np.power(d_model, 0.5))
    dec_input = dec_input + params["position_enc"][tgt_pos]
    # embed/attention/relu/residual dropout: identities in eval mode.

    # Additive key-pad biases; the (L,L) pad+causal masks are built inside the
    # kernel from these tiny vectors (no (B,L,L) mask is ever materialized).
    slf_pad = jnp.where(tgt_seq == PAD, NEG_INF, 0.0).astype(jnp.float32).reshape(B, 1, Lt)
    enc_pad = jnp.where(src_seq == PAD, NEG_INF, 0.0).astype(jnp.float32).reshape(B, 1, Ls)

    x = dec_input.astype(ACT_DTYPE)
    enc = enc_output.astype(ACT_DTYPE)
    for layer in params["layers"]:
        x = decoder_layer_fused(layer, x, enc, slf_pad, enc_pad, cfg)
    return x.astype(jnp.float32)


# ----------------------------- parameter init -----------------------------

def position_encoding_init(n_position, d_pos_vec):
    position_enc = np.array([
        [pos / np.power(10000, 2 * (j // 2) / d_pos_vec) for j in range(d_pos_vec)]
        if pos != 0 else np.zeros(d_pos_vec)
        for pos in range(n_position)])
    position_enc[1:, 0::2] = np.sin(position_enc[1:, 0::2])
    position_enc[1:, 1::2] = np.cos(position_enc[1:, 1::2])
    return jnp.asarray(position_enc, dtype=jnp.float32)


def init_params(key, cfg, n_vocab, max_seq_len, dtype=ACT_DTYPE):
    d_model, n_head, d_k, d_v, d_inner, n_layers = cfg
    keys = iter(jax.random.split(key, 4 + n_layers * 16))

    def nxt():
        return next(keys)

    std = float(np.power(d_model, -0.5))
    emb = -std + std * jax.random.normal(nxt(), (n_vocab, d_model), jnp.float32)
    emb = emb.at[PAD].set(0.0)
    pos = position_encoding_init(max_seq_len + 1, d_model)

    def xavier(shape):
        s = float(np.sqrt(2.0 / (shape[0] + shape[1])))
        return (s * jax.random.normal(nxt(), shape, jnp.float32)).astype(dtype)

    def slf_attn_params():
        w_q = xavier((d_model, n_head * d_k))
        w_k = xavier((d_model, n_head * d_k))
        w_v = xavier((d_model, n_head * d_v))
        return dict(
            w_qkv=jnp.concatenate([w_q, w_k, w_v], axis=1),   # fused [Q|K|V] slab
            w_o=xavier((n_head * d_v, d_model)),
            b_o=jnp.zeros((1, d_model), jnp.float32),
            ln_g=jnp.ones((1, d_model), jnp.float32),
            ln_b=jnp.zeros((1, d_model), jnp.float32))

    def enc_attn_params():
        w_k = xavier((d_model, n_head * d_k))
        w_v = xavier((d_model, n_head * d_v))
        return dict(
            w_q=xavier((d_model, n_head * d_k)),
            w_kv=jnp.concatenate([w_k, w_v], axis=1),          # fused [K|V] slab
            w_o=xavier((n_head * d_v, d_model)),
            b_o=jnp.zeros((1, d_model), jnp.float32),
            ln_g=jnp.ones((1, d_model), jnp.float32),
            ln_b=jnp.zeros((1, d_model), jnp.float32))

    def ffn_params():
        return dict(
            w1=xavier((d_model, d_inner)),
            b1=jnp.zeros((1, d_inner), jnp.float32),
            w2=xavier((d_inner, d_model)),
            b2=jnp.zeros((1, d_model), jnp.float32),
            ln_g=jnp.ones((1, d_model), jnp.float32),
            ln_b=jnp.zeros((1, d_model), jnp.float32))

    layers = [dict(slf_attn=slf_attn_params(), enc_attn=enc_attn_params(),
                   pos_ffn=ffn_params()) for _ in range(n_layers)]
    return dict(tgt_word_emb=emb, position_enc=pos, layers=layers)


# --------------------------------- main ---------------------------------

if __name__ == "__main__":
    # Small demo shapes, but lane-aligned (d_model=128, H*d_k=128, d_inner=256).
    B, Lt, Ls = 2, 16, 16
    cfg = DecoderConfig(d_model=128, n_head=2, d_k=64, d_v=64, d_inner=256, n_layers=2)
    n_vocab, max_seq_len = 32, 16

    key = jax.random.PRNGKey(0)
    kp, k1, k2, k3 = jax.random.split(key, 4)
    params = init_params(kp, cfg, n_vocab, max_seq_len)

    tgt_seq = jax.random.randint(k1, (B, Lt), 1, n_vocab)
    tgt_seq = tgt_seq.at[1, 12:].set(PAD)                      # some target padding
    tgt_pos = jnp.where(tgt_seq != PAD,
                        jnp.arange(1, Lt + 1, dtype=jnp.int32)[None, :], PAD)
    src_seq = jax.random.randint(k2, (B, Ls), 1, n_vocab)
    src_seq = src_seq.at[0, 10:].set(PAD)                      # some source padding
    enc_output = jax.random.normal(k3, (B, Ls, cfg.d_model), jnp.float32)

    _buffered_one_supported()   # run the one-time feature probe eagerly

    fwd = jax.jit(functools.partial(decoder_forward, cfg=cfg))
    out = jax.block_until_ready(fwd(params, tgt_seq, tgt_pos, src_seq, enc_output))

    assert out.shape == (B, Lt, cfg.d_model) and out.dtype == jnp.float32
    assert bool(jnp.all(jnp.isfinite(out)))
    print("KERNEL_OK")
</pallas_src>

<mosaic_0001>
module attributes {stable_mosaic.version = 11 : i64} {
  func.func @_k(%arg0: i32, %arg1: memref<8x128xf32, #tpu.memory_space<vmem>>, %arg2: memref<8x128xf32, #tpu.memory_space<vmem>>, %arg3: memref<8x128xf32, #tpu.memory_space<vmem>>) attributes {dimension_semantics = [#tpu.dimension_semantics<arbitrary>], iteration_bounds = array<i64: 2>, scalar_prefetch = 0 : i64, scratch_operands = 0 : i64, tpu.core_type = #tpu.core_type<tc>, window_params = [{pipeline_mode = #tpu.pipeline_mode<synchronous>, transform_indices = @transform_0, window_bounds = array<i64: 8, 128>}, {pipeline_mode = #tpu.pipeline_mode<synchronous>, transform_indices = @transform_1, window_bounds = array<i64: 8, 128>}, {pipeline_mode = #tpu.pipeline_mode<synchronous>, transform_indices = @transform_2, window_bounds = array<i64: 8, 128>}]} {
    %c0 = arith.constant 0 : index
    %c0_0 = arith.constant 0 : index
    %0 = vector.load %arg1[%c0, %c0_0] : memref<8x128xf32, #tpu.memory_space<vmem>>, vector<8x128xf32>
    %c0_1 = arith.constant 0 : index
    %c0_2 = arith.constant 0 : index
    %1 = vector.load %arg2[%c0_1, %c0_2] : memref<8x128xf32, #tpu.memory_space<vmem>>, vector<8x128xf32>
    %2 = arith.addf %0, %1 : vector<8x128xf32>
    %c0_3 = arith.constant 0 : index
    %c0_4 = arith.constant 0 : index
    %3 = vector.load %arg3[%c0_3, %c0_4] : memref<8x128xf32, #tpu.memory_space<vmem>>, vector<8x128xf32>
    tpu.vector_store %arg3[%c0_3, %c0_4], %2 {strides = array<i32>} : memref<8x128xf32, #tpu.memory_space<vmem>>, vector<8x128xf32>,
    return
  }
  func.func @transform_0(%arg0: i32) -> (i32, i32) {
    %c0_i32 = arith.constant 0 : i32
    %c0_i32_0 = arith.constant 0 : i32
    %c0_i32_1 = arith.constant 0 : i32
    return %c0_i32, %c0_i32_0 : i32, i32
  }
  func.func @transform_1(%arg0: i32) -> (i32, i32) {
    %c0_i32 = arith.constant 0 : i32
    %c0_i32_0 = arith.constant 0 : i32
    %c0_i32_1 = arith.constant 0 : i32
    return %c0_i32, %c0_i32_0 : i32, i32
  }
  func.func @transform_2(%arg0: i32) -> (i32, i32) {
    %c0_i32 = arith.constant 0 : i32
    %c0_i32_0 = arith.constant 0 : i32
    %c0_i32_1 = arith.constant 0 : i32
    return %c0_i32, %c0_i32_0 : i32, i32
  }
}

module attributes {stable_mosaic.version = 11 : i64} {
  func.func @_decoder_layer_kernel(%arg0: i32, %arg1: i32, %arg2: memref<1x16x128xbf16, #tpu.memory_space<vmem>>, %arg3: memref<1x16x128xbf16, #tpu.memory_space<vmem>>, %arg4: memref<1x1x16xf32, #tpu.memory_space<vmem>>, %arg5: memref<1x1x16xf32, #tpu.memory_space<vmem>>, %arg6: memref<128x384xbf16, #tpu.memory_space<vmem>>, %arg7: memref<128x128xbf16, #tpu.memory_space<vmem>>, %arg8: memref<1x128xf32, #tpu.memory_space<vmem>>, %arg9: memref<1x128xf32, #tpu.memory_space<vmem>>, %arg10: memref<1x128xf32, #tpu.memory_space<vmem>>, %arg11: memref<128x128xbf16, #tpu.memory_space<vmem>>, %arg12: memref<128x256xbf16, #tpu.memory_space<vmem>>, %arg13: memref<128x128xbf16, #tpu.memory_space<vmem>>, %arg14: memref<1x128xf32, #tpu.memory_space<vmem>>, %arg15: memref<1x128xf32, #tpu.memory_space<vmem>>, %arg16: memref<1x128xf32, #tpu.memory_space<vmem>>, %arg17: memref<128x256xbf16, #tpu.memory_space<vmem>>, %arg18: memref<1x256xf32, #tpu.memory_space<vmem>>, %arg19: memref<256x128xbf16, #tpu.memory_space<vmem>>, %arg20: memref<1x128xf32, #tpu.memory_space<vmem>>, %arg21: memref<1x128xf32, #tpu.memory_space<vmem>>, %arg22: memref<1x128xf32, #tpu.memory_space<vmem>>, %arg23: memref<1x16x128xbf16, #tpu.memory_space<vmem>>, %arg24: memref<16x128xbf16, #tpu.memory_space<vmem>>) attributes {dimension_semantics = [#tpu.dimension_semantics<parallel>, #tpu.dimension_semantics<parallel>], iteration_bounds = array<i64: 2, 1>, scalar_prefetch = 0 : i64, scratch_operands = 1 : i64, tpu.core_type = #tpu.core_type<tc>, window_params = [{transform_indices = @transform_0, window_bounds = array<i64: 1, 16, 128>}, {transform_indices = @transform_1, window_bounds = array<i64: 1, 16, 128>}, {transform_indices = @transform_2, window_bounds = array<i64: 1, 1, 16>}, {transform_indices = @transform_3, window_bounds = array<i64: 1, 1, 16>}, {pipeline_mode = #tpu.pipeline_mode<synchronous>, transform_indices = @transform_4, window_bounds = array<i64: 128, 384>}, {pipeline_mode = #tpu.pipeline_mode<synchronous>, transform_indices = @transform_5, window_bounds = array<i64: 128, 128>}, {pipeline_mode = #tpu.pipeline_mode<synchronous>, transform_indices = @transform_6, window_bounds = array<i64: 1, 128>}, {pipeline_mode = #tpu.pipeline_mode<synchronous>, transform_indices = @transform_7, window_bounds = array<i64: 1, 128>}, {pipeline_mode = #tpu.pipeline_mode<synchronous>, transform_indices = @transform_8, window_bounds = array<i64: 1, 128>}, {pipeline_mode = #tpu.pipeline_mode<synchronous>, transform_indices = @transform_9, window_bounds = array<i64: 128, 128>}, {pipeline_mode = #tpu.pipeline_mode<synchronous>, transform_indices = @transform_10, window_bounds = array<i64: 128, 256>}, {pipeline_mode = #tpu.pipeline_mode<synchronous>, transform_indices = @transform_11, window_bounds = array<i64: 128, 128>}, {pipeline_mode = #tpu.pipeline_mode<synchronous>, transform_indices = @transform_12, window_bounds = array<i64: 1, 128>}, {pipeline_mode = #tpu.pipeline_mode<synchronous>, transform_indices = @transform_13, window_bounds = array<i64: 1, 128>}, {pipeline_mode = #tpu.pipeline_mode<synchronous>, transform_indices = @transform_14, window_bounds = array<i64: 1, 128>}, {pipeline_mode = #tpu.pipeline_mode<synchronous>, transform_indices = @transform_15, window_bounds = array<i64: 128, 256>}, {pipeline_mode = #tpu.pipeline_mode<synchronous>, transform_indices = @transform_16, window_bounds = array<i64: 1, 256>}, {pipeline_mode = #tpu.pipeline_mode<synchronous>, transform_indices = @transform_17, window_bounds = array<i64: 256, 128>}, {pipeline_mode = #tpu.pipeline_mode<synchronous>, transform_indices = @transform_18, window_bounds = array<i64: 1, 128>}, {pipeline_mode = #tpu.pipeline_mode<synchronous>, transform_indices = @transform_19, window_bounds = array<i64: 1, 128>}, {pipeline_mode = #tpu.pipeline_mode<synchronous>, transform_indices = @transform_20, window_bounds = array<i64: 1, 128>}, {transform_indices = @transform_21, window_bounds = array<i64: 1, 16, 128>}]} {
    %c0 = arith.constant 0 : index
    %c0_0 = arith.constant 0 : index
    %c0_1 = arith.constant 0 : index
    %0 = vector.load %arg2[%c0, %c0_0, %c0_1] : memref<1x16x128xbf16, #tpu.memory_space<vmem>>, vector<1x16x128xbf16>
    %1 = vector.shape_cast %0 : vector<1x16x128xbf16> to vector<16x128xbf16>
    %2 = tpu.iota {dimensions = array<i32: 0>} : vector<16x16xi32>
    %c0_i32 = arith.constant 0 : i32
    %3 = vector.broadcast %c0_i32 : i32 to vector<16x16xi32>
    %4 = arith.addi %2, %3 : vector<16x16xi32>
    %5 = tpu.iota {dimensions = array<i32: 1>} : vector<16x16xi32>
    %c0_2 = arith.constant 0 : index
    %c0_3 = arith.constant 0 : index
    %c0_4 = arith.constant 0 : index
    %6 = vector.load %arg4[%c0_2, %c0_3, %c0_4] : memref<1x1x16xf32, #tpu.memory_space<vmem>>, vector<1x1x16xf32>
    %7 = vector.shape_cast %6 : vector<1x1x16xf32> to vector<1x16xf32>
    %8 = arith.cmpi sgt, %5, %4 : vector<16x16xi32>
    %cst = arith.constant -1.000000e+09 : f32
    %cst_5 = arith.constant 0.000000e+00 : f32
    %9 = vector.broadcast %cst : f32 to vector<16x16xf32>
    %10 = vector.broadcast %cst_5 : f32 to vector<16x16xf32>
    %11 = arith.select %8, %9, %10 : vector<16x16xi1>, vector<16x16xf32>
    %12 = vector.broadcast %7 : vector<1x16xf32> to vector<16x16xf32>
    %13 = arith.addf %12, %11 : vector<16x16xf32>
    %c0_6 = arith.constant 0 : index
    %c0_7 = arith.constant 0 : index
    %14 = vector.load %arg6[%c0_6, %c0_7] : memref<128x384xbf16, #tpu.memory_space<vmem>>, vector<128x384xbf16>
    %cst_8 = arith.constant dense<0.000000e+00> : vector<16x384xf32>
    %15 = tpu.matmul %1, %14, %cst_8 {dimension_numbers = #tpu.dot_dimension_numbers<[1], [0], [0], [1], [0, 0, 1, 1], [], []>} : vector<16x128xbf16>, vector<128x384xbf16>, vector<16x384xf32> -> vector<16x384xf32>
    %16 = vector.extract_strided_slice %15 {offsets = [0, 0], sizes = [16, 128], strides = [1, 1]} : vector<16x384xf32> to vector<16x128xf32>
    %17 = vector.extract_strided_slice %15 {offsets = [0, 128], sizes = [16, 256], strides = [1, 1]} : vector<16x384xf32> to vector<16x256xf32>
    %cst_9 = arith.constant 0.0883883461 : f32
    %18 = vector.broadcast %cst_9 : f32 to vector<16x128xf32>
    %19 = arith.mulf %16, %18 : vector<16x128xf32>
    %20 = vector.extract_strided_slice %17 {offsets = [0, 0], sizes = [16, 128], strides = [1, 1]} : vector<16x256xf32> to vector<16x128xf32>
    %21 = arith.truncf %20 : vector<16x128xf32> to vector<16x128xbf16>
    %22 = vector.extract_strided_slice %17 {offsets = [0, 128], sizes = [16, 128], strides = [1, 1]} : vector<16x256xf32> to vector<16x128xf32>
    %23 = arith.truncf %22 : vector<16x128xf32> to vector<16x128xbf16>
    %24 = arith.truncf %19 : vector<16x128xf32> to vector<16x128xbf16>
    %25 = vector.extract_strided_slice %24 {offsets = [0, 0], sizes = [16, 64], strides = [1, 1]} : vector<16x128xbf16> to vector<16x64xbf16>
    %26 = vector.extract_strided_slice %21 {offsets = [0, 0], sizes = [16, 64], strides = [1, 1]} : vector<16x128xbf16> to vector<16x64xbf16>
    %27 = vector.extract_strided_slice %23 {offsets = [0, 0], sizes = [16, 64], strides = [1, 1]} : vector<16x128xbf16> to vector<16x64xbf16>
    %cst_10 = arith.constant dense<0.000000e+00> : vector<16x16xf32>
    %28 = tpu.matmul %25, %26, %cst_10 {dimension_numbers = #tpu.dot_dimension_numbers<[1], [1], [0], [0], [0, 0, 1, 0], [], []>} : vector<16x64xbf16>, vector<16x64xbf16>, vector<16x16xf32> -> vector<16x16xf32>
    %29 = arith.addf %28, %13 : vector<16x16xf32>
    %cst_11 = arith.constant dense<0xFF800000> : vector<16xf32>
    %30 = vector.multi_reduction <maximumf>, %29, %cst_11 [1] : vector<16x16xf32> to vector<16xf32>
    %31 = vector.shape_cast %30 : vector<16xf32> to vector<16x1xf32>
    %32 = vector.broadcast %31 : vector<16x1xf32> to vector<16x16xf32>
    %33 = arith.subf %29, %32 : vector<16x16xf32>
    %34 = math.exp %33 : vector<16x16xf32>
    %cst_12 = arith.constant dense<0.000000e+00> : vector<16xf32>
    %35 = vector.multi_reduction <add>, %34, %cst_12 [1] : vector<16x16xf32> to vector<16xf32>
    %36 = vector.shape_cast %35 : vector<16xf32> to vector<16x1xf32>
    %37 = tpu.reciprocal %36 {approx = true} : vector<16x1xf32> -> vector<16x1xf32>
    %38 = vector.broadcast %37 : vector<16x1xf32> to vector<16x16xf32>
    %39 = arith.mulf %34, %38 : vector<16x16xf32>
    %40 = arith.truncf %39 : vector<16x16xf32> to vector<16x16xbf16>
    %cst_13 = arith.constant dense<0.000000e+00> : vector<16x64xf32>
    %41 = tpu.matmul %40, %27, %cst_13 {dimension_numbers = #tpu.dot_dimension_numbers<[1], [0], [0], [1], [0, 0, 1, 1], [], []>} : vector<16x16xbf16>, vector<16x64xbf16>, vector<16x64xf32> -> vector<16x64xf32>
    %42 = arith.truncf %41 : vector<16x64xf32> to vector<16x64xbf16>
    %c0_14 = arith.constant 0 : index
    %c0_15 = arith.constant 0 : index
    %43 = vector.load %arg24[%c0_14, %c0_15] : memref<16x128xbf16, #tpu.memory_space<vmem>>, vector<16x64xbf16>
    tpu.vector_store %arg24[%c0_14, %c0_15], %42 {strides = array<i32>} : memref<16x128xbf16, #tpu.memory_space<vmem>>, vector<16x64xbf16>,
    %44 = vector.extract_strided_slice %24 {offsets = [0, 64], sizes = [16, 64], strides = [1, 1]} : vector<16x128xbf16> to vector<16x64xbf16>
    %45 = vector.extract_strided_slice %21 {offsets = [0, 64], sizes = [16, 64], strides = [1, 1]} : vector<16x128xbf16> to vector<16x64xbf16>
    %46 = vector.extract_strided_slice %23 {offsets = [0, 64], sizes = [16, 64], strides = [1, 1]} : vector<16x128xbf16> to vector<16x64xbf16>
    %cst_16 = arith.constant dense<0.000000e+00> : vector<16x16xf32>
    %47 = tpu.matmul %44, %45, %cst_16 {dimension_numbers = #tpu.dot_dimension_numbers<[1], [1], [0], [0], [0, 0, 1, 0], [], []>} : vector<16x64xbf16>, vector<16x64xbf16>, vector<16x16xf32> -> vector<16x16xf32>
    %48 = arith.addf %47, %13 : vector<16x16xf32>
    %cst_17 = arith.constant dense<0xFF800000> : vector<16xf32>
    %49 = vector.multi_reduction <maximumf>, %48, %cst_17 [1] : vector<16x16xf32> to vector<16xf32>
    %50 = vector.shape_cast %49 : vector<16xf32> to vector<16x1xf32>
    %51 = vector.broadcast %50 : vector<16x1xf32> to vector<16x16xf32>
    %52 = arith.subf %48, %51 : vector<16x16xf32>
    %53 = math.exp %52 : vector<16x16xf32>
    %cst_18 = arith.constant dense<0.000000e+00> : vector<16xf32>
    %54 = vector.multi_reduction <add>, %53, %cst_18 [1] : vector<16x16xf32> to vector<16xf32>
    %55 = vector.shape_cast %54 : vector<16xf32> to vector<16x1xf32>
    %56 = tpu.reciprocal %55 {approx = true} : vector<16x1xf32> -> vector<16x1xf32>
    %57 = vector.broadcast %56 : vector<16x1xf32> to vector<16x16xf32>
    %58 = arith.mulf %53, %57 : vector<16x16xf32>
    %59 = arith.truncf %58 : vector<16x16xf32> to vector<16x16xbf16>
    %cst_19 = arith.constant dense<0.000000e+00> : vector<16x64xf32>
    %60 = tpu.matmul %59, %46, %cst_19 {dimension_numbers = #tpu.dot_dimension_numbers<[1], [0], [0], [1], [0, 0, 1, 1], [], []>} : vector<16x16xbf16>, vector<16x64xbf16>, vector<16x64xf32> -> vector<16x64xf32>
    %61 = arith.truncf %60 : vector<16x64xf32> to vector<16x64xbf16>
    %c0_20 = arith.constant 0 : index
    %c64 = arith.constant 64 : index
    %62 = vector.load %arg24[%c0_20, %c64] : memref<16x128xbf16, #tpu.memory_space<vmem>>, vector<16x64xbf16>
    tpu.vector_store %arg24[%c0_20, %c64], %61 {strides = array<i32>} : memref<16x128xbf16, #tpu.memory_space<vmem>>, vector<16x64xbf16>,
    %c0_21 = arith.constant 0 : index
    %c0_22 = arith.constant 0 : index
    %63 = vector.load %arg24[%c0_21, %c0_22] : memref<16x128xbf16, #tpu.memory_space<vmem>>, vector<16x128xbf16>
    %c0_23 = arith.constant 0 : index
    %c0_24 = arith.constant 0 : index
    %64 = vector.load %arg7[%c0_23, %c0_24] : memref<128x128xbf16, #tpu.memory_space<vmem>>, vector<128x128xbf16>
    %cst_25 = arith.constant dense<0.000000e+00> : vector<16x128xf32>
    %65 = tpu.matmul %63, %64, %cst_25 {dimension_numbers = #tpu.dot_dimension_numbers<[1], [0], [0], [1], [0, 0, 1, 1], [], []>} : vector<16x128xbf16>, vector<128x128xbf16>, vector<16x128xf32> -> vector<16x128xf32>
    %c0_26 = arith.constant 0 : index
    %c0_27 = arith.constant 0 : index
    %66 = vector.load %arg8[%c0_26, %c0_27] : memref<1x128xf32, #tpu.memory_space<vmem>>, vector<1x128xf32>
    %67 = vector.broadcast %66 : vector<1x128xf32> to vector<16x128xf32>
    %68 = arith.addf %65, %67 : vector<16x128xf32>
    %69 = arith.extf %1 : vector<16x128xbf16> to vector<16x128xf32>
    %70 = arith.addf %68, %69 : vector<16x128xf32>
    %c0_28 = arith.constant 0 : index
    %c0_29 = arith.constant 0 : index
    %71 = vector.load %arg9[%c0_28, %c0_29] : memref<1x128xf32, #tpu.memory_space<vmem>>, vector<1x128xf32>
    %c0_30 = arith.constant 0 : index
    %c0_31 = arith.constant 0 : index
    %72 = vector.load %arg10[%c0_30, %c0_31] : memref<1x128xf32, #tpu.memory_space<vmem>>, vector<1x128xf32>
    %cst_32 = arith.constant dense<0.000000e+00> : vector<16xf32>
    %73 = vector.multi_reduction <add>, %70, %cst_32 [1] : vector<16x128xf32> to vector<16xf32>
    %74 = vector.shape_cast %73 : vector<16xf32> to vector<16x1xf32>
    %cst_33 = arith.constant 1.280000e+02 : f32
    %75 = vector.broadcast %cst_33 : f32 to vector<16x1xf32>
    %76 = arith.divf %74, %75 : vector<16x1xf32>
    %77 = vector.broadcast %76 : vector<16x1xf32> to vector<16x128xf32>
    %78 = arith.subf %70, %77 : vector<16x128xf32>
    %79 = arith.mulf %78, %78 : vector<16x128xf32>
    %cst_34 = arith.constant dense<0.000000e+00> : vector<16xf32>
    %80 = vector.multi_reduction <add>, %79, %cst_34 [1] : vector<16x128xf32> to vector<16xf32>
    %81 = vector.shape_cast %80 : vector<16xf32> to vector<16x1xf32>
    %cst_35 = arith.constant 1.280000e+02 : f32
    %82 = vector.broadcast %cst_35 : f32 to vector<16x1xf32>
    %83 = arith.divf %81, %82 : vector<16x1xf32>
    %84 = vector.broadcast %76 : vector<16x1xf32> to vector<16x128xf32>
    %85 = arith.subf %70, %84 : vector<16x128xf32>
    %cst_36 = arith.constant 9.99999997E-7 : f32
    %86 = vector.broadcast %cst_36 : f32 to vector<16x1xf32>
    %87 = arith.addf %83, %86 : vector<16x1xf32>
    %88 = math.rsqrt %87 : vector<16x1xf32>
    %89 = vector.broadcast %88 : vector<16x1xf32> to vector<16x128xf32>
    %90 = arith.mulf %85, %89 : vector<16x128xf32>
    %91 = vector.broadcast %71 : vector<1x128xf32> to vector<16x128xf32>
    %92 = arith.mulf %90, %91 : vector<16x128xf32>
    %93 = vector.broadcast %72 : vector<1x128xf32> to vector<16x128xf32>
    %94 = arith.addf %92, %93 : vector<16x128xf32>
    %c0_37 = arith.constant 0 : index
    %c0_38 = arith.constant 0 : index
    %c0_39 = arith.constant 0 : index
    %95 = vector.load %arg3[%c0_37, %c0_38, %c0_39] : memref<1x16x128xbf16, #tpu.memory_space<vmem>>, vector<1x16x128xbf16>
    %96 = vector.shape_cast %95 : vector<1x16x128xbf16> to vector<16x128xbf16>
    %97 = arith.truncf %94 : vector<16x128xf32> to vector<16x128xbf16>
    %c0_40 = arith.constant 0 : index
    %c0_41 = arith.constant 0 : index
    %98 = vector.load %arg11[%c0_40, %c0_41] : memref<128x128xbf16, #tpu.memory_space<vmem>>, vector<128x128xbf16>
    %cst_42 = arith.constant dense<0.000000e+00> : vector<16x128xf32>
    %99 = tpu.matmul %97, %98, %cst_42 {dimension_numbers = #tpu.dot_dimension_numbers<[1], [0], [0], [1], [0, 0, 1, 1], [], []>} : vector<16x128xbf16>, vector<128x128xbf16>, vector<16x128xf32> -> vector<16x128xf32>
    %cst_43 = arith.constant 0.0883883461 : f32
    %100 = vector.broadcast %cst_43 : f32 to vector<16x128xf32>
    %101 = arith.mulf %99, %100 : vector<16x128xf32>
    %c0_44 = arith.constant 0 : index
    %c0_45 = arith.constant 0 : index
    %102 = vector.load %arg12[%c0_44, %c0_45] : memref<128x256xbf16, #tpu.memory_space<vmem>>, vector<128x256xbf16>
    %cst_46 = arith.constant dense<0.000000e+00> : vector<16x256xf32>
    %103 = tpu.matmul %96, %102, %cst_46 {dimension_numbers = #tpu.dot_dimension_numbers<[1], [0], [0], [1], [0, 0, 1, 1], [], []>} : vector<16x128xbf16>, vector<128x256xbf16>, vector<16x256xf32> -> vector<16x256xf32>
    %104 = vector.extract_strided_slice %103 {offsets = [0, 0], sizes = [16, 128], strides = [1, 1]} : vector<16x256xf32> to vector<16x128xf32>
    %105 = arith.truncf %104 : vector<16x128xf32> to vector<16x128xbf16>
    %106 = vector.extract_strided_slice %103 {offsets = [0, 128], sizes = [16, 128], strides = [1, 1]} : vector<16x256xf32> to vector<16x128xf32>
    %107 = arith.truncf %106 : vector<16x128xf32> to vector<16x128xbf16>
    %c0_47 = arith.constant 0 : index
    %c0_48 = arith.constant 0 : index
    %c0_49 = arith.constant 0 : index
    %108 = vector.load %arg5[%c0_47, %c0_48, %c0_49] : memref<1x1x16xf32, #tpu.memory_space<vmem>>, vector<1x1x16xf32>
    %109 = vector.shape_cast %108 : vector<1x1x16xf32> to vector<1x16xf32>
    %110 = arith.truncf %101 : vector<16x128xf32> to vector<16x128xbf16>
    %111 = vector.extract_strided_slice %110 {offsets = [0, 0], sizes = [16, 64], strides = [1, 1]} : vector<16x128xbf16> to vector<16x64xbf16>
    %112 = vector.extract_strided_slice %105 {offsets = [0, 0], sizes = [16, 64], strides = [1, 1]} : vector<16x128xbf16> to vector<16x64xbf16>
    %113 = vector.extract_strided_slice %107 {offsets = [0, 0], sizes = [16, 64], strides = [1, 1]} : vector<16x128xbf16> to vector<16x64xbf16>
    %cst_50 = arith.constant dense<0.000000e+00> : vector<16x16xf32>
    %114 = tpu.matmul %111, %112, %cst_50 {dimension_numbers = #tpu.dot_dimension_numbers<[1], [1], [0], [0], [0, 0, 1, 0], [], []>} : vector<16x64xbf16>, vector<16x64xbf16>, vector<16x16xf32> -> vector<16x16xf32>
    %115 = vector.broadcast %109 : vector<1x16xf32> to vector<16x16xf32>
    %116 = arith.addf %114, %115 : vector<16x16xf32>
    %cst_51 = arith.constant dense<0xFF800000> : vector<16xf32>
    %117 = vector.multi_reduction <maximumf>, %116, %cst_51 [1] : vector<16x16xf32> to vector<16xf32>
    %118 = vector.shape_cast %117 : vector<16xf32> to vector<16x1xf32>
    %119 = vector.broadcast %118 : vector<16x1xf32> to vector<16x16xf32>
    %120 = arith.subf %116, %119 : vector<16x16xf32>
    %121 = math.exp %120 : vector<16x16xf32>
    %cst_52 = arith.constant dense<0.000000e+00> : vector<16xf32>
    %122 = vector.multi_reduction <add>, %121, %cst_52 [1] : vector<16x16xf32> to vector<16xf32>
    %123 = vector.shape_cast %122 : vector<16xf32> to vector<16x1xf32>
    %124 = tpu.reciprocal %123 {approx = true} : vector<16x1xf32> -> vector<16x1xf32>
    %125 = vector.broadcast %124 : vector<16x1xf32> to vector<16x16xf32>
    %126 = arith.mulf %121, %125 : vector<16x16xf32>
    %127 = arith.truncf %126 : vector<16x16xf32> to vector<16x16xbf16>
    %cst_53 = arith.constant dense<0.000000e+00> : vector<16x64xf32>
    %128 = tpu.matmul %127, %113, %cst_53 {dimension_numbers = #tpu.dot_dimension_numbers<[1], [0], [0], [1], [0, 0, 1, 1], [], []>} : vector<16x16xbf16>, vector<16x64xbf16>, vector<16x64xf32> -> vector<16x64xf32>
    %129 = arith.truncf %128 : vector<16x64xf32> to vector<16x64xbf16>
    %c0_54 = arith.constant 0 : index
    %c0_55 = arith.constant 0 : index
    %130 = vector.load %arg24[%c0_54, %c0_55] : memref<16x128xbf16, #tpu.memory_space<vmem>>, vector<16x64xbf16>
    tpu.vector_store %arg24[%c0_54, %c0_55], %129 {strides = array<i32>} : memref<16x128xbf16, #tpu.memory_space<vmem>>, vector<16x64xbf16>,
    %131 = vector.extract_strided_slice %110 {offsets = [0, 64], sizes = [16, 64], strides = [1, 1]} : vector<16x128xbf16> to vector<16x64xbf16>
    %132 = vector.extract_strided_slice %105 {offsets = [0, 64], sizes = [16, 64], strides = [1, 1]} : vector<16x128xbf16> to vector<16x64xbf16>
    %133 = vector.extract_strided_slice %107 {offsets = [0, 64], sizes = [16, 64], strides = [1, 1]} : vector<16x128xbf16> to vector<16x64xbf16>
    %cst_56 = arith.constant dense<0.000000e+00> : vector<16x16xf32>
    %134 = tpu.matmul %131, %132, %cst_56 {dimension_numbers = #tpu.dot_dimension_numbers<[1], [1], [0], [0], [0, 0, 1, 0], [], []>} : vector<16x64xbf16>, vector<16x64xbf16>, vector<16x16xf32> -> vector<16x16xf32>
    %135 = vector.broadcast %109 : vector<1x16xf32> to vector<16x16xf32>
    %136 = arith.addf %134, %135 : vector<16x16xf32>
    %cst_57 = arith.constant dense<0xFF800000> : vector<16xf32>
    %137 = vector.multi_reduction <maximumf>, %136, %cst_57 [1] : vector<16x16xf32> to vector<16xf32>
    %138 = vector.shape_cast %137 : vector<16xf32> to vector<16x1xf32>
    %139 = vector.broadcast %138 : vector<16x1xf32> to vector<16x16xf32>
    %140 = arith.subf %136, %139 : vector<16x16xf32>
    %141 = math.exp %140 : vector<16x16xf32>
    %cst_58 = arith.constant dense<0.000000e+00> : vector<16xf32>
    %142 = vector.multi_reduction <add>, %141, %cst_58 [1] : vector<16x16xf32> to vector<16xf32>
    %143 = vector.shape_cast %142 : vector<16xf32> to vector<16x1xf32>
    %144 = tpu.reciprocal %143 {approx = true} : vector<16x1xf32> -> vector<16x1xf32>
    %145 = vector.broadcast %144 : vector<16x1xf32> to vector<16x16xf32>
    %146 = arith.mulf %141, %145 : vector<16x16xf32>
    %147 = arith.truncf %146 : vector<16x16xf32> to vector<16x16xbf16>
    %cst_59 = arith.constant dense<0.000000e+00> : vector<16x64xf32>
    %148 = tpu.matmul %147, %133, %cst_59 {dimension_numbers = #tpu.dot_dimension_numbers<[1], [0], [0], [1], [0, 0, 1, 1], [], []>} : vector<16x16xbf16>, vector<16x64xbf16>, vector<16x64xf32> -> vector<16x64xf32>
    %149 = arith.truncf %148 : vector<16x64xf32> to vector<16x64xbf16>
    %c0_60 = arith.constant 0 : index
    %c64_61 = arith.constant 64 : index
    %150 = vector.load %arg24[%c0_60, %c64_61] : memref<16x128xbf16, #tpu.memory_space<vmem>>, vector<16x64xbf16>
    tpu.vector_store %arg24[%c0_60, %c64_61], %149 {strides = array<i32>} : memref<16x128xbf16, #tpu.memory_space<vmem>>, vector<16x64xbf16>,
    %c0_62 = arith.constant 0 : index
    %c0_63 = arith.constant 0 : index
    %151 = vector.load %arg24[%c0_62, %c0_63] : memref<16x128xbf16, #tpu.memory_space<vmem>>, vector<16x128xbf16>
    %c0_64 = arith.constant 0 : index
    %c0_65 = arith.constant 0 : index
    %152 = vector.load %arg13[%c0_64, %c0_65] : memref<128x128xbf16, #tpu.memory_space<vmem>>, vector<128x128xbf16>
    %cst_66 = arith.constant dense<0.000000e+00> : vector<16x128xf32>
    %153 = tpu.matmul %151, %152, %cst_66 {dimension_numbers = #tpu.dot_dimension_numbers<[1], [0], [0], [1], [0, 0, 1, 1], [], []>} : vector<16x128xbf16>, vector<128x128xbf16>, vector<16x128xf32> -> vector<16x128xf32>
    %c0_67 = arith.constant 0 : index
    %c0_68 = arith.constant 0 : index
    %154 = vector.load %arg14[%c0_67, %c0_68] : memref<1x128xf32, #tpu.memory_space<vmem>>, vector<1x128xf32>
    %155 = vector.broadcast %154 : vector<1x128xf32> to vector<16x128xf32>
    %156 = arith.addf %153, %155 : vector<16x128xf32>
    %157 = arith.addf %156, %94 : vector<16x128xf32>
    %c0_69 = arith.constant 0 : index
    %c0_70 = arith.constant 0 : index
    %158 = vector.load %arg15[%c0_69, %c0_70] : memref<1x128xf32, #tpu.memory_space<vmem>>, vector<1x128xf32>
    %c0_71 = arith.constant 0 : index
    %c0_72 = arith.constant 0 : index
    %159 = vector.load %arg16[%c0_71, %c0_72] : memref<1x128xf32, #tpu.memory_space<vmem>>, vector<1x128xf32>
    %cst_73 = arith.constant dense<0.000000e+00> : vector<16xf32>
    %160 = vector.multi_reduction <add>, %157, %cst_73 [1] : vector<16x128xf32> to vector<16xf32>
    %161 = vector.shape_cast %160 : vector<16xf32> to vector<16x1xf32>
    %cst_74 = arith.constant 1.280000e+02 : f32
    %162 = vector.broadcast %cst_74 : f32 to vector<16x1xf32>
    %163 = arith.divf %161, %162 : vector<16x1xf32>
    %164 = vector.broadcast %163 : vector<16x1xf32> to vector<16x128xf32>
    %165 = arith.subf %157, %164 : vector<16x128xf32>
    %166 = arith.mulf %165, %165 : vector<16x128xf32>
    %cst_75 = arith.constant dense<0.000000e+00> : vector<16xf32>
    %167 = vector.multi_reduction <add>, %166, %cst_75 [1] : vector<16x128xf32> to vector<16xf32>
    %168 = vector.shape_cast %167 : vector<16xf32> to vector<16x1xf32>
    %cst_76 = arith.constant 1.280000e+02 : f32
    %169 = vector.broadcast %cst_76 : f32 to vector<16x1xf32>
    %170 = arith.divf %168, %169 : vector<16x1xf32>
    %171 = vector.broadcast %163 : vector<16x1xf32> to vector<16x128xf32>
    %172 = arith.subf %157, %171 : vector<16x128xf32>
    %cst_77 = arith.constant 9.99999997E-7 : f32
    %173 = vector.broadcast %cst_77 : f32 to vector<16x1xf32>
    %174 = arith.addf %170, %173 : vector<16x1xf32>
    %175 = math.rsqrt %174 : vector<16x1xf32>
    %176 = vector.broadcast %175 : vector<16x1xf32> to vector<16x128xf32>
    %177 = arith.mulf %172, %176 : vector<16x128xf32>
    %178 = vector.broadcast %158 : vector<1x128xf32> to vector<16x128xf32>
    %179 = arith.mulf %177, %178 : vector<16x128xf32>
    %180 = vector.broadcast %159 : vector<1x128xf32> to vector<16x128xf32>
    %181 = arith.addf %179, %180 : vector<16x128xf32>
    %182 = arith.truncf %181 : vector<16x128xf32> to vector<16x128xbf16>
    %c0_78 = arith.constant 0 : index
    %c0_79 = arith.constant 0 : index
    %183 = vector.load %arg17[%c0_78, %c0_79] : memref<128x256xbf16, #tpu.memory_space<vmem>>, vector<128x256xbf16>
    %cst_80 = arith.constant dense<0.000000e+00> : vector<16x256xf32>
    %184 = tpu.matmul %182, %183, %cst_80 {dimension_numbers = #tpu.dot_dimension_numbers<[1], [0], [0], [1], [0, 0, 1, 1], [], []>} : vector<16x128xbf16>, vector<128x256xbf16>, vector<16x256xf32> -> vector<16x256xf32>
    %c0_81 = arith.constant 0 : index
    %c0_82 = arith.constant 0 : index
    %185 = vector.load %arg18[%c0_81, %c0_82] : memref<1x256xf32, #tpu.memory_space<vmem>>, vector<1x256xf32>
    %186 = vector.broadcast %185 : vector<1x256xf32> to vector<16x256xf32>
    %187 = arith.addf %184, %186 : vector<16x256xf32>
    %cst_83 = arith.constant 0.000000e+00 : f32
    %188 = vector.broadcast %cst_83 : f32 to vector<16x256xf32>
    %189 = arith.maximumf %187, %188 : vector<16x256xf32>
    %190 = arith.truncf %189 : vector<16x256xf32> to vector<16x256xbf16>
    %c0_84 = arith.constant 0 : index
    %c0_85 = arith.constant 0 : index
    %191 = vector.load %arg19[%c0_84, %c0_85] : memref<256x128xbf16, #tpu.memory_space<vmem>>, vector<256x128xbf16>
    %cst_86 = arith.constant dense<0.000000e+00> : vector<16x128xf32>
    %192 = tpu.matmul %190, %191, %cst_86 {dimension_numbers = #tpu.dot_dimension_numbers<[1], [0], [0], [1], [0, 0, 1, 1], [], []>} : vector<16x256xbf16>, vector<256x128xbf16>, vector<16x128xf32> -> vector<16x128xf32>
    %c0_87 = arith.constant 0 : index
    %c0_88 = arith.constant 0 : index
    %193 = vector.load %arg20[%c0_87, %c0_88] : memref<1x128xf32, #tpu.memory_space<vmem>>, vector<1x128xf32>
    %194 = vector.broadcast %193 : vector<1x128xf32> to vector<16x128xf32>
    %195 = arith.addf %192, %194 : vector<16x128xf32>
    %196 = arith.addf %195, %181 : vector<16x128xf32>
    %c0_89 = arith.constant 0 : index
    %c0_90 = arith.constant 0 : index
    %197 = vector.load %arg21[%c0_89, %c0_90] : memref<1x128xf32, #tpu.memory_space<vmem>>, vector<1x128xf32>
    %c0_91 = arith.constant 0 : index
    %c0_92 = arith.constant 0 : index
    %198 = vector.load %arg22[%c0_91, %c0_92] : memref<1x128xf32, #tpu.memory_space<vmem>>, vector<1x128xf32>
    %cst_93 = arith.constant dense<0.000000e+00> : vector<16xf32>
    %199 = vector.multi_reduction <add>, %196, %cst_93 [1] : vector<16x128xf32> to vector<16xf32>
    %200 = vector.shape_cast %199 : vector<16xf32> to vector<16x1xf32>
    %cst_94 = arith.constant 1.280000e+02 : f32
    %201 = vector.broadcast %cst_94 : f32 to vector<16x1xf32>
    %202 = arith.divf %200, %201 : vector<16x1xf32>
    %203 = vector.broadcast %202 : vector<16x1xf32> to vector<16x128xf32>
    %204 = arith.subf %196, %203 : vector<16x128xf32>
    %205 = arith.mulf %204, %204 : vector<16x128xf32>
    %cst_95 = arith.constant dense<0.000000e+00> : vector<16xf32>
    %206 = vector.multi_reduction <add>, %205, %cst_95 [1] : vector<16x128xf32> to vector<16xf32>
    %207 = vector.shape_cast %206 : vector<16xf32> to vector<16x1xf32>
    %cst_96 = arith.constant 1.280000e+02 : f32
    %208 = vector.broadcast %cst_96 : f32 to vector<16x1xf32>
    %209 = arith.divf %207, %208 : vector<16x1xf32>
    %210 = vector.broadcast %202 : vector<16x1xf32> to vector<16x128xf32>
    %211 = arith.subf %196, %210 : vector<16x128xf32>
    %cst_97 = arith.constant 9.99999997E-7 : f32
    %212 = vector.broadcast %cst_97 : f32 to vector<16x1xf32>
    %213 = arith.addf %209, %212 : vector<16x1xf32>
    %214 = math.rsqrt %213 : vector<16x1xf32>
    %215 = vector.broadcast %214 : vector<16x1xf32> to vector<16x128xf32>
    %216 = arith.mulf %211, %215 : vector<16x128xf32>
    %217 = vector.broadcast %197 : vector<1x128xf32> to vector<16x128xf32>
    %218 = arith.mulf %216, %217 : vector<16x128xf32>
    %219 = vector.broadcast %198 : vector<1x128xf32> to vector<16x128xf32>
    %220 = arith.addf %218, %219 : vector<16x128xf32>
    %221 = arith.truncf %220 : vector<16x128xf32> to vector<16x128xbf16>
    %c0_98 = arith.constant 0 : index
    %c0_99 = arith.constant 0 : index
    %c0_100 = arith.constant 0 : index
    %222 = vector.load %arg23[%c0_98, %c0_99, %c0_100] : memref<1x16x128xbf16, #tpu.memory_space<vmem>>, vector<1x16x128xbf16>
    %223 = vector.shape_cast %222 : vector<1x16x128xbf16> to vector<16x128xbf16>
    %224 = vector.shape_cast %221 : vector<16x128xbf16> to vector<1x16x128xbf16>
    tpu.vector_store %arg23[%c0_98, %c0_99, %c0_100], %224 {strides = array<i32>} : memref<1x16x128xbf16, #tpu.memory_space<vmem>>, vector<1x16x128xbf16>,
    return
  }
  func.func @transform_0(%arg0: i32, %arg1: i32) -> (i32, i32, i32) {
    %c0_i32 = arith.constant 0 : i32
    %c0_i32_0 = arith.constant 0 : i32
    %c0_i32_1 = arith.constant 0 : i32
    return %arg0, %c0_i32, %c0_i32_0 : i32, i32, i32
  }
  func.func @transform_1(%arg0: i32, %arg1: i32) -> (i32, i32, i32) {
    %c0_i32 = arith.constant 0 : i32
    %c0_i32_0 = arith.constant 0 : i32
    %c0_i32_1 = arith.constant 0 : i32
    return %arg0, %c0_i32, %c0_i32_0 : i32, i32, i32
  }
  func.func @transform_2(%arg0: i32, %arg1: i32) -> (i32, i32, i32) {
    %c0_i32 = arith.constant 0 : i32
    %c0_i32_0 = arith.constant 0 : i32
    %c0_i32_1 = arith.constant 0 : i32
    return %arg0, %c0_i32, %c0_i32_0 : i32, i32, i32
  }
  func.func @transform_3(%arg0: i32, %arg1: i32) -> (i32, i32, i32) {
    %c0_i32 = arith.constant 0 : i32
    %c0_i32_0 = arith.constant 0 : i32
    %c0_i32_1 = arith.constant 0 : i32
    return %arg0, %c0_i32, %c0_i32_0 : i32, i32, i32
  }
  func.func @transform_4(%arg0: i32, %arg1: i32) -> (i32, i32) {
    %c0_i32 = arith.constant 0 : i32
    %c0_i32_0 = arith.constant 0 : i32
    %c0_i32_1 = arith.constant 0 : i32
    return %c0_i32, %c0_i32_0 : i32, i32
  }
  func.func @transform_5(%arg0: i32, %arg1: i32) -> (i32, i32) {
    %c0_i32 = arith.constant 0 : i32
    %c0_i32_0 = arith.constant 0 : i32
    %c0_i32_1 = arith.constant 0 : i32
    return %c0_i32, %c0_i32_0 : i32, i32
  }
  func.func @transform_6(%arg0: i32, %arg1: i32) -> (i32, i32) {
    %c0_i32 = arith.constant 0 : i32
    %c0_i32_0 = arith.constant 0 : i32
    %c0_i32_1 = arith.constant 0 : i32
    return %c0_i32, %c0_i32_0 : i32, i32
  }
  func.func @transform_7(%arg0: i32, %arg1: i32) -> (i32, i32) {
    %c0_i32 = arith.constant 0 : i32
    %c0_i32_0 = arith.constant 0 : i32
    %c0_i32_1 = arith.constant 0 : i32
    return %c0_i32, %c0_i32_0 : i32, i32
  }
  func.func @transform_8(%arg0: i32, %arg1: i32) -> (i32, i32) {
    %c0_i32 = arith.constant 0 : i32
    %c0_i32_0 = arith.constant 0 : i32
    %c0_i32_1 = arith.constant 0 : i32
    return %c0_i32, %c0_i32_0 : i32, i32
  }
  func.func @transform_9(%arg0: i32, %arg1: i32) -> (i32, i32) {
    %c0_i32 = arith.constant 0 : i32
    %c0_i32_0 = arith.constant 0 : i32
    %c0_i32_1 = arith.constant 0 : i32
    return %c0_i32, %c0_i32_0 : i32, i32
  }
  func.func @transform_10(%arg0: i32, %arg1: i32) -> (i32, i32) {
    %c0_i32 = arith.constant 0 : i32
    %c0_i32_0 = arith.constant 0 : i32
    %c0_i32_1 = arith.constant 0 : i32
    return %c0_i32, %c0_i32_0 : i32, i32
  }
  func.func @transform_11(%arg0: i32, %arg1: i32) -> (i32, i32) {
    %c0_i32 = arith.constant 0 : i32
    %c0_i32_0 = arith.constant 0 : i32
    %c0_i32_1 = arith.constant 0 : i32
    return %c0_i32, %c0_i32_0 : i32, i32
  }
  func.func @transform_12(%arg0: i32, %arg1: i32) -> (i32, i32) {
    %c0_i32 = arith.constant 0 : i32
    %c0_i32_0 = arith.constant 0 : i32
    %c0_i32_1 = arith.constant 0 : i32
    return %c0_i32, %c0_i32_0 : i32, i32
  }
  func.func @transform_13(%arg0: i32, %arg1: i32) -> (i32, i32) {
    %c0_i32 = arith.constant 0 : i32
    %c0_i32_0 = arith.constant 0 : i32
    %c0_i32_1 = arith.constant 0 : i32
    return %c0_i32, %c0_i32_0 : i32, i32
  }
  func.func @transform_14(%arg0: i32, %arg1: i32) -> (i32, i32) {
    %c0_i32 = arith.constant 0 : i32
    %c0_i32_0 = arith.constant 0 : i32
    %c0_i32_1 = arith.constant 0 : i32
    return %c0_i32, %c0_i32_0 : i32, i32
  }
  func.func @transform_15(%arg0: i32, %arg1: i32) -> (i32, i32) {
    %c0_i32 = arith.constant 0 : i32
    %c0_i32_0 = arith.constant 0 : i32
    %c0_i32_1 = arith.constant 0 : i32
    return %c0_i32, %c0_i32_0 : i32, i32
  }
  func.func @transform_16(%arg0: i32, %arg1: i32) -> (i32, i32) {
    %c0_i32 = arith.constant 0 : i32
    %c0_i32_0 = arith.constant 0 : i32
    %c0_i32_1 = arith.constant 0 : i32
    return %c0_i32, %c0_i32_0 : i32, i32
  }
  func.func @transform_17(%arg0: i32, %arg1: i32) -> (i32, i32) {
    %c0_i32 = arith.constant 0 : i32
    %c0_i32_0 = arith.constant 0 : i32
    %c0_i32_1 = arith.constant 0 : i32
    return %c0_i32, %c0_i32_0 : i32, i32
  }
  func.func @transform_18(%arg0: i32, %arg1: i32) -> (i32, i32) {
    %c0_i32 = arith.constant 0 : i32
    %c0_i32_0 = arith.constant 0 : i32
    %c0_i32_1 = arith.constant 0 : i32
    return %c0_i32, %c0_i32_0 : i32, i32
  }
  func.func @transform_19(%arg0: i32, %arg1: i32) -> (i32, i32) {
    %c0_i32 = arith.constant 0 : i32
    %c0_i32_0 = arith.constant 0 : i32
    %c0_i32_1 = arith.constant 0 : i32
    return %c0_i32, %c0_i32_0 : i32, i32
  }
  func.func @transform_20(%arg0: i32, %arg1: i32) -> (i32, i32) {
    %c0_i32 = arith.constant 0 : i32
    %c0_i32_0 = arith.constant 0 : i32
    %c0_i32_1 = arith.constant 0 : i32
    return %c0_i32, %c0_i32_0 : i32, i32
  }
  func.func @transform_21(%arg0: i32, %arg1: i32) -> (i32, i32, i32) {
    %c0_i32 = arith.constant 0 : i32
    %c0_i32_0 = arith.constant 0 : i32
    return %arg0, %arg1, %c0_i32 : i32, i32, i32
  }
}

module attributes {stable_mosaic.version = 11 : i64} {
  func.func @_decoder_layer_kernel(%arg0: i32, %arg1: i32, %arg2: memref<1x16x128xbf16, #tpu.memory_space<vmem>>, %arg3: memref<1x16x128xbf16, #tpu.memory_space<vmem>>, %arg4: memref<1x1x16xf32, #tpu.memory_space<vmem>>, %arg5: memref<1x1x16xf32, #tpu.memory_space<vmem>>, %arg6: memref<128x384xbf16, #tpu.memory_space<vmem>>, %arg7: memref<128x128xbf16, #tpu.memory_space<vmem>>, %arg8: memref<1x128xf32, #tpu.memory_space<vmem>>, %arg9: memref<1x128xf32, #tpu.memory_space<vmem>>, %arg10: memref<1x128xf32, #tpu.memory_space<vmem>>, %arg11: memref<128x128xbf16, #tpu.memory_space<vmem>>, %arg12: memref<128x256xbf16, #tpu.memory_space<vmem>>, %arg13: memref<128x128xbf16, #tpu.memory_space<vmem>>, %arg14: memref<1x128xf32, #tpu.memory_space<vmem>>, %arg15: memref<1x128xf32, #tpu.memory_space<vmem>>, %arg16: memref<1x128xf32, #tpu.memory_space<vmem>>, %arg17: memref<128x256xbf16, #tpu.memory_space<vmem>>, %arg18: memref<1x256xf32, #tpu.memory_space<vmem>>, %arg19: memref<256x128xbf16, #tpu.memory_space<vmem>>, %arg20: memref<1x128xf32, #tpu.memory_space<vmem>>, %arg21: memref<1x128xf32, #tpu.memory_space<vmem>>, %arg22: memref<1x128xf32, #tpu.memory_space<vmem>>, %arg23: memref<1x16x128xbf16, #tpu.memory_space<vmem>>, %arg24: memref<16x128xbf16, #tpu.memory_space<vmem>>) attributes {dimension_semantics = [#tpu.dimension_semantics<parallel>, #tpu.dimension_semantics<parallel>], iteration_bounds = array<i64: 2, 1>, scalar_prefetch = 0 : i64, scratch_operands = 1 : i64, tpu.core_type = #tpu.core_type<tc>, window_params = [{transform_indices = @transform_0, window_bounds = array<i64: 1, 16, 128>}, {transform_indices = @transform_1, window_bounds = array<i64: 1, 16, 128>}, {transform_indices = @transform_2, window_bounds = array<i64: 1, 1, 16>}, {transform_indices = @transform_3, window_bounds = array<i64: 1, 1, 16>}, {pipeline_mode = #tpu.pipeline_mode<synchronous>, transform_indices = @transform_4, window_bounds = array<i64: 128, 384>}, {pipeline_mode = #tpu.pipeline_mode<synchronous>, transform_indices = @transform_5, window_bounds = array<i64: 128, 128>}, {pipeline_mode = #tpu.pipeline_mode<synchronous>, transform_indices = @transform_6, window_bounds = array<i64: 1, 128>}, {pipeline_mode = #tpu.pipeline_mode<synchronous>, transform_indices = @transform_7, window_bounds = array<i64: 1, 128>}, {pipeline_mode = #tpu.pipeline_mode<synchronous>, transform_indices = @transform_8, window_bounds = array<i64: 1, 128>}, {pipeline_mode = #tpu.pipeline_mode<synchronous>, transform_indices = @transform_9, window_bounds = array<i64: 128, 128>}, {pipeline_mode = #tpu.pipeline_mode<synchronous>, transform_indices = @transform_10, window_bounds = array<i64: 128, 256>}, {pipeline_mode = #tpu.pipeline_mode<synchronous>, transform_indices = @transform_11, window_bounds = array<i64: 128, 128>}, {pipeline_mode = #tpu.pipeline_mode<synchronous>, transform_indices = @transform_12, window_bounds = array<i64: 1, 128>}, {pipeline_mode = #tpu.pipeline_mode<synchronous>, transform_indices = @transform_13, window_bounds = array<i64: 1, 128>}, {pipeline_mode = #tpu.pipeline_mode<synchronous>, transform_indices = @transform_14, window_bounds = array<i64: 1, 128>}, {pipeline_mode = #tpu.pipeline_mode<synchronous>, transform_indices = @transform_15, window_bounds = array<i64: 128, 256>}, {pipeline_mode = #tpu.pipeline_mode<synchronous>, transform_indices = @transform_16, window_bounds = array<i64: 1, 256>}, {pipeline_mode = #tpu.pipeline_mode<synchronous>, transform_indices = @transform_17, window_bounds = array<i64: 256, 128>}, {pipeline_mode = #tpu.pipeline_mode<synchronous>, transform_indices = @transform_18, window_bounds = array<i64: 1, 128>}, {pipeline_mode = #tpu.pipeline_mode<synchronous>, transform_indices = @transform_19, window_bounds = array<i64: 1, 128>}, {pipeline_mode = #tpu.pipeline_mode<synchronous>, transform_indices = @transform_20, window_bounds = array<i64: 1, 128>}, {transform_indices = @transform_21, window_bounds = array<i64: 1, 16, 128>}]} {
    %c0 = arith.constant 0 : index
    %c0_0 = arith.constant 0 : index
    %c0_1 = arith.constant 0 : index
    %0 = vector.load %arg2[%c0, %c0_0, %c0_1] : memref<1x16x128xbf16, #tpu.memory_space<vmem>>, vector<1x16x128xbf16>
    %1 = vector.shape_cast %0 : vector<1x16x128xbf16> to vector<16x128xbf16>
    %2 = tpu.iota {dimensions = array<i32: 0>} : vector<16x16xi32>
    %c0_i32 = arith.constant 0 : i32
    %3 = vector.broadcast %c0_i32 : i32 to vector<16x16xi32>
    %4 = arith.addi %2, %3 : vector<16x16xi32>
    %5 = tpu.iota {dimensions = array<i32: 1>} : vector<16x16xi32>
    %c0_2 = arith.constant 0 : index
    %c0_3 = arith.constant 0 : index
    %c0_4 = arith.constant 0 : index
    %6 = vector.load %arg4[%c0_2, %c0_3, %c0_4] : memref<1x1x16xf32, #tpu.memory_space<vmem>>, vector<1x1x16xf32>
    %7 = vector.shape_cast %6 : vector<1x1x16xf32> to vector<1x16xf32>
    %8 = arith.cmpi sgt, %5, %4 : vector<16x16xi32>
    %cst = arith.constant -1.000000e+09 : f32
    %cst_5 = arith.constant 0.000000e+00 : f32
    %9 = vector.broadcast %cst : f32 to vector<16x16xf32>
    %10 = vector.broadcast %cst_5 : f32 to vector<16x16xf32>
    %11 = arith.select %8, %9, %10 : vector<16x16xi1>, vector<16x16xf32>
    %12 = vector.broadcast %7 : vector<1x16xf32> to vector<16x16xf32>
    %13 = arith.addf %12, %11 : vector<16x16xf32>
    %c0_6 = arith.constant 0 : index
    %c0_7 = arith.constant 0 : index
    %14 = vector.load %arg6[%c0_6, %c0_7] : memref<128x384xbf16, #tpu.memory_space<vmem>>, vector<128x384xbf16>
    %cst_8 = arith.constant dense<0.000000e+00> : vector<16x384xf32>
    %15 = tpu.matmul %1, %14, %cst_8 {dimension_numbers = #tpu.dot_dimension_numbers<[1], [0], [0], [1], [0, 0, 1, 1], [], []>} : vector<16x128xbf16>, vector<128x384xbf16>, vector<16x384xf32> -> vector<16x384xf32>
    %16 = vector.extract_strided_slice %15 {offsets = [0, 0], sizes = [16, 128], strides = [1, 1]} : vector<16x384xf32> to vector<16x128xf32>
    %17 = vector.extract_strided_slice %15 {offsets = [0, 128], sizes = [16, 256], strides = [1, 1]} : vector<16x384xf32> to vector<16x256xf32>
    %cst_9 = arith.constant 0.0883883461 : f32
    %18 = vector.broadcast %cst_9 : f32 to vector<16x128xf32>
    %19 = arith.mulf %16, %18 : vector<16x128xf32>
    %20 = vector.extract_strided_slice %17 {offsets = [0, 0], sizes = [16, 128], strides = [1, 1]} : vector<16x256xf32> to vector<16x128xf32>
    %21 = arith.truncf %20 : vector<16x128xf32> to vector<16x128xbf16>
    %22 = vector.extract_strided_slice %17 {offsets = [0, 128], sizes = [16, 128], strides = [1, 1]} : vector<16x256xf32> to vector<16x128xf32>
    %23 = arith.truncf %22 : vector<16x128xf32> to vector<16x128xbf16>
    %24 = arith.truncf %19 : vector<16x128xf32> to vector<16x128xbf16>
    %25 = vector.extract_strided_slice %24 {offsets = [0, 0], sizes = [16, 64], strides = [1, 1]} : vector<16x128xbf16> to vector<16x64xbf16>
    %26 = vector.extract_strided_slice %21 {offsets = [0, 0], sizes = [16, 64], strides = [1, 1]} : vector<16x128xbf16> to vector<16x64xbf16>
    %27 = vector.extract_strided_slice %23 {offsets = [0, 0], sizes = [16, 64], strides = [1, 1]} : vector<16x128xbf16> to vector<16x64xbf16>
    %cst_10 = arith.constant dense<0.000000e+00> : vector<16x16xf32>
    %28 = tpu.matmul %25, %26, %cst_10 {dimension_numbers = #tpu.dot_dimension_numbers<[1], [1], [0], [0], [0, 0, 1, 0], [], []>} : vector<16x64xbf16>, vector<16x64xbf16>, vector<16x16xf32> -> vector<16x16xf32>
    %29 = arith.addf %28, %13 : vector<16x16xf32>
    %cst_11 = arith.constant dense<0xFF800000> : vector<16xf32>
    %30 = vector.multi_reduction <maximumf>, %29, %cst_11 [1] : vector<16x16xf32> to vector<16xf32>
    %31 = vector.shape_cast %30 : vector<16xf32> to vector<16x1xf32>
    %32 = vector.broadcast %31 : vector<16x1xf32> to vector<16x16xf32>
    %33 = arith.subf %29, %32 : vector<16x16xf32>
    %34 = math.exp %33 : vector<16x16xf32>
    %cst_12 = arith.constant dense<0.000000e+00> : vector<16xf32>
    %35 = vector.multi_reduction <add>, %34, %cst_12 [1] : vector<16x16xf32> to vector<16xf32>
    %36 = vector.shape_cast %35 : vector<16xf32> to vector<16x1xf32>
    %37 = tpu.reciprocal %36 {approx = true} : vector<16x1xf32> -> vector<16x1xf32>
    %38 = vector.broadcast %37 : vector<16x1xf32> to vector<16x16xf32>
    %39 = arith.mulf %34, %38 : vector<16x16xf32>
    %40 = arith.truncf %39 : vector<16x16xf32> to vector<16x16xbf16>
    %cst_13 = arith.constant dense<0.000000e+00> : vector<16x64xf32>
    %41 = tpu.matmul %40, %27, %cst_13 {dimension_numbers = #tpu.dot_dimension_numbers<[1], [0], [0], [1], [0, 0, 1, 1], [], []>} : vector<16x16xbf16>, vector<16x64xbf16>, vector<16x64xf32> -> vector<16x64xf32>
    %42 = arith.truncf %41 : vector<16x64xf32> to vector<16x64xbf16>
    %c0_14 = arith.constant 0 : index
    %c0_15 = arith.constant 0 : index
    %43 = vector.load %arg24[%c0_14, %c0_15] : memref<16x128xbf16, #tpu.memory_space<vmem>>, vector<16x64xbf16>
    tpu.vector_store %arg24[%c0_14, %c0_15], %42 {strides = array<i32>} : memref<16x128xbf16, #tpu.memory_space<vmem>>, vector<16x64xbf16>,
    %44 = vector.extract_strided_slice %24 {offsets = [0, 64], sizes = [16, 64], strides = [1, 1]} : vector<16x128xbf16> to vector<16x64xbf16>
    %45 = vector.extract_strided_slice %21 {offsets = [0, 64], sizes = [16, 64], strides = [1, 1]} : vector<16x128xbf16> to vector<16x64xbf16>
    %46 = vector.extract_strided_slice %23 {offsets = [0, 64], sizes = [16, 64], strides = [1, 1]} : vector<16x128xbf16> to vector<16x64xbf16>
    %cst_16 = arith.constant dense<0.000000e+00> : vector<16x16xf32>
    %47 = tpu.matmul %44, %45, %cst_16 {dimension_numbers = #tpu.dot_dimension_numbers<[1], [1], [0], [0], [0, 0, 1, 0], [], []>} : vector<16x64xbf16>, vector<16x64xbf16>, vector<16x16xf32> -> vector<16x16xf32>
    %48 = arith.addf %47, %13 : vector<16x16xf32>
    %cst_17 = arith.constant dense<0xFF800000> : vector<16xf32>
    %49 = vector.multi_reduction <maximumf>, %48, %cst_17 [1] : vector<16x16xf32> to vector<16xf32>
    %50 = vector.shape_cast %49 : vector<16xf32> to vector<16x1xf32>
    %51 = vector.broadcast %50 : vector<16x1xf32> to vector<16x16xf32>
    %52 = arith.subf %48, %51 : vector<16x16xf32>
    %53 = math.exp %52 : vector<16x16xf32>
    %cst_18 = arith.constant dense<0.000000e+00> : vector<16xf32>
    %54 = vector.multi_reduction <add>, %53, %cst_18 [1] : vector<16x16xf32> to vector<16xf32>
    %55 = vector.shape_cast %54 : vector<16xf32> to vector<16x1xf32>
    %56 = tpu.reciprocal %55 {approx = true} : vector<16x1xf32> -> vector<16x1xf32>
    %57 = vector.broadcast %56 : vector<16x1xf32> to vector<16x16xf32>
    %58 = arith.mulf %53, %57 : vector<16x16xf32>
    %59 = arith.truncf %58 : vector<16x16xf32> to vector<16x16xbf16>
    %cst_19 = arith.constant dense<0.000000e+00> : vector<16x64xf32>
    %60 = tpu.matmul %59, %46, %cst_19 {dimension_numbers = #tpu.dot_dimension_numbers<[1], [0], [0], [1], [0, 0, 1, 1], [], []>} : vector<16x16xbf16>, vector<16x64xbf16>, vector<16x64xf32> -> vector<16x64xf32>
    %61 = arith.truncf %60 : vector<16x64xf32> to vector<16x64xbf16>
    %c0_20 = arith.constant 0 : index
    %c64 = arith.constant 64 : index
    %62 = vector.load %arg24[%c0_20, %c64] : memref<16x128xbf16, #tpu.memory_space<vmem>>, vector<16x64xbf16>
    tpu.vector_store %arg24[%c0_20, %c64], %61 {strides = array<i32>} : memref<16x128xbf16, #tpu.memory_space<vmem>>, vector<16x64xbf16>,
    %c0_21 = arith.constant 0 : index
    %c0_22 = arith.constant 0 : index
    %63 = vector.load %arg24[%c0_21, %c0_22] : memref<16x128xbf16, #tpu.memory_space<vmem>>, vector<16x128xbf16>
    %c0_23 = arith.constant 0 : index
    %c0_24 = arith.constant 0 : index
    %64 = vector.load %arg7[%c0_23, %c0_24] : memref<128x128xbf16, #tpu.memory_space<vmem>>, vector<128x128xbf16>
    %cst_25 = arith.constant dense<0.000000e+00> : vector<16x128xf32>
    %65 = tpu.matmul %63, %64, %cst_25 {dimension_numbers = #tpu.dot_dimension_numbers<[1], [0], [0], [1], [0, 0, 1, 1], [], []>} : vector<16x128xbf16>, vector<128x128xbf16>, vector<16x128xf32> -> vector<16x128xf32>
    %c0_26 = arith.constant 0 : index
    %c0_27 = arith.constant 0 : index
    %66 = vector.load %arg8[%c0_26, %c0_27] : memref<1x128xf32, #tpu.memory_space<vmem>>, vector<1x128xf32>
    %67 = vector.broadcast %66 : vector<1x128xf32> to vector<16x128xf32>
    %68 = arith.addf %65, %67 : vector<16x128xf32>
    %69 = arith.extf %1 : vector<16x128xbf16> to vector<16x128xf32>
    %70 = arith.addf %68, %69 : vector<16x128xf32>
    %c0_28 = arith.constant 0 : index
    %c0_29 = arith.constant 0 : index
    %71 = vector.load %arg9[%c0_28, %c0_29] : memref<1x128xf32, #tpu.memory_space<vmem>>, vector<1x128xf32>
    %c0_30 = arith.constant 0 : index
    %c0_31 = arith.constant 0 : index
    %72 = vector.load %arg10[%c0_30, %c0_31] : memref<1x128xf32, #tpu.memory_space<vmem>>, vector<1x128xf32>
    %cst_32 = arith.constant dense<0.000000e+00> : vector<16xf32>
    %73 = vector.multi_reduction <add>, %70, %cst_32 [1] : vector<16x128xf32> to vector<16xf32>
    %74 = vector.shape_cast %73 : vector<16xf32> to vector<16x1xf32>
    %cst_33 = arith.constant 1.280000e+02 : f32
    %75 = vector.broadcast %cst_33 : f32 to vector<16x1xf32>
    %76 = arith.divf %74, %75 : vector<16x1xf32>
    %77 = vector.broadcast %76 : vector<16x1xf32> to vector<16x128xf32>
    %78 = arith.subf %70, %77 : vector<16x128xf32>
    %79 = arith.mulf %78, %78 : vector<16x128xf32>
    %cst_34 = arith.constant dense<0.000000e+00> : vector<16xf32>
    %80 = vector.multi_reduction <add>, %79, %cst_34 [1] : vector<16x128xf32> to vector<16xf32>
    %81 = vector.shape_cast %80 : vector<16xf32> to vector<16x1xf32>
    %cst_35 = arith.constant 1.280000e+02 : f32
    %82 = vector.broadcast %cst_35 : f32 to vector<16x1xf32>
    %83 = arith.divf %81, %82 : vector<16x1xf32>
    %84 = vector.broadcast %76 : vector<16x1xf32> to vector<16x128xf32>
    %85 = arith.subf %70, %84 : vector<16x128xf32>
    %cst_36 = arith.constant 9.99999997E-7 : f32
    %86 = vector.broadcast %cst_36 : f32 to vector<16x1xf32>
    %87 = arith.addf %83, %86 : vector<16x1xf32>
    %88 = math.rsqrt %87 : vector<16x1xf32>
    %89 = vector.broadcast %88 : vector<16x1xf32> to vector<16x128xf32>
    %90 = arith.mulf %85, %89 : vector<16x128xf32>
    %91 = vector.broadcast %71 : vector<1x128xf32> to vector<16x128xf32>
    %92 = arith.mulf %90, %91 : vector<16x128xf32>
    %93 = vector.broadcast %72 : vector<1x128xf32> to vector<16x128xf32>
    %94 = arith.addf %92, %93 : vector<16x128xf32>
    %c0_37 = arith.constant 0 : index
    %c0_38 = arith.constant 0 : index
    %c0_39 = arith.constant 0 : index
    %95 = vector.load %arg3[%c0_37, %c0_38, %c0_39] : memref<1x16x128xbf16, #tpu.memory_space<vmem>>, vector<1x16x128xbf16>
    %96 = vector.shape_cast %95 : vector<1x16x128xbf16> to vector<16x128xbf16>
    %97 = arith.truncf %94 : vector<16x128xf32> to vector<16x128xbf16>
    %c0_40 = arith.constant 0 : index
    %c0_41 = arith.constant 0 : index
    %98 = vector.load %arg11[%c0_40, %c0_41] : memref<128x128xbf16, #tpu.memory_space<vmem>>, vector<128x128xbf16>
    %cst_42 = arith.constant dense<0.000000e+00> : vector<16x128xf32>
    %99 = tpu.matmul %97, %98, %cst_42 {dimension_numbers = #tpu.dot_dimension_numbers<[1], [0], [0], [1], [0, 0, 1, 1], [], []>} : vector<16x128xbf16>, vector<128x128xbf16>, vector<16x128xf32> -> vector<16x128xf32>
    %cst_43 = arith.constant 0.0883883461 : f32
    %100 = vector.broadcast %cst_43 : f32 to vector<16x128xf32>
    %101 = arith.mulf %99, %100 : vector<16x128xf32>
    %c0_44 = arith.constant 0 : index
    %c0_45 = arith.constant 0 : index
    %102 = vector.load %arg12[%c0_44, %c0_45] : memref<128x256xbf16, #tpu.memory_space<vmem>>, vector<128x256xbf16>
    %cst_46 = arith.constant dense<0.000000e+00> : vector<16x256xf32>
    %103 = tpu.matmul %96, %102, %cst_46 {dimension_numbers = #tpu.dot_dimension_numbers<[1], [0], [0], [1], [0, 0, 1, 1], [], []>} : vector<16x128xbf16>, vector<128x256xbf16>, vector<16x256xf32> -> vector<16x256xf32>
    %104 = vector.extract_strided_slice %103 {offsets = [0, 0], sizes = [16, 128], strides = [1, 1]} : vector<16x256xf32> to vector<16x128xf32>
    %105 = arith.truncf %104 : vector<16x128xf32> to vector<16x128xbf16>
    %106 = vector.extract_strided_slice %103 {offsets = [0, 128], sizes = [16, 128], strides = [1, 1]} : vector<16x256xf32> to vector<16x128xf32>
    %107 = arith.truncf %106 : vector<16x128xf32> to vector<16x128xbf16>
    %c0_47 = arith.constant 0 : index
    %c0_48 = arith.constant 0 : index
    %c0_49 = arith.constant 0 : index
    %108 = vector.load %arg5[%c0_47, %c0_48, %c0_49] : memref<1x1x16xf32, #tpu.memory_space<vmem>>, vector<1x1x16xf32>
    %109 = vector.shape_cast %108 : vector<1x1x16xf32> to vector<1x16xf32>
    %110 = arith.truncf %101 : vector<16x128xf32> to vector<16x128xbf16>
    %111 = vector.extract_strided_slice %110 {offsets = [0, 0], sizes = [16, 64], strides = [1, 1]} : vector<16x128xbf16> to vector<16x64xbf16>
    %112 = vector.extract_strided_slice %105 {offsets = [0, 0], sizes = [16, 64], strides = [1, 1]} : vector<16x128xbf16> to vector<16x64xbf16>
    %113 = vector.extract_strided_slice %107 {offsets = [0, 0], sizes = [16, 64], strides = [1, 1]} : vector<16x128xbf16> to vector<16x64xbf16>
    %cst_50 = arith.constant dense<0.000000e+00> : vector<16x16xf32>
    %114 = tpu.matmul %111, %112, %cst_50 {dimension_numbers = #tpu.dot_dimension_numbers<[1], [1], [0], [0], [0, 0, 1, 0], [], []>} : vector<16x64xbf16>, vector<16x64xbf16>, vector<16x16xf32> -> vector<16x16xf32>
    %115 = vector.broadcast %109 : vector<1x16xf32> to vector<16x16xf32>
    %116 = arith.addf %114, %115 : vector<16x16xf32>
    %cst_51 = arith.constant dense<0xFF800000> : vector<16xf32>
    %117 = vector.multi_reduction <maximumf>, %116, %cst_51 [1] : vector<16x16xf32> to vector<16xf32>
    %118 = vector.shape_cast %117 : vector<16xf32> to vector<16x1xf32>
    %119 = vector.broadcast %118 : vector<16x1xf32> to vector<16x16xf32>
    %120 = arith.subf %116, %119 : vector<16x16xf32>
    %121 = math.exp %120 : vector<16x16xf32>
    %cst_52 = arith.constant dense<0.000000e+00> : vector<16xf32>
    %122 = vector.multi_reduction <add>, %121, %cst_52 [1] : vector<16x16xf32> to vector<16xf32>
    %123 = vector.shape_cast %122 : vector<16xf32> to vector<16x1xf32>
    %124 = tpu.reciprocal %123 {approx = true} : vector<16x1xf32> -> vector<16x1xf32>
    %125 = vector.broadcast %124 : vector<16x1xf32> to vector<16x16xf32>
    %126 = arith.mulf %121, %125 : vector<16x16xf32>
    %127 = arith.truncf %126 : vector<16x16xf32> to vector<16x16xbf16>
    %cst_53 = arith.constant dense<0.000000e+00> : vector<16x64xf32>
    %128 = tpu.matmul %127, %113, %cst_53 {dimension_numbers = #tpu.dot_dimension_numbers<[1], [0], [0], [1], [0, 0, 1, 1], [], []>} : vector<16x16xbf16>, vector<16x64xbf16>, vector<16x64xf32> -> vector<16x64xf32>
    %129 = arith.truncf %128 : vector<16x64xf32> to vector<16x64xbf16>
    %c0_54 = arith.constant 0 : index
    %c0_55 = arith.constant 0 : index
    %130 = vector.load %arg24[%c0_54, %c0_55] : memref<16x128xbf16, #tpu.memory_space<vmem>>, vector<16x64xbf16>
    tpu.vector_store %arg24[%c0_54, %c0_55], %129 {strides = array<i32>} : memref<16x128xbf16, #tpu.memory_space<vmem>>, vector<16x64xbf16>,
    %131 = vector.extract_strided_slice %110 {offsets = [0, 64], sizes = [16, 64], strides = [1, 1]} : vector<16x128xbf16> to vector<16x64xbf16>
    %132 = vector.extract_strided_slice %105 {offsets = [0, 64], sizes = [16, 64], strides = [1, 1]} : vector<16x128xbf16> to vector<16x64xbf16>
    %133 = vector.extract_strided_slice %107 {offsets = [0, 64], sizes = [16, 64], strides = [1, 1]} : vector<16x128xbf16> to vector<16x64xbf16>
    %cst_56 = arith.constant dense<0.000000e+00> : vector<16x16xf32>
    %134 = tpu.matmul %131, %132, %cst_56 {dimension_numbers = #tpu.dot_dimension_numbers<[1], [1], [0], [0], [0, 0, 1, 0], [], []>} : vector<16x64xbf16>, vector<16x64xbf16>, vector<16x16xf32> -> vector<16x16xf32>
    %135 = vector.broadcast %109 : vector<1x16xf32> to vector<16x16xf32>
    %136 = arith.addf %134, %135 : vector<16x16xf32>
    %cst_57 = arith.constant dense<0xFF800000> : vector<16xf32>
    %137 = vector.multi_reduction <maximumf>, %136, %cst_57 [1] : vector<16x16xf32> to vector<16xf32>
    %138 = vector.shape_cast %137 : vector<16xf32> to vector<16x1xf32>
    %139 = vector.broadcast %138 : vector<16x1xf32> to vector<16x16xf32>
    %140 = arith.subf %136, %139 : vector<16x16xf32>
    %141 = math.exp %140 : vector<16x16xf32>
    %cst_58 = arith.constant dense<0.000000e+00> : vector<16xf32>
    %142 = vector.multi_reduction <add>, %141, %cst_58 [1] : vector<16x16xf32> to vector<16xf32>
    %143 = vector.shape_cast %142 : vector<16xf32> to vector<16x1xf32>
    %144 = tpu.reciprocal %143 {approx = true} : vector<16x1xf32> -> vector<16x1xf32>
    %145 = vector.broadcast %144 : vector<16x1xf32> to vector<16x16xf32>
    %146 = arith.mulf %141, %145 : vector<16x16xf32>
    %147 = arith.truncf %146 : vector<16x16xf32> to vector<16x16xbf16>
    %cst_59 = arith.constant dense<0.000000e+00> : vector<16x64xf32>
    %148 = tpu.matmul %147, %133, %cst_59 {dimension_numbers = #tpu.dot_dimension_numbers<[1], [0], [0], [1], [0, 0, 1, 1], [], []>} : vector<16x16xbf16>, vector<16x64xbf16>, vector<16x64xf32> -> vector<16x64xf32>
    %149 = arith.truncf %148 : vector<16x64xf32> to vector<16x64xbf16>
    %c0_60 = arith.constant 0 : index
    %c64_61 = arith.constant 64 : index
    %150 = vector.load %arg24[%c0_60, %c64_61] : memref<16x128xbf16, #tpu.memory_space<vmem>>, vector<16x64xbf16>
    tpu.vector_store %arg24[%c0_60, %c64_61], %149 {strides = array<i32>} : memref<16x128xbf16, #tpu.memory_space<vmem>>, vector<16x64xbf16>,
    %c0_62 = arith.constant 0 : index
    %c0_63 = arith.constant 0 : index
    %151 = vector.load %arg24[%c0_62, %c0_63] : memref<16x128xbf16, #tpu.memory_space<vmem>>, vector<16x128xbf16>
    %c0_64 = arith.constant 0 : index
    %c0_65 = arith.constant 0 : index
    %152 = vector.load %arg13[%c0_64, %c0_65] : memref<128x128xbf16, #tpu.memory_space<vmem>>, vector<128x128xbf16>
    %cst_66 = arith.constant dense<0.000000e+00> : vector<16x128xf32>
    %153 = tpu.matmul %151, %152, %cst_66 {dimension_numbers = #tpu.dot_dimension_numbers<[1], [0], [0], [1], [0, 0, 1, 1], [], []>} : vector<16x128xbf16>, vector<128x128xbf16>, vector<16x128xf32> -> vector<16x128xf32>
    %c0_67 = arith.constant 0 : index
    %c0_68 = arith.constant 0 : index
    %154 = vector.load %arg14[%c0_67, %c0_68] : memref<1x128xf32, #tpu.memory_space<vmem>>, vector<1x128xf32>
    %155 = vector.broadcast %154 : vector<1x128xf32> to vector<16x128xf32>
    %156 = arith.addf %153, %155 : vector<16x128xf32>
    %157 = arith.addf %156, %94 : vector<16x128xf32>
    %c0_69 = arith.constant 0 : index
    %c0_70 = arith.constant 0 : index
    %158 = vector.load %arg15[%c0_69, %c0_70] : memref<1x128xf32, #tpu.memory_space<vmem>>, vector<1x128xf32>
    %c0_71 = arith.constant 0 : index
    %c0_72 = arith.constant 0 : index
    %159 = vector.load %arg16[%c0_71, %c0_72] : memref<1x128xf32, #tpu.memory_space<vmem>>, vector<1x128xf32>
    %cst_73 = arith.constant dense<0.000000e+00> : vector<16xf32>
    %160 = vector.multi_reduction <add>, %157, %cst_73 [1] : vector<16x128xf32> to vector<16xf32>
    %161 = vector.shape_cast %160 : vector<16xf32> to vector<16x1xf32>
    %cst_74 = arith.constant 1.280000e+02 : f32
    %162 = vector.broadcast %cst_74 : f32 to vector<16x1xf32>
    %163 = arith.divf %161, %162 : vector<16x1xf32>
    %164 = vector.broadcast %163 : vector<16x1xf32> to vector<16x128xf32>
    %165 = arith.subf %157, %164 : vector<16x128xf32>
    %166 = arith.mulf %165, %165 : vector<16x128xf32>
    %cst_75 = arith.constant dense<0.000000e+00> : vector<16xf32>
    %167 = vector.multi_reduction <add>, %166, %cst_75 [1] : vector<16x128xf32> to vector<16xf32>
    %168 = vector.shape_cast %167 : vector<16xf32> to vector<16x1xf32>
    %cst_76 = arith.constant 1.280000e+02 : f32
    %169 = vector.broadcast %cst_76 : f32 to vector<16x1xf32>
    %170 = arith.divf %168, %169 : vector<16x1xf32>
    %171 = vector.broadcast %163 : vector<16x1xf32> to vector<16x128xf32>
    %172 = arith.subf %157, %171 : vector<16x128xf32>
    %cst_77 = arith.constant 9.99999997E-7 : f32
    %173 = vector.broadcast %cst_77 : f32 to vector<16x1xf32>
    %174 = arith.addf %170, %173 : vector<16x1xf32>
    %175 = math.rsqrt %174 : vector<16x1xf32>
    %176 = vector.broadcast %175 : vector<16x1xf32> to vector<16x128xf32>
    %177 = arith.mulf %172, %176 : vector<16x128xf32>
    %178 = vector.broadcast %158 : vector<1x128xf32> to vector<16x128xf32>
    %179 = arith.mulf %177, %178 : vector<16x128xf32>
    %180 = vector.broadcast %159 : vector<1x128xf32> to vector<16x128xf32>
    %181 = arith.addf %179, %180 : vector<16x128xf32>
    %182 = arith.truncf %181 : vector<16x128xf32> to vector<16x128xbf16>
    %c0_78 = arith.constant 0 : index
    %c0_79 = arith.constant 0 : index
    %183 = vector.load %arg17[%c0_78, %c0_79] : memref<128x256xbf16, #tpu.memory_space<vmem>>, vector<128x256xbf16>
    %cst_80 = arith.constant dense<0.000000e+00> : vector<16x256xf32>
    %184 = tpu.matmul %182, %183, %cst_80 {dimension_numbers = #tpu.dot_dimension_numbers<[1], [0], [0], [1], [0, 0, 1, 1], [], []>} : vector<16x128xbf16>, vector<128x256xbf16>, vector<16x256xf32> -> vector<16x256xf32>
    %c0_81 = arith.constant 0 : index
    %c0_82 = arith.constant 0 : index
    %185 = vector.load %arg18[%c0_81, %c0_82] : memref<1x256xf32, #tpu.memory_space<vmem>>, vector<1x256xf32>
    %186 = vector.broadcast %185 : vector<1x256xf32> to vector<16x256xf32>
    %187 = arith.addf %184, %186 : vector<16x256xf32>
    %cst_83 = arith.constant 0.000000e+00 : f32
    %188 = vector.broadcast %cst_83 : f32 to vector<16x256xf32>
    %189 = arith.maximumf %187, %188 : vector<16x256xf32>
    %190 = arith.truncf %189 : vector<16x256xf32> to vector<16x256xbf16>
    %c0_84 = arith.constant 0 : index
    %c0_85 = arith.constant 0 : index
    %191 = vector.load %arg19[%c0_84, %c0_85] : memref<256x128xbf16, #tpu.memory_space<vmem>>, vector<256x128xbf16>
    %cst_86 = arith.constant dense<0.000000e+00> : vector<16x128xf32>
    %192 = tpu.matmul %190, %191, %cst_86 {dimension_numbers = #tpu.dot_dimension_numbers<[1], [0], [0], [1], [0, 0, 1, 1], [], []>} : vector<16x256xbf16>, vector<256x128xbf16>, vector<16x128xf32> -> vector<16x128xf32>
    %c0_87 = arith.constant 0 : index
    %c0_88 = arith.constant 0 : index
    %193 = vector.load %arg20[%c0_87, %c0_88] : memref<1x128xf32, #tpu.memory_space<vmem>>, vector<1x128xf32>
    %194 = vector.broadcast %193 : vector<1x128xf32> to vector<16x128xf32>
    %195 = arith.addf %192, %194 : vector<16x128xf32>
    %196 = arith.addf %195, %181 : vector<16x128xf32>
    %c0_89 = arith.constant 0 : index
    %c0_90 = arith.constant 0 : index
    %197 = vector.load %arg21[%c0_89, %c0_90] : memref<1x128xf32, #tpu.memory_space<vmem>>, vector<1x128xf32>
    %c0_91 = arith.constant 0 : index
    %c0_92 = arith.constant 0 : index
    %198 = vector.load %arg22[%c0_91, %c0_92] : memref<1x128xf32, #tpu.memory_space<vmem>>, vector<1x128xf32>
    %cst_93 = arith.constant dense<0.000000e+00> : vector<16xf32>
    %199 = vector.multi_reduction <add>, %196, %cst_93 [1] : vector<16x128xf32> to vector<16xf32>
    %200 = vector.shape_cast %199 : vector<16xf32> to vector<16x1xf32>
    %cst_94 = arith.constant 1.280000e+02 : f32
    %201 = vector.broadcast %cst_94 : f32 to vector<16x1xf32>
    %202 = arith.divf %200, %201 : vector<16x1xf32>
    %203 = vector.broadcast %202 : vector<16x1xf32> to vector<16x128xf32>
    %204 = arith.subf %196, %203 : vector<16x128xf32>
    %205 = arith.mulf %204, %204 : vector<16x128xf32>
    %cst_95 = arith.constant dense<0.000000e+00> : vector<16xf32>
    %206 = vector.multi_reduction <add>, %205, %cst_95 [1] : vector<16x128xf32> to vector<16xf32>
    %207 = vector.shape_cast %206 : vector<16xf32> to vector<16x1xf32>
    %cst_96 = arith.constant 1.280000e+02 : f32
    %208 = vector.broadcast %cst_96 : f32 to vector<16x1xf32>
    %209 = arith.divf %207, %208 : vector<16x1xf32>
    %210 = vector.broadcast %202 : vector<16x1xf32> to vector<16x128xf32>
    %211 = arith.subf %196, %210 : vector<16x128xf32>
    %cst_97 = arith.constant 9.99999997E-7 : f32
    %212 = vector.broadcast %cst_97 : f32 to vector<16x1xf32>
    %213 = arith.addf %209, %212 : vector<16x1xf32>
    %214 = math.rsqrt %213 : vector<16x1xf32>
    %215 = vector.broadcast %214 : vector<16x1xf32> to vector<16x128xf32>
    %216 = arith.mulf %211, %215 : vector<16x128xf32>
    %217 = vector.broadcast %197 : vector<1x128xf32> to vector<16x128xf32>
    %218 = arith.mulf %216, %217 : vector<16x128xf32>
    %219 = vector.broadcast %198 : vector<1x128xf32> to vector<16x128xf32>
    %220 = arith.addf %218, %219 : vector<16x128xf32>
    %221 = arith.truncf %220 : vector<16x128xf32> to vector<16x128xbf16>
    %c0_98 = arith.constant 0 : index
    %c0_99 = arith.constant 0 : index
    %c0_100 = arith.constant 0 : index
    %222 = vector.load %arg23[%c0_98, %c0_99, %c0_100] : memref<1x16x128xbf16, #tpu.memory_space<vmem>>, vector<1x16x128xbf16>
    %223 = vector.shape_cast %222 : vector<1x16x128xbf16> to vector<16x128xbf16>
    %224 = vector.shape_cast %221 : vector<16x128xbf16> to vector<1x16x128xbf16>
    tpu.vector_store %arg23[%c0_98, %c0_99, %c0_100], %224 {strides = array<i32>} : memref<1x16x128xbf16, #tpu.memory_space<vmem>>, vector<1x16x128xbf16>,
    return
  }
  func.func @transform_0(%arg0: i32, %arg1: i32) -> (i32, i32, i32) {
    %c0_i32 = arith.constant 0 : i32
    %c0_i32_0 = arith.constant 0 : i32
    %c0_i32_1 = arith.constant 0 : i32
    return %arg0, %c0_i32, %c0_i32_0 : i32, i32, i32
  }
  func.func @transform_1(%arg0: i32, %arg1: i32) -> (i32, i32, i32) {
    %c0_i32 = arith.constant 0 : i32
    %c0_i32_0 = arith.constant 0 : i32
    %c0_i32_1 = arith.constant 0 : i32
    return %arg0, %c0_i32, %c0_i32_0 : i32, i32, i32
  }
  func.func @transform_2(%arg0: i32, %arg1: i32) -> (i32, i32, i32) {
    %c0_i32 = arith.constant 0 : i32
    %c0_i32_0 = arith.constant 0 : i32
    %c0_i32_1 = arith.constant 0 : i32
    return %arg0, %c0_i32, %c0_i32_0 : i32, i32, i32
  }
  func.func @transform_3(%arg0: i32, %arg1: i32) -> (i32, i32, i32) {
    %c0_i32 = arith.constant 0 : i32
    %c0_i32_0 = arith.constant 0 : i32
    %c0_i32_1 = arith.constant 0 : i32
    return %arg0, %c0_i32, %c0_i32_0 : i32, i32, i32
  }
  func.func @transform_4(%arg0: i32, %arg1: i32) -> (i32, i32) {
    %c0_i32 = arith.constant 0 : i32
    %c0_i32_0 = arith.constant 0 : i32
    %c0_i32_1 = arith.constant 0 : i32
    return %c0_i32, %c0_i32_0 : i32, i32
  }
  func.func @transform_5(%arg0: i32, %arg1: i32) -> (i32, i32) {
    %c0_i32 = arith.constant 0 : i32
    %c0_i32_0 = arith.constant 0 : i32
    %c0_i32_1 = arith.constant 0 : i32
    return %c0_i32, %c0_i32_0 : i32, i32
  }
  func.func @transform_6(%arg0: i32, %arg1: i32) -> (i32, i32) {
    %c0_i32 = arith.constant 0 : i32
    %c0_i32_0 = arith.constant 0 : i32
    %c0_i32_1 = arith.constant 0 : i32
    return %c0_i32, %c0_i32_0 : i32, i32
  }
  func.func @transform_7(%arg0: i32, %arg1: i32) -> (i32, i32) {
    %c0_i32 = arith.constant 0 : i32
    %c0_i32_0 = arith.constant 0 : i32
    %c0_i32_1 = arith.constant 0 : i32
    return %c0_i32, %c0_i32_0 : i32, i32
  }
  func.func @transform_8(%arg0: i32, %arg1: i32) -> (i32, i32) {
    %c0_i32 = arith.constant 0 : i32
    %c0_i32_0 = arith.constant 0 : i32
    %c0_i32_1 = arith.constant 0 : i32
    return %c0_i32, %c0_i32_0 : i32, i32
  }
  func.func @transform_9(%arg0: i32, %arg1: i32) -> (i32, i32) {
    %c0_i32 = arith.constant 0 : i32
    %c0_i32_0 = arith.constant 0 : i32
    %c0_i32_1 = arith.constant 0 : i32
    return %c0_i32, %c0_i32_0 : i32, i32
  }
  func.func @transform_10(%arg0: i32, %arg1: i32) -> (i32, i32) {
    %c0_i32 = arith.constant 0 : i32
    %c0_i32_0 = arith.constant 0 : i32
    %c0_i32_1 = arith.constant 0 : i32
    return %c0_i32, %c0_i32_0 : i32, i32
  }
  func.func @transform_11(%arg0: i32, %arg1: i32) -> (i32, i32) {
    %c0_i32 = arith.constant 0 : i32
    %c0_i32_0 = arith.constant 0 : i32
    %c0_i32_1 = arith.constant 0 : i32
    return %c0_i32, %c0_i32_0 : i32, i32
  }
  func.func @transform_12(%arg0: i32, %arg1: i32) -> (i32, i32) {
    %c0_i32 = arith.constant 0 : i32
    %c0_i32_0 = arith.constant 0 : i32
    %c0_i32_1 = arith.constant 0 : i32
    return %c0_i32, %c0_i32_0 : i32, i32
  }
  func.func @transform_13(%arg0: i32, %arg1: i32) -> (i32, i32) {
    %c0_i32 = arith.constant 0 : i32
    %c0_i32_0 = arith.constant 0 : i32
    %c0_i32_1 = arith.constant 0 : i32
    return %c0_i32, %c0_i32_0 : i32, i32
  }
  func.func @transform_14(%arg0: i32, %arg1: i32) -> (i32, i32) {
    %c0_i32 = arith.constant 0 : i32
    %c0_i32_0 = arith.constant 0 : i32
    %c0_i32_1 = arith.constant 0 : i32
    return %c0_i32, %c0_i32_0 : i32, i32
  }
  func.func @transform_15(%arg0: i32, %arg1: i32) -> (i32, i32) {
    %c0_i32 = arith.constant 0 : i32
    %c0_i32_0 = arith.constant 0 : i32
    %c0_i32_1 = arith.constant 0 : i32
    return %c0_i32, %c0_i32_0 : i32, i32
  }
  func.func @transform_16(%arg0: i32, %arg1: i32) -> (i32, i32) {
    %c0_i32 = arith.constant 0 : i32
    %c0_i32_0 = arith.constant 0 : i32
    %c0_i32_1 = arith.constant 0 : i32
    return %c0_i32, %c0_i32_0 : i32, i32
  }
  func.func @transform_17(%arg0: i32, %arg1: i32) -> (i32, i32) {
    %c0_i32 = arith.constant 0 : i32
    %c0_i32_0 = arith.constant 0 : i32
    %c0_i32_1 = arith.constant 0 : i32
    return %c0_i32, %c0_i32_0 : i32, i32
  }
  func.func @transform_18(%arg0: i32, %arg1: i32) -> (i32, i32) {
    %c0_i32 = arith.constant 0 : i32
    %c0_i32_0 = arith.constant 0 : i32
    %c0_i32_1 = arith.constant 0 : i32
    return %c0_i32, %c0_i32_0 : i32, i32
  }
  func.func @transform_19(%arg0: i32, %arg1: i32) -> (i32, i32) {
    %c0_i32 = arith.constant 0 : i32
    %c0_i32_0 = arith.constant 0 : i32
    %c0_i32_1 = arith.constant 0 : i32
    return %c0_i32, %c0_i32_0 : i32, i32
  }
  func.func @transform_20(%arg0: i32, %arg1: i32) -> (i32, i32) {
    %c0_i32 = arith.constant 0 : i32
    %c0_i32_0 = arith.constant 0 : i32
    %c0_i32_1 = arith.constant 0 : i32
    return %c0_i32, %c0_i32_0 : i32, i32
  }
  func.func @transform_21(%arg0: i32, %arg1: i32) -> (i32, i32, i32) {
    %c0_i32 = arith.constant 0 : i32
    %c0_i32_0 = arith.constant 0 : i32
    return %arg0, %arg1, %c0_i32 : i32, i32, i32
  }
}

</mosaic_0001>

<llo_original>
// kernel: tpu_custom_call.1
$region0: #{tpu_custom_call.1}
  #allocation0 [shape = 'u32[]', space=smem, size = 0x4, offset = 0x4, fixed_abs, tag = 'smem constant byte address 0x4 - core index']
  #allocation1 [shape = 'u32[72,128]{1,0:T(1,128)}', space=vmem, size = 0x9000, scoped, tag = 'internal scratch']
  %s0 = inlined_call_operand.hbm [shape: f32[8,128], index: 0, kind: input, shape index: {}]
  %s1 = inlined_call_operand.hbm [shape: f32[8,128], index: 1, kind: input, shape index: {}]
  %s2 = inlined_call_operand.hbm [shape: f32[8,128], index: 2, kind: output, shape index: {}]
  %s3 = sld [smem:[#allocation0]]
  $region49: #{tpu_custom_call.1} parent=0
    _
  %s5 = ssub.s32 1, %s3
  %s6 = scalar_select 0, %s5, %s3
  $region1: #{tpu_custom_call.1} parent=0
    #allocation2 [shape = 'u8[4096]{0}', space=vmem, size = 0x1000, scoped, tag = 'input window, operand 0, single buffered']
    #allocation3 [shape = 's32[2]{0}', space=sflag, size = 0x8, scoped, tag = 'scoped memory for tpu_custom_call.1']
    #allocation4 [shape = 's32[2]{0}', space=sflag, size = 0x8, scoped, tag = 'scoped memory for tpu_custom_call.1']
    #allocation5 [shape = 'u8[4096]{0}', space=vmem, size = 0x1000, scoped, tag = 'input window, operand 1, single buffered']
    #allocation6 [shape = 's32[1]{0}', space=sflag, size = 0x4, scoped, tag = 'scoped memory for tpu_custom_call.1']
    #allocation7 [shape = 'u8[4096]{0}', space=vmem, size = 0x1000, scoped, tag = 'output window, operand 0, single buffered']
    %7 = vsyncpa [#allocation3], 0
    %8 = vsyncpa [#allocation6], 0
    %9 = vsyncpa [#allocation4], 0
    loop: start=0, step=1, limit=4
    $region2: #{tpu_custom_call.1} parent=1 // loop_pre_header
      _
    $region3: #{tpu_custom_call.1} parent=1 // loop_header
      %s11 = sphi 0, %s15
      %p12 = scmp.ge.s32.totalorder %s11, 4
      %s19 = sphi 0, %s19
      %s21 = sphi 0, %s19
      %s22 = sphi 0, %s21
      %s36 = sphi 0, %s22
      %s40 = sphi 0, %s40
      %s42 = sphi 0, %s40
      %s43 = sphi 0, %s42
      %s57 = sphi 0, %s43
      %s61 = sphi 0, %s61
      %s63 = sphi 0, %s61
      %s64 = sphi 0, %s63
      %s78 = sphi 0, %s64
    $region4: #{tpu_custom_call.1} parent=1 // loop_header_branch
      %14 = sbr.rel (%p12) target = $region8
    $region5: #{tpu_custom_call.1} parent=1 // loop_body
      %s16 = ssub.s32 %s11, 1
      %s17 = ssub.s32 %s11, 2
      %s18 = sadd.s32 %s11, 1
      %s20 = sadd.s32 %s19, 1
      %p23 = scmp.eq.s32.totalorder %s11, 1
      %p24 = scmp.ne.s32.totalorder %s19, %s21
      %p25 = scmp.eq.s32.totalorder %s11, 0
      %p26 = por %p24, %p25
      %p27 = scmp.ne.s32.totalorder %s19, %s21
      %p28 = scmp.eq.s32.totalorder %s16, 1
      %p29 = por %p27, %p28
      %p30 = scmp.ne.s32.totalorder %s21, %s22
      %p31 = scmp.eq.s32.totalorder %s16, 0
      %p32 = por %p30, %p31
      %p33 = scmp.ne.s32.totalorder %s21, %s22
      %p34 = scmp.eq.s32.totalorder %s17, 1
      %p35 = por %p33, %p34
      %p37 = scmp.ne.s32.totalorder %s22, %s36
      %p38 = scmp.eq.s32.totalorder %s17, 0
      %p39 = por %p37, %p38
      %s41 = sadd.s32 %s40, 1
      %p44 = scmp.eq.s32.totalorder %s11, 1
      %p45 = scmp.ne.s32.totalorder %s40, %s42
      %p46 = scmp.eq.s32.totalorder %s11, 0
      %p47 = por %p45, %p46
      %p48 = scmp.ne.s32.totalorder %s40, %s42
      %p49 = scmp.eq.s32.totalorder %s16, 1
      %p50 = por %p48, %p49
      %p51 = scmp.ne.s32.totalorder %s42, %s43
      %p52 = scmp.eq.s32.totalorder %s16, 0
      %p53 = por %p51, %p52
      %p54 = scmp.ne.s32.totalorder %s42, %s43
      %p55 = scmp.eq.s32.totalorder %s17, 1
      %p56 = por %p54, %p55
      %p58 = scmp.ne.s32.totalorder %s43, %s57
      %p59 = scmp.eq.s32.totalorder %s17, 0
      %p60 = por %p58, %p59
      %s62 = sadd.s32 %s61, 1
      %p65 = scmp.eq.s32.totalorder %s11, 1
      %p66 = scmp.ne.s32.totalorder %s61, %s63
      %p67 = scmp.eq.s32.totalorder %s11, 0
      %p68 = por %p66, %p67
      %p69 = scmp.ne.s32.totalorder %s61, %s63
      %p70 = scmp.eq.s32.totalorder %s16, 1
      %p71 = por %p69, %p70
      %p72 = scmp.ne.s32.totalorder %s63, %s64
      %p73 = scmp.eq.s32.totalorder %s16, 0
      %p74 = por %p72, %p73
      %p75 = scmp.ne.s32.totalorder %s63, %s64
      %p76 = scmp.eq.s32.totalorder %s17, 1
      %p77 = por %p75, %p76
      %p79 = scmp.ne.s32.totalorder %s64, %s78
      %p80 = scmp.eq.s32.totalorder %s17, 0
      %p81 = por %p79, %p80
      %p82 = scmp.le.s32.totalorder 1, %s11
      %p83 = scmp.lt.s32.totalorder %s11, 3
      %p84 = pnand %p82, %p83
      %p85 = pneg %p84
      // Predicated region
      $region9: #{tpu_custom_call.1} parent=5 // pred_check
        _
      $region10: #{tpu_custom_call.1} parent=5 // pred_check_branch
        %87 = sbr.rel (%p84) target = $region12
      $region11: #{tpu_custom_call.1} parent=5 // pred_region
        %s88 = ssub.s32 %s11, 1
        // Predicated region
        $region13: #{tpu_custom_call.1} parent=11 // pred_check
          %p89 = pneg %p32
        $region14: #{tpu_custom_call.1} parent=11 // pred_check_branch
          %91 = sbr.rel (%p89) target = $region16
        $region15: #{tpu_custom_call.1} parent=11 // pred_region
          %93 = vsyncadd [#allocation3], 0
          %s95 = sshll.u32 %s0, 4
          %s96 = int_to_ptr.hbm [resolvable:$true] %s95
          %s97 = sshll.u32 [#allocation2], 4
          %s98 = int_to_ptr.vmem [resolvable:$true] %s97
          %100 = dma.hbm_to_vmem [thread:$0]  %s96, 128, %s98, [#allocation3]
        $region16: #{tpu_custom_call.1} parent=11 // pred_fallthru
          _
        // Predicated region
        $region17: #{tpu_custom_call.1} parent=11 // pred_check
          %p101 = pneg %p53
        $region18: #{tpu_custom_call.1} parent=11 // pred_check_branch
          %103 = sbr.rel (%p101) target = $region20
        $region19: #{tpu_custom_call.1} parent=11 // pred_region
          %105 = vsyncadd [#allocation6], 0
          %s107 = sshll.u32 %s1, 4
          %s108 = int_to_ptr.hbm [resolvable:$true] %s107
          %s109 = sshll.u32 [#allocation5], 4
          %s110 = int_to_ptr.vmem [resolvable:$true] %s109
          %112 = dma.hbm_to_vmem [thread:$0]  %s108, 128, %s110, [#allocation6]
        $region20: #{tpu_custom_call.1} parent=11 // pred_fallthru
          _
      $region12: #{tpu_custom_call.1} parent=5 // pred_fallthru
        _
      %p113 = scmp.lt.s32.totalorder %s11, 2
      // Predicated region
      $region21: #{tpu_custom_call.1} parent=5 // pred_check
        %p114 = pneg %p113
      $region22: #{tpu_custom_call.1} parent=5 // pred_check_branch
        %116 = sbr.rel (%p114) target = $region24
      $region23: #{tpu_custom_call.1} parent=5 // pred_region
        _
      $region24: #{tpu_custom_call.1} parent=5 // pred_fallthru
        _
      %p117 = scmp.le.s32.totalorder 1, %s11
      %p118 = scmp.lt.s32.totalorder %s11, 3
      %p119 = pnand %p117, %p118
      %p120 = pneg %p119
      // Predicated region
      $region25: #{tpu_custom_call.1} parent=5 // pred_check
        _
      $region26: #{tpu_custom_call.1} parent=5 // pred_check_branch
        %122 = sbr.rel (%p119) target = $region28
      $region27: #{tpu_custom_call.1} parent=5 // pred_region
        %s123 = ssub.s32 %s11, 1
        // Predicated region
        $region29: #{tpu_custom_call.1} parent=27 // pred_check
          %p124 = pneg %p32
        $region30: #{tpu_custom_call.1} parent=27 // pred_check_branch
          %126 = sbr.rel (%p124) target = $region32
        $region31: #{tpu_custom_call.1} parent=27 // pred_region
          %128 = dma.done [#allocation3], 128
        $region32: #{tpu_custom_call.1} parent=27 // pred_fallthru
          _
        // Predicated region
        $region33: #{tpu_custom_call.1} parent=27 // pred_check
          %p129 = pneg %p53
        $region34: #{tpu_custom_call.1} parent=27 // pred_check_branch
          %131 = sbr.rel (%p129) target = $region36
        $region35: #{tpu_custom_call.1} parent=27 // pred_region
          %133 = dma.done [#allocation6], 128
        $region36: #{tpu_custom_call.1} parent=27 // pred_fallthru
          _
        %p134 = pneg %p32
        %p135 = pneg %p29
        %p136 = pneg %p53
        %p137 = pneg %p50
        %p138 = pneg %p74
        %p139 = pneg %p71
        %v140 = vld [vmem:[#allocation2] sm:$0xff]
        %v141 = vld [vmem:[#allocation5] sm:$0xff]
        %v142 = vadd.f32 %v140, %v141
        %143 = vst [vmem:[#allocation7] sm:$0xff] %v142
        // Predicated region
        $region37: #{tpu_custom_call.1} parent=27 // pred_check
          %p144 = pneg %p71
        $region38: #{tpu_custom_call.1} parent=27 // pred_check_branch
          %146 = sbr.rel (%p144) target = $region40
        $region39: #{tpu_custom_call.1} parent=27 // pred_region
          %148 = vsyncadd [#allocation4], 0
          %s150 = sshll.u32 [#allocation7], 4
          %s151 = int_to_ptr.vmem [resolvable:$true] %s150
          %s152 = sshll.u32 %s2, 4
          %s153 = int_to_ptr.hbm [resolvable:$true] %s152
          %155 = dma.vmem_to_hbm [thread:$0]  %s151, 128, %s153, [#allocation4]
        $region40: #{tpu_custom_call.1} parent=27 // pred_fallthru
          _
        // Predicated region
        $region41: #{tpu_custom_call.1} parent=27 // pred_check
          %p156 = pneg %p71
        $region42: #{tpu_custom_call.1} parent=27 // pred_check_branch
          %158 = sbr.rel (%p156) target = $region44
        $region43: #{tpu_custom_call.1} parent=27 // pred_region
          %160 = dma.done [#allocation4], 128
        $region44: #{tpu_custom_call.1} parent=27 // pred_fallthru
          _
      $region28: #{tpu_custom_call.1} parent=5 // pred_fallthru
        _
      %p161 = scmp.le.s32.totalorder 2, %s11
      // Predicated region
      $region45: #{tpu_custom_call.1} parent=5 // pred_check
        %p162 = pneg %p161
      $region46: #{tpu_custom_call.1} parent=5 // pred_check_branch
        %164 = sbr.rel (%p162) target = $region48
      $region47: #{tpu_custom_call.1} parent=5 // pred_region
        %s165 = ssub.s32 %s11, 2
      $region48: #{tpu_custom_call.1} parent=5 // pred_fallthru
        _
    $region6: #{tpu_custom_call.1} parent=1 // loop_footer
      %s15 = sadd.s32 1, %s11
    $region7: #{tpu_custom_call.1} parent=1 // loop_footer_branch
      %10 = sbr.rel target = $region3
    $region8: #{tpu_custom_call.1} parent=1 // loop_exit
      _
    %166 = vsyncpa [#allocation3], 1
    %s167 = scalar_lea.sflag [#allocation3], 1
    %168 = vsyncpa %s167, 1
    %169 = vsyncpa [#allocation6], 1
    %170 = vsyncpa [#allocation4], 1
    %s171 = scalar_lea.sflag [#allocation4], 1
    %172 = vsyncpa %s171, 1

// kernel: decoder_forward.2
$region0: #{decoder_forward.2}
  #allocation0 [shape = 'u32[]', space=smem, size = 0x4, offset = 0x4, fixed_abs, tag = 'smem constant byte address 0x4 - core index']
  #allocation1 [shape = 'u32[72,128]{1,0:T(1,128)}', space=vmem, size = 0x9000, scoped, tag = 'internal scratch']
  #allocation2 [shape = 'bf16[16,128]{1,0:T(8,128)(2,1)}', space=vmem, size = 0x1000, scoped, tag = 'scratch operand']
  %s0 = inlined_call_operand.vmem [shape: bf16[2,16,128], index: 0, kind: input, shape index: {}]
  %s1 = inlined_call_operand.vmem [shape: bf16[2,16,128], index: 1, kind: input, shape index: {}]
  %s2 = inlined_call_operand.vmem [shape: f32[2,1,16], index: 2, kind: input, shape index: {}]
  %s3 = inlined_call_operand.vmem [shape: f32[2,1,16], index: 3, kind: input, shape index: {}]
  %s4 = inlined_call_operand.vmem [shape: bf16[128,384], index: 4, kind: input, shape index: {}]
  %s5 = inlined_call_operand.vmem [shape: bf16[128,128], index: 5, kind: input, shape index: {}]
  %s6 = inlined_call_operand.vmem [shape: f32[1,128], index: 6, kind: input, shape index: {}]
  %s7 = inlined_call_operand.vmem [shape: f32[1,128], index: 7, kind: input, shape index: {}]
  %s8 = inlined_call_operand.vmem [shape: f32[1,128], index: 8, kind: input, shape index: {}]
  %s9 = inlined_call_operand.vmem [shape: bf16[128,128], index: 9, kind: input, shape index: {}]
  %s10 = inlined_call_operand.vmem [shape: bf16[128,256], index: 10, kind: input, shape index: {}]
  %s11 = inlined_call_operand.hbm [shape: bf16[128,128], index: 11, kind: input, shape index: {}]
  %s12 = inlined_call_operand.vmem [shape: f32[1,128], index: 12, kind: input, shape index: {}]
  %s13 = inlined_call_operand.vmem [shape: f32[1,128], index: 13, kind: input, shape index: {}]
  %s14 = inlined_call_operand.vmem [shape: f32[1,128], index: 14, kind: input, shape index: {}]
  %s15 = inlined_call_operand.vmem [shape: bf16[128,256], index: 15, kind: input, shape index: {}]
  %s16 = inlined_call_operand.vmem [shape: f32[1,256], index: 16, kind: input, shape index: {}]
  %s17 = inlined_call_operand.vmem [shape: bf16[256,128], index: 17, kind: input, shape index: {}]
  %s18 = inlined_call_operand.vmem [shape: f32[1,128], index: 18, kind: input, shape index: {}]
  %s19 = inlined_call_operand.vmem [shape: f32[1,128], index: 19, kind: input, shape index: {}]
  %s20 = inlined_call_operand.vmem [shape: f32[1,128], index: 20, kind: input, shape index: {}]
  %s21 = inlined_call_operand.vmem [shape: bf16[2,16,128], index: 21, kind: output, shape index: {}]
  %s22 = sld [smem:[#allocation0]]
  $region121: #{decoder_forward.2} parent=0
    _
  %s24 = ssub.s32 1, %s22
  %s25 = scalar_select 0, %s24, %s22
  $region1: #{decoder_forward.2} parent=0
    #allocation3 [shape = 'u8[32768]{0}', space=vmem, size = 0x8000, scoped, tag = 'input window, operand 11, single buffered']
    #allocation4 [shape = 's32[2]{0}', space=sflag, size = 0x8, scoped, tag = 'scoped memory for decoder_forward.2']
    %26 = vsyncpa [#allocation4], 0
    loop: start=0, step=1, limit=4
    $region2: #{decoder_forward.2} parent=1 // loop_pre_header
      _
    $region3: #{decoder_forward.2} parent=1 // loop_header
      %s28 = sphi 0, %s32
      %p29 = scmp.ge.s32.totalorder %s28, 4
      %s35 = sphi 0, %s47
      %s36 = sphi 0, %s43
      %s37 = sphi 0, %s35
      %s38 = sphi 0, %s36
      %s39 = sphi 0, %s37
      %s40 = sphi 0, %s38
      %s50 = sphi 0, %s52
      %s53 = sphi 0, %s50
      %s54 = sphi 0, %s53
      %s70 = sphi 0, %s54
      %s76 = sphi 0, %s78
      %s79 = sphi 0, %s76
      %s80 = sphi 0, %s79
      %s96 = sphi 0, %s80
      %s102 = sphi 0, %s104
      %s105 = sphi 0, %s102
      %s106 = sphi 0, %s105
      %s122 = sphi 0, %s106
      %s128 = sphi 0, %s130
      %s131 = sphi 0, %s128
      %s132 = sphi 0, %s131
      %s148 = sphi 0, %s132
      %s152 = sphi 0, %s152
      %s154 = sphi 0, %s152
      %s155 = sphi 0, %s154
      %s169 = sphi 0, %s155
      %s173 = sphi 0, %s173
      %s175 = sphi 0, %s173
      %s176 = sphi 0, %s175
      %s190 = sphi 0, %s176
      %s194 = sphi 0, %s194
      %s196 = sphi 0, %s194
      %s197 = sphi 0, %s196
      %s211 = sphi 0, %s197
      %s215 = sphi 0, %s215
      %s217 = sphi 0, %s215
      %s218 = sphi 0, %s217
      %s232 = sphi 0, %s218
      %s236 = sphi 0, %s236
      %s238 = sphi 0, %s236
      %s239 = sphi 0, %s238
      %s253 = sphi 0, %s239
      %s257 = sphi 0, %s257
      %s259 = sphi 0, %s257
      %s260 = sphi 0, %s259
      %s274 = sphi 0, %s260
      %s278 = sphi 0, %s278
      %s280 = sphi 0, %s278
      %s281 = sphi 0, %s280
      %s295 = sphi 0, %s281
      %s299 = sphi 0, %s299
      %s301 = sphi 0, %s299
      %s302 = sphi 0, %s301
      %s316 = sphi 0, %s302
      %s320 = sphi 0, %s320
      %s322 = sphi 0, %s320
      %s323 = sphi 0, %s322
      %s337 = sphi 0, %s323
      %s341 = sphi 0, %s341
      %s343 = sphi 0, %s341
      %s344 = sphi 0, %s343
      %s358 = sphi 0, %s344
      %s362 = sphi 0, %s362
      %s364 = sphi 0, %s362
      %s365 = sphi 0, %s364
      %s379 = sphi 0, %s365
      %s383 = sphi 0, %s383
      %s385 = sphi 0, %s383
      %s386 = sphi 0, %s385
      %s400 = sphi 0, %s386
      %s404 = sphi 0, %s404
      %s406 = sphi 0, %s404
      %s407 = sphi 0, %s406
      %s421 = sphi 0, %s407
      %s425 = sphi 0, %s425
      %s427 = sphi 0, %s425
      %s428 = sphi 0, %s427
      %s442 = sphi 0, %s428
      %s446 = sphi 0, %s446
      %s448 = sphi 0, %s446
      %s449 = sphi 0, %s448
      %s463 = sphi 0, %s449
      %s467 = sphi 0, %s467
      %s469 = sphi 0, %s467
      %s470 = sphi 0, %s469
      %s484 = sphi 0, %s470
      %s488 = sphi 0, %s488
      %s490 = sphi 0, %s488
      %s491 = sphi 0, %s490
      %s505 = sphi 0, %s491
      %s513 = sphi 0, %s515
      %s516 = sphi 0, %s513
      %s517 = sphi 0, %s516
      %s533 = sphi 0, %s517
    $region4: #{decoder_forward.2} parent=1 // loop_header_branch
      %31 = sbr.rel (%p29) target = $region8
    $region5: #{decoder_forward.2} parent=1 // loop_body
      %s33 = ssub.s32 %s28, 1
      %s34 = ssub.s32 %s28, 2
      %s41 = sadd.s32 1, %s36
      %p42 = scmp.ge.s32.totalorder %s41, 1
      %s43 = scalar_select %p42, 0, %s41
      %s44 = sadd.s32 1, %s35
      %s45 = scalar_select %p42, %s44, %s35
      %p46 = scmp.ge.s32.totalorder %s45, 2
      %s47 = scalar_select %p46, 0, %s45
      %s48 = ssub.s32 %s35, %s47
      %p49 = scmp.eq.s32.totalorder %s48, 0
      %s51 = sadd.s32 %s50, 1
      %s52 = scalar_select %p49, %s50, %s51
      %p55 = pneg %p49
      %p56 = scmp.eq.s32.totalorder %s28, 1
      %p57 = por %p55, %p56
      %p58 = scmp.ne.s32.totalorder %s50, %s53
      %p59 = scmp.eq.s32.totalorder %s28, 0
      %p60 = por %p58, %p59
      %p61 = scmp.ne.s32.totalorder %s50, %s53
      %p62 = scmp.eq.s32.totalorder %s33, 1
      %p63 = por %p61, %p62
      %p64 = scmp.ne.s32.totalorder %s53, %s54
      %p65 = scmp.eq.s32.totalorder %s33, 0
      %p66 = por %p64, %p65
      %p67 = scmp.ne.s32.totalorder %s53, %s54
      %p68 = scmp.eq.s32.totalorder %s34, 1
      %p69 = por %p67, %p68
      %p71 = scmp.ne.s32.totalorder %s54, %s70
      %p72 = scmp.eq.s32.totalorder %s34, 0
      %p73 = por %p71, %p72
      %s74 = ssub.s32 %s35, %s47
      %p75 = scmp.eq.s32.totalorder %s74, 0
      %s77 = sadd.s32 %s76, 1
      %s78 = scalar_select %p75, %s76, %s77
      %p81 = pneg %p75
      %p82 = scmp.eq.s32.totalorder %s28, 1
      %p83 = por %p81, %p82
      %p84 = scmp.ne.s32.totalorder %s76, %s79
      %p85 = scmp.eq.s32.totalorder %s28, 0
      %p86 = por %p84, %p85
      %p87 = scmp.ne.s32.totalorder %s76, %s79
      %p88 = scmp.eq.s32.totalorder %s33, 1
      %p89 = por %p87, %p88
      %p90 = scmp.ne.s32.totalorder %s79, %s80
      %p91 = scmp.eq.s32.totalorder %s33, 0
      %p92 = por %p90, %p91
      %p93 = scmp.ne.s32.totalorder %s79, %s80
      %p94 = scmp.eq.s32.totalorder %s34, 1
      %p95 = por %p93, %p94
      %p97 = scmp.ne.s32.totalorder %s80, %s96
      %p98 = scmp.eq.s32.totalorder %s34, 0
      %p99 = por %p97, %p98
      %s100 = ssub.s32 %s35, %s47
      %p101 = scmp.eq.s32.totalorder %s100, 0
      %s103 = sadd.s32 %s102, 1
      %s104 = scalar_select %p101, %s102, %s103
      %p107 = pneg %p101
      %p108 = scmp.eq.s32.totalorder %s28, 1
      %p109 = por %p107, %p108
      %p110 = scmp.ne.s32.totalorder %s102, %s105
      %p111 = scmp.eq.s32.totalorder %s28, 0
      %p112 = por %p110, %p111
      %p113 = scmp.ne.s32.totalorder %s102, %s105
      %p114 = scmp.eq.s32.totalorder %s33, 1
      %p115 = por %p113, %p114
      %p116 = scmp.ne.s32.totalorder %s105, %s106
      %p117 = scmp.eq.s32.totalorder %s33, 0
      %p118 = por %p116, %p117
      %p119 = scmp.ne.s32.totalorder %s105, %s106
      %p120 = scmp.eq.s32.totalorder %s34, 1
      %p121 = por %p119, %p120
      %p123 = scmp.ne.s32.totalorder %s106, %s122
      %p124 = scmp.eq.s32.totalorder %s34, 0
      %p125 = por %p123, %p124
      %s126 = ssub.s32 %s35, %s47
      %p127 = scmp.eq.s32.totalorder %s126, 0
      %s129 = sadd.s32 %s128, 1
      %s130 = scalar_select %p127, %s128, %s129
      %p133 = pneg %p127
      %p134 = scmp.eq.s32.totalorder %s28, 1
      %p135 = por %p133, %p134
      %p136 = scmp.ne.s32.totalorder %s128, %s131
      %p137 = scmp.eq.s32.totalorder %s28, 0
      %p138 = por %p136, %p137
      %p139 = scmp.ne.s32.totalorder %s128, %s131
      %p140 = scmp.eq.s32.totalorder %s33, 1
      %p141 = por %p139, %p140
      %p142 = scmp.ne.s32.totalorder %s131, %s132
      %p143 = scmp.eq.s32.totalorder %s33, 0
      %p144 = por %p142, %p143
      %p145 = scmp.ne.s32.totalorder %s131, %s132
      %p146 = scmp.eq.s32.totalorder %s34, 1
      %p147 = por %p145, %p146
      %p149 = scmp.ne.s32.totalorder %s132, %s148
      %p150 = scmp.eq.s32.totalorder %s34, 0
      %p151 = por %p149, %p150
      %s153 = sadd.s32 %s152, 1
      %p156 = scmp.eq.s32.totalorder %s28, 1
      %p157 = scmp.ne.s32.totalorder %s152, %s154
      %p158 = scmp.eq.s32.totalorder %s28, 0
      %p159 = por %p157, %p158
      %p160 = scmp.ne.s32.totalorder %s152, %s154
      %p161 = scmp.eq.s32.totalorder %s33, 1
      %p162 = por %p160, %p161
      %p163 = scmp.ne.s32.totalorder %s154, %s155
      %p164 = scmp.eq.s32.totalorder %s33, 0
      %p165 = por %p163, %p164
      %p166 = scmp.ne.s32.totalorder %s154, %s155
      %p167 = scmp.eq.s32.totalorder %s34, 1
      %p168 = por %p166, %p167
      %p170 = scmp.ne.s32.totalorder %s155, %s169
      %p171 = scmp.eq.s32.totalorder %s34, 0
      %p172 = por %p170, %p171
      %s174 = sadd.s32 %s173, 1
      %p177 = scmp.eq.s32.totalorder %s28, 1
      %p178 = scmp.ne.s32.totalorder %s173, %s175
      %p179 = scmp.eq.s32.totalorder %s28, 0
      %p180 = por %p178, %p179
      %p181 = scmp.ne.s32.totalorder %s173, %s175
      %p182 = scmp.eq.s32.totalorder %s33, 1
      %p183 = por %p181, %p182
      %p184 = scmp.ne.s32.totalorder %s175, %s176
      %p185 = scmp.eq.s32.totalorder %s33, 0
      %p186 = por %p184, %p185
      %p187 = scmp.ne.s32.totalorder %s175, %s176
      %p188 = scmp.eq.s32.totalorder %s34, 1
      %p189 = por %p187, %p188
      %p191 = scmp.ne.s32.totalorder %s176, %s190
      %p192 = scmp.eq.s32.totalorder %s34, 0
      %p193 = por %p191, %p192
      %s195 = sadd.s32 %s194, 1
      %p198 = scmp.eq.s32.totalorder %s28, 1
      %p199 = scmp.ne.s32.totalorder %s194, %s196
      %p200 = scmp.eq.s32.totalorder %s28, 0
      %p201 = por %p199, %p200
      %p202 = scmp.ne.s32.totalorder %s194, %s196
      %p203 = scmp.eq.s32.totalorder %s33, 1
      %p204 = por %p202, %p203
      %p205 = scmp.ne.s32.totalorder %s196, %s197
      %p206 = scmp.eq.s32.totalorder %s33, 0
      %p207 = por %p205, %p206
      %p208 = scmp.ne.s32.totalorder %s196, %s197
      %p209 = scmp.eq.s32.totalorder %s34, 1
      %p210 = por %p208, %p209
      %p212 = scmp.ne.s32.totalorder %s197, %s211
      %p213 = scmp.eq.s32.totalorder %s34, 0
      %p214 = por %p212, %p213
      %s216 = sadd.s32 %s215, 1
      %p219 = scmp.eq.s32.totalorder %s28, 1
      %p220 = scmp.ne.s32.totalorder %s215, %s217
      %p221 = scmp.eq.s32.totalorder %s28, 0
      %p222 = por %p220, %p221
      %p223 = scmp.ne.s32.totalorder %s215, %s217
      %p224 = scmp.eq.s32.totalorder %s33, 1
      %p225 = por %p223, %p224
      %p226 = scmp.ne.s32.totalorder %s217, %s218
      %p227 = scmp.eq.s32.totalorder %s33, 0
      %p228 = por %p226, %p227
      %p229 = scmp.ne.s32.totalorder %s217, %s218
      %p230 = scmp.eq.s32.totalorder %s34, 1
      %p231 = por %p229, %p230
      %p233 = scmp.ne.s32.totalorder %s218, %s232
      %p234 = scmp.eq.s32.totalorder %s34, 0
      %p235 = por %p233, %p234
      %s237 = sadd.s32 %s236, 1
      %p240 = scmp.eq.s32.totalorder %s28, 1
      %p241 = scmp.ne.s32.totalorder %s236, %s238
      %p242 = scmp.eq.s32.totalorder %s28, 0
      %p243 = por %p241, %p242
      %p244 = scmp.ne.s32.totalorder %s236, %s238
      %p245 = scmp.eq.s32.totalorder %s33, 1
      %p246 = por %p244, %p245
      %p247 = scmp.ne.s32.totalorder %s238, %s239
      %p248 = scmp.eq.s32.totalorder %s33, 0
      %p249 = por %p247, %p248
      %p250 = scmp.ne.s32.totalorder %s238, %s239
      %p251 = scmp.eq.s32.totalorder %s34, 1
      %p252 = por %p250, %p251
      %p254 = scmp.ne.s32.totalorder %s239, %s253
      %p255 = scmp.eq.s32.totalorder %s34, 0
      %p256 = por %p254, %p255
      %s258 = sadd.s32 %s257, 1
      %p261 = scmp.eq.s32.totalorder %s28, 1
      %p262 = scmp.ne.s32.totalorder %s257, %s259
      %p263 = scmp.eq.s32.totalorder %s28, 0
      %p264 = por %p262, %p263
      %p265 = scmp.ne.s32.totalorder %s257, %s259
      %p266 = scmp.eq.s32.totalorder %s33, 1
      %p267 = por %p265, %p266
      %p268 = scmp.ne.s32.totalorder %s259, %s260
      %p269 = scmp.eq.s32.totalorder %s33, 0
      %p270 = por %p268, %p269
      %p271 = scmp.ne.s32.totalorder %s259, %s260
      %p272 = scmp.eq.s32.totalorder %s34, 1
      %p273 = por %p271, %p272
      %p275 = scmp.ne.s32.totalorder %s260, %s274
      %p276 = scmp.eq.s32.totalorder %s34, 0
      %p277 = por %p275, %p276
      %s279 = sadd.s32 %s278, 1
      %p282 = scmp.eq.s32.totalorder %s28, 1
      %p283 = scmp.ne.s32.totalorder %s278, %s280
      %p284 = scmp.eq.s32.totalorder %s28, 0
      %p285 = por %p283, %p284
      %p286 = scmp.ne.s32.totalorder %s278, %s280
      %p287 = scmp.eq.s32.totalorder %s33, 1
      %p288 = por %p286, %p287
      %p289 = scmp.ne.s32.totalorder %s280, %s281
      %p290 = scmp.eq.s32.totalorder %s33, 0
      %p291 = por %p289, %p290
      %p292 = scmp.ne.s32.totalorder %s280, %s281
      %p293 = scmp.eq.s32.totalorder %s34, 1
      %p294 = por %p292, %p293
      %p296 = scmp.ne.s32.totalorder %s281, %s295
      %p297 = scmp.eq.s32.totalorder %s34, 0
      %p298 = por %p296, %p297
      %s300 = sadd.s32 %s299, 1
      %p303 = scmp.eq.s32.totalorder %s28, 1
      %p304 = scmp.ne.s32.totalorder %s299, %s301
      %p305 = scmp.eq.s32.totalorder %s28, 0
      %p306 = por %p304, %p305
      %p307 = scmp.ne.s32.totalorder %s299, %s301
      %p308 = scmp.eq.s32.totalorder %s33, 1
      %p309 = por %p307, %p308
      %p310 = scmp.ne.s32.totalorder %s301, %s302
      %p311 = scmp.eq.s32.totalorder %s33, 0
      %p312 = por %p310, %p311
      %p313 = scmp.ne.s32.totalorder %s301, %s302
      %p314 = scmp.eq.s32.totalorder %s34, 1
      %p315 = por %p313, %p314
      %p317 = scmp.ne.s32.totalorder %s302, %s316
      %p318 = scmp.eq.s32.totalorder %s34, 0
      %p319 = por %p317, %p318
      %s321 = sadd.s32 %s320, 1
      %p324 = scmp.eq.s32.totalorder %s28, 1
      %p325 = scmp.ne.s32.totalorder %s320, %s322
      %p326 = scmp.eq.s32.totalorder %s28, 0
      %p327 = por %p325, %p326
      %p328 = scmp.ne.s32.totalorder %s320, %s322
      %p329 = scmp.eq.s32.totalorder %s33, 1
      %p330 = por %p328, %p329
      %p331 = scmp.ne.s32.totalorder %s322, %s323
      %p332 = scmp.eq.s32.totalorder %s33, 0
      %p333 = por %p331, %p332
      %p334 = scmp.ne.s32.totalorder %s322, %s323
      %p335 = scmp.eq.s32.totalorder %s34, 1
      %p336 = por %p334, %p335
      %p338 = scmp.ne.s32.totalorder %s323, %s337
      %p339 = scmp.eq.s32.totalorder %s34, 0
      %p340 = por %p338, %p339
      %s342 = sadd.s32 %s341, 1
      %p345 = scmp.eq.s32.totalorder %s28, 1
      %p346 = scmp.ne.s32.totalorder %s341, %s343
      %p347 = scmp.eq.s32.totalorder %s28, 0
      %p348 = por %p346, %p347
      %p349 = scmp.ne.s32.totalorder %s341, %s343
      %p350 = scmp.eq.s32.totalorder %s33, 1
      %p351 = por %p349, %p350
      %p352 = scmp.ne.s32.totalorder %s343, %s344
      %p353 = scmp.eq.s32.totalorder %s33, 0
      %p354 = por %p352, %p353
      %p355 = scmp.ne.s32.totalorder %s343, %s344
      %p356 = scmp.eq.s32.totalorder %s34, 1
      %p357 = por %p355, %p356
      %p359 = scmp.ne.s32.totalorder %s344, %s358
      %p360 = scmp.eq.s32.totalorder %s34, 0
      %p361 = por %p359, %p360
      %s363 = sadd.s32 %s362, 1
      %p366 = scmp.eq.s32.totalorder %s28, 1
      %p367 = scmp.ne.s32.totalorder %s362, %s364
      %p368 = scmp.eq.s32.totalorder %s28, 0
      %p369 = por %p367, %p368
      %p370 = scmp.ne.s32.totalorder %s362, %s364
      %p371 = scmp.eq.s32.totalorder %s33, 1
      %p372 = por %p370, %p371
      %p373 = scmp.ne.s32.totalorder %s364, %s365
      %p374 = scmp.eq.s32.totalorder %s33, 0
      %p375 = por %p373, %p374
      %p376 = scmp.ne.s32.totalorder %s364, %s365
      %p377 = scmp.eq.s32.totalorder %s34, 1
      %p378 = por %p376, %p377
      %p380 = scmp.ne.s32.totalorder %s365, %s379
      %p381 = scmp.eq.s32.totalorder %s34, 0
      %p382 = por %p380, %p381
      %s384 = sadd.s32 %s383, 1
      %p387 = scmp.eq.s32.totalorder %s28, 1
      %p388 = scmp.ne.s32.totalorder %s383, %s385
      %p389 = scmp.eq.s32.totalorder %s28, 0
      %p390 = por %p388, %p389
      %p391 = scmp.ne.s32.totalorder %s383, %s385
      %p392 = scmp.eq.s32.totalorder %s33, 1
      %p393 = por %p391, %p392
      %p394 = scmp.ne.s32.totalorder %s385, %s386
      %p395 = scmp.eq.s32.totalorder %s33, 0
      %p396 = por %p394, %p395
      %p397 = scmp.ne.s32.totalorder %s385, %s386
      %p398 = scmp.eq.s32.totalorder %s34, 1
      %p399 = por %p397, %p398
      %p401 = scmp.ne.s32.totalorder %s386, %s400
      %p402 = scmp.eq.s32.totalorder %s34, 0
      %p403 = por %p401, %p402
      %s405 = sadd.s32 %s404, 1
      %p408 = scmp.eq.s32.totalorder %s28, 1
      %p409 = scmp.ne.s32.totalorder %s404, %s406
      %p410 = scmp.eq.s32.totalorder %s28, 0
      %p411 = por %p409, %p410
      %p412 = scmp.ne.s32.totalorder %s404, %s406
      %p413 = scmp.eq.s32.totalorder %s33, 1
      %p414 = por %p412, %p413
      %p415 = scmp.ne.s32.totalorder %s406, %s407
      %p416 = scmp.eq.s32.totalorder %s33, 0
      %p417 = por %p415, %p416
      %p418 = scmp.ne.s32.totalorder %s406, %s407
      %p419 = scmp.eq.s32.totalorder %s34, 1
      %p420 = por %p418, %p419
      %p422 = scmp.ne.s32.totalorder %s407, %s421
      %p423 = scmp.eq.s32.totalorder %s34, 0
      %p424 = por %p422, %p423
      %s426 = sadd.s32 %s425, 1
      %p429 = scmp.eq.s32.totalorder %s28, 1
      %p430 = scmp.ne.s32.totalorder %s425, %s427
      %p431 = scmp.eq.s32.totalorder %s28, 0
      %p432 = por %p430, %p431
      %p433 = scmp.ne.s32.totalorder %s425, %s427
      %p434 = scmp.eq.s32.totalorder %s33, 1
      %p435 = por %p433, %p434
      %p436 = scmp.ne.s32.totalorder %s427, %s428
      %p437 = scmp.eq.s32.totalorder %s33, 0
      %p438 = por %p436, %p437
      %p439 = scmp.ne.s32.totalorder %s427, %s428
      %p440 = scmp.eq.s32.totalorder %s34, 1
      %p441 = por %p439, %p440
      %p443 = scmp.ne.s32.totalorder %s428, %s442
      %p444 = scmp.eq.s32.totalorder %s34, 0
      %p445 = por %p443, %p444
      %s447 = sadd.s32 %s446, 1
      %p450 = scmp.eq.s32.totalorder %s28, 1
      %p451 = scmp.ne.s32.totalorder %s446, %s448
      %p452 = scmp.eq.s32.totalorder %s28, 0
      %p453 = por %p451, %p452
      %p454 = scmp.ne.s32.totalorder %s446, %s448
      %p455 = scmp.eq.s32.totalorder %s33, 1
      %p456 = por %p454, %p455
      %p457 = scmp.ne.s32.totalorder %s448, %s449
      %p458 = scmp.eq.s32.totalorder %s33, 0
      %p459 = por %p457, %p458
      %p460 = scmp.ne.s32.totalorder %s448, %s449
      %p461 = scmp.eq.s32.totalorder %s34, 1
      %p462 = por %p460, %p461
      %p464 = scmp.ne.s32.totalorder %s449, %s463
      %p465 = scmp.eq.s32.totalorder %s34, 0
      %p466 = por %p464, %p465
      %s468 = sadd.s32 %s467, 1
      %p471 = scmp.eq.s32.totalorder %s28, 1
      %p472 = scmp.ne.s32.totalorder %s467, %s469
      %p473 = scmp.eq.s32.totalorder %s28, 0
      %p474 = por %p472, %p473
      %p475 = scmp.ne.s32.totalorder %s467, %s469
      %p476 = scmp.eq.s32.totalorder %s33, 1
      %p477 = por %p475, %p476
      %p478 = scmp.ne.s32.totalorder %s469, %s470
      %p479 = scmp.eq.s32.totalorder %s33, 0
      %p480 = por %p478, %p479
      %p481 = scmp.ne.s32.totalorder %s469, %s470
      %p482 = scmp.eq.s32.totalorder %s34, 1
      %p483 = por %p481, %p482
      %p485 = scmp.ne.s32.totalorder %s470, %s484
      %p486 = scmp.eq.s32.totalorder %s34, 0
      %p487 = por %p485, %p486
      %s489 = sadd.s32 %s488, 1
      %p492 = scmp.eq.s32.totalorder %s28, 1
      %p493 = scmp.ne.s32.totalorder %s488, %s490
      %p494 = scmp.eq.s32.totalorder %s28, 0
      %p495 = por %p493, %p494
      %p496 = scmp.ne.s32.totalorder %s488, %s490
      %p497 = scmp.eq.s32.totalorder %s33, 1
      %p498 = por %p496, %p497
      %p499 = scmp.ne.s32.totalorder %s490, %s491
      %p500 = scmp.eq.s32.totalorder %s33, 0
      %p501 = por %p499, %p500
      %p502 = scmp.ne.s32.totalorder %s490, %s491
      %p503 = scmp.eq.s32.totalorder %s34, 1
      %p504 = por %p502, %p503
      %p506 = scmp.ne.s32.totalorder %s491, %s505
      %p507 = scmp.eq.s32.totalorder %s34, 0
      %p508 = por %p506, %p507
      %s509 = ssub.s32 %s35, %s47
      %s510 = ssub.s32 %s36, %s43
      %s511 = sor.u32 %s509, %s510
      %p512 = scmp.eq.s32.totalorder %s511, 0
      %s514 = sadd.s32 %s513, 1
      %s515 = scalar_select %p512, %s513, %s514
      %p518 = pneg %p512
      %p519 = scmp.eq.s32.totalorder %s28, 1
      %p520 = por %p518, %p519
      %p521 = scmp.ne.s32.totalorder %s513, %s516
      %p522 = scmp.eq.s32.totalorder %s28, 0
      %p523 = por %p521, %p522
      %p524 = scmp.ne.s32.totalorder %s513, %s516
      %p525 = scmp.eq.s32.totalorder %s33, 1
      %p526 = por %p524, %p525
      %p527 = scmp.ne.s32.totalorder %s516, %s517
      %p528 = scmp.eq.s32.totalorder %s33, 0
      %p529 = por %p527, %p528
      %p530 = scmp.ne.s32.totalorder %s516, %s517
      %p531 = scmp.eq.s32.totalorder %s34, 1
      %p532 = por %p530, %p531
      %p534 = scmp.ne.s32.totalorder %s517, %s533
      %p535 = scmp.eq.s32.totalorder %s34, 0
      %p536 = por %p534, %p535
      %p537 = scmp.le.s32.totalorder 1, %s28
      %p538 = scmp.lt.s32.totalorder %s28, 3
      %p539 = pnand %p537, %p538
      %p540 = pneg %p539
      // Predicated region
      $region9: #{decoder_forward.2} parent=5 // pred_check
        _
      $region10: #{decoder_forward.2} parent=5 // pred_check_branch
        %542 = sbr.rel (%p539) target = $region12
      $region11: #{decoder_forward.2} parent=5 // pred_region
        %s543 = ssub.s32 %s28, 1
        // Predicated region
        $region13: #{decoder_forward.2} parent=11 // pred_check
          %p544 = pneg %p165
        $region14: #{decoder_forward.2} parent=11 // pred_check_branch
          %546 = sbr.rel (%p544) target = $region16
        $region15: #{decoder_forward.2} parent=11 // pred_region
          _
        $region16: #{decoder_forward.2} parent=11 // pred_fallthru
          _
        // Predicated region
        $region17: #{decoder_forward.2} parent=11 // pred_check
          %p547 = pneg %p186
        $region18: #{decoder_forward.2} parent=11 // pred_check_branch
          %549 = sbr.rel (%p547) target = $region20
        $region19: #{decoder_forward.2} parent=11 // pred_region
          _
        $region20: #{decoder_forward.2} parent=11 // pred_fallthru
          _
        // Predicated region
        $region21: #{decoder_forward.2} parent=11 // pred_check
          %p550 = pneg %p207
        $region22: #{decoder_forward.2} parent=11 // pred_check_branch
          %552 = sbr.rel (%p550) target = $region24
        $region23: #{decoder_forward.2} parent=11 // pred_region
          _
        $region24: #{decoder_forward.2} parent=11 // pred_fallthru
          _
        // Predicated region
        $region25: #{decoder_forward.2} parent=11 // pred_check
          %p553 = pneg %p228
        $region26: #{decoder_forward.2} parent=11 // pred_check_branch
          %555 = sbr.rel (%p553) target = $region28
        $region27: #{decoder_forward.2} parent=11 // pred_region
          _
        $region28: #{decoder_forward.2} parent=11 // pred_fallthru
          _
        // Predicated region
        $region29: #{decoder_forward.2} parent=11 // pred_check
          %p556 = pneg %p249
        $region30: #{decoder_forward.2} parent=11 // pred_check_branch
          %558 = sbr.rel (%p556) target = $region32
        $region31: #{decoder_forward.2} parent=11 // pred_region
          _
        $region32: #{decoder_forward.2} parent=11 // pred_fallthru
          _
        // Predicated region
        $region33: #{decoder_forward.2} parent=11 // pred_check
          %p559 = pneg %p270
        $region34: #{decoder_forward.2} parent=11 // pred_check_branch
          %561 = sbr.rel (%p559) target = $region36
        $region35: #{decoder_forward.2} parent=11 // pred_region
          _
        $region36: #{decoder_forward.2} parent=11 // pred_fallthru
          _
        // Predicated region
        $region37: #{decoder_forward.2} parent=11 // pred_check
          %p562 = pneg %p291
        $region38: #{decoder_forward.2} parent=11 // pred_check_branch
          %564 = sbr.rel (%p562) target = $region40
        $region39: #{decoder_forward.2} parent=11 // pred_region
          _
        $region40: #{decoder_forward.2} parent=11 // pred_fallthru
          _
        // Predicated region
        $region41: #{decoder_forward.2} parent=11 // pred_check
          %p565 = pneg %p312
        $region42: #{decoder_forward.2} parent=11 // pred_check_branch
          %567 = sbr.rel (%p565) target = $region44
        $region43: #{decoder_forward.2} parent=11 // pred_region
          %569 = vsyncadd [#allocation4], 0
          %s570 = sshll.u32 %s11, 4
          %s571 = int_to_ptr.hbm [resolvable:$true] %s570
          %s572 = sshll.u32 [#allocation3], 4
          %s573 = int_to_ptr.vmem [resolvable:$true] %s572
          %578 = dma.hbm_to_vmem [thread:$0]  %s571, 1024, %s573, [#allocation4], 64, 64, 4
        $region44: #{decoder_forward.2} parent=11 // pred_fallthru
          _
        // Predicated region
        $region45: #{decoder_forward.2} parent=11 // pred_check
          %p579 = pneg %p333
        $region46: #{decoder_forward.2} parent=11 // pred_check_branch
          %581 = sbr.rel (%p579) target = $region48
        $region47: #{decoder_forward.2} parent=11 // pred_region
          _
        $region48: #{decoder_forward.2} parent=11 // pred_fallthru
          _
        // Predicated region
        $region49: #{decoder_forward.2} parent=11 // pred_check
          %p582 = pneg %p354
        $region50: #{decoder_forward.2} parent=11 // pred_check_branch
          %584 = sbr.rel (%p582) target = $region52
        $region51: #{decoder_forward.2} parent=11 // pred_region
          _
        $region52: #{decoder_forward.2} parent=11 // pred_fallthru
          _
        // Predicated region
        $region53: #{decoder_forward.2} parent=11 // pred_check
          %p585 = pneg %p375
        $region54: #{decoder_forward.2} parent=11 // pred_check_branch
          %587 = sbr.rel (%p585) target = $region56
        $region55: #{decoder_forward.2} parent=11 // pred_region
          _
        $region56: #{decoder_forward.2} parent=11 // pred_fallthru
          _
        // Predicated region
        $region57: #{decoder_forward.2} parent=11 // pred_check
          %p588 = pneg %p396
        $region58: #{decoder_forward.2} parent=11 // pred_check_branch
          %590 = sbr.rel (%p588) target = $region60
        $region59: #{decoder_forward.2} parent=11 // pred_region
          _
        $region60: #{decoder_forward.2} parent=11 // pred_fallthru
          _
        // Predicated region
        $region61: #{decoder_forward.2} parent=11 // pred_check
          %p591 = pneg %p417
        $region62: #{decoder_forward.2} parent=11 // pred_check_branch
          %593 = sbr.rel (%p591) target = $region64
        $region63: #{decoder_forward.2} parent=11 // pred_region
          _
        $region64: #{decoder_forward.2} parent=11 // pred_fallthru
          _
        // Predicated region
        $region65: #{decoder_forward.2} parent=11 // pred_check
          %p594 = pneg %p438
        $region66: #{decoder_forward.2} parent=11 // pred_check_branch
          %596 = sbr.rel (%p594) target = $region68
        $region67: #{decoder_forward.2} parent=11 // pred_region
          _
        $region68: #{decoder_forward.2} parent=11 // pred_fallthru
          _
        // Predicated region
        $region69: #{decoder_forward.2} parent=11 // pred_check
          %p597 = pneg %p459
        $region70: #{decoder_forward.2} parent=11 // pred_check_branch
          %599 = sbr.rel (%p597) target = $region72
        $region71: #{decoder_forward.2} parent=11 // pred_region
          _
        $region72: #{decoder_forward.2} parent=11 // pred_fallthru
          _
        // Predicated region
        $region73: #{decoder_forward.2} parent=11 // pred_check
          %p600 = pneg %p480
        $region74: #{decoder_forward.2} parent=11 // pred_check_branch
          %602 = sbr.rel (%p600) target = $region76
        $region75: #{decoder_forward.2} parent=11 // pred_region
          _
        $region76: #{decoder_forward.2} parent=11 // pred_fallthru
          _
        // Predicated region
        $region77: #{decoder_forward.2} parent=11 // pred_check
          %p603 = pneg %p501
        $region78: #{decoder_forward.2} parent=11 // pred_check_branch
          %605 = sbr.rel (%p603) target = $region80
        $region79: #{decoder_forward.2} parent=11 // pred_region
          _
        $region80: #{decoder_forward.2} parent=11 // pred_fallthru
          _
      $region12: #{decoder_forward.2} parent=5 // pred_fallthru
        _
      %p606 = scmp.lt.s32.totalorder %s28, 2
      // Predicated region
      $region81: #{decoder_forward.2} parent=5 // pred_check
        %p607 = pneg %p606
      $region82: #{decoder_forward.2} parent=5 // pred_check_branch
        %609 = sbr.rel (%p607) target = $region84
      $region83: #{decoder_forward.2} parent=5 // pred_region
        // Predicated region
        $region85: #{decoder_forward.2} parent=83 // pred_check
          %p610 = pneg %p60
        $region86: #{decoder_forward.2} parent=83 // pred_check_branch
          %612 = sbr.rel (%p610) target = $region88
        $region87: #{decoder_forward.2} parent=83 // pred_region
          %p613 = scmp.lt.s32.totalorder %s35, 1
          %s614 = scalar_select %p613, %s35, 1
          %s615 = smul.addr %s614, 2
          %s616 = smul.addr %s615, 4
          %s617 = scalar_lea.vmem %s0, %s616
        $region88: #{decoder_forward.2} parent=83 // pred_fallthru
          _
        // Predicated region
        $region89: #{decoder_forward.2} parent=83 // pred_check
          %p618 = pneg %p86
        $region90: #{decoder_forward.2} parent=83 // pred_check_branch
          %620 = sbr.rel (%p618) target = $region92
        $region91: #{decoder_forward.2} parent=83 // pred_region
          %p621 = scmp.lt.s32.totalorder %s35, 1
          %s622 = scalar_select %p621, %s35, 1
          %s623 = smul.addr %s622, 2
          %s624 = smul.addr %s623, 4
          %s625 = scalar_lea.vmem %s1, %s624
        $region92: #{decoder_forward.2} parent=83 // pred_fallthru
          _
        // Predicated region
        $region93: #{decoder_forward.2} parent=83 // pred_check
          %p626 = pneg %p112
        $region94: #{decoder_forward.2} parent=83 // pred_check_branch
          %628 = sbr.rel (%p626) target = $region96
        $region95: #{decoder_forward.2} parent=83 // pred_region
          %p629 = scmp.lt.s32.totalorder %s35, 1
          %s630 = scalar_select %p629, %s35, 1
          %s631 = scalar_lea.vmem %s2, %s630
        $region96: #{decoder_forward.2} parent=83 // pred_fallthru
          _
        // Predicated region
        $region97: #{decoder_forward.2} parent=83 // pred_check
          %p632 = pneg %p138
        $region98: #{decoder_forward.2} parent=83 // pred_check_branch
          %634 = sbr.rel (%p632) target = $region100
        $region99: #{decoder_forward.2} parent=83 // pred_region
          %p635 = scmp.lt.s32.totalorder %s35, 1
          %s636 = scalar_select %p635, %s35, 1
          %s637 = scalar_lea.vmem %s3, %s636
        $region100: #{decoder_forward.2} parent=83 // pred_fallthru
          _
      $region84: #{decoder_forward.2} parent=5 // pred_fallthru
        _
      %p638 = scmp.le.s32.totalorder 1, %s28
      %p639 = scmp.lt.s32.totalorder %s28, 3
      %p640 = pnand %p638, %p639
      %p641 = pneg %p640
      // Predicated region
      $region101: #{decoder_forward.2} parent=5 // pred_check
        _
      $region102: #{decoder_forward.2} parent=5 // pred_check_branch
        %643 = sbr.rel (%p640) target = $region104
      $region103: #{decoder_forward.2} parent=5 // pred_region
        %s644 = ssub.s32 %s28, 1
        // Predicated region
        $region105: #{decoder_forward.2} parent=103 // pred_check
          %p645 = pneg %p312
        $region106: #{decoder_forward.2} parent=103 // pred_check_branch
          %647 = sbr.rel (%p645) target = $region108
        $region107: #{decoder_forward.2} parent=103 // pred_region
          %649 = dma.done [#allocation4], 1024
        $region108: #{decoder_forward.2} parent=103 // pred_fallthru
          _
        %p650 = scmp.lt.s32.totalorder %s37, 1
        %s651 = scalar_select %p650, %s37, 1
        %s652 = smul.addr %s651, 2
        %s653 = smul.addr %s652, 4
        %s654 = scalar_lea.vmem %s0, %s653
        %p655 = pneg %p66
        %p656 = pneg %p63
        %p657 = scmp.lt.s32.totalorder %s37, 1
        %s658 = scalar_select %p657, %s37, 1
        %s659 = smul.addr %s658, 2
        %s660 = smul.addr %s659, 4
        %s661 = scalar_lea.vmem %s1, %s660
        %p662 = pneg %p92
        %p663 = pneg %p89
        %p664 = scmp.lt.s32.totalorder %s37, 1
        %s665 = scalar_select %p664, %s37, 1
        %s666 = scalar_lea.vmem %s2, %s665
        %p667 = pneg %p118
        %p668 = pneg %p115
        %p669 = scmp.lt.s32.totalorder %s37, 1
        %s670 = scalar_select %p669, %s37, 1
        %s671 = scalar_lea.vmem %s3, %s670
        %p672 = pneg %p144
        %p673 = pneg %p141
        %p674 = pneg %p165
        %p675 = pneg %p162
        %p676 = pneg %p186
        %p677 = pneg %p183
        %p678 = pneg %p207
        %p679 = pneg %p204
        %p680 = pneg %p228
        %p681 = pneg %p225
        %p682 = pneg %p249
        %p683 = pneg %p246
        %p684 = pneg %p270
        %p685 = pneg %p267
        %p686 = pneg %p291
        %p687 = pneg %p288
        %p688 = pneg %p312
        %p689 = pneg %p309
        %p690 = pneg %p333
        %p691 = pneg %p330
        %p692 = pneg %p354
        %p693 = pneg %p351
        %p694 = pneg %p375
        %p695 = pneg %p372
        %p696 = pneg %p396
        %p697 = pneg %p393
        %p698 = pneg %p417
        %p699 = pneg %p414
        %p700 = pneg %p438
        %p701 = pneg %p435
        %p702 = pneg %p459
        %p703 = pneg %p456
        %p704 = pneg %p480
        %p705 = pneg %p477
        %p706 = pneg %p501
        %p707 = pneg %p498
        %p708 = pneg %p529
        %p709 = pneg %p526
        %s710 = smul.u32 2, %s38
        %p711 = scmp.lt.s32.totalorder %s37, 1
        %s712 = scalar_select %p711, %s37, 1
        %p713 = scmp.lt.s32.totalorder %s710, 1
        %s714 = scalar_select %p713, %s710, 1
        %s715 = smul.addr %s712, 2
        %s716 = sadd.s32 %s714, %s715
        %s717 = smul.addr %s716, 4
        %s718 = scalar_lea.vmem %s21, %s717
        %p719 = scmp.lt.s32.totalorder %s37, 1
        %s720 = scalar_select %p719, %s37, 1
        %s721 = smul.addr %s720, 2
        %s722 = smul.addr %s721, 4
        %s723 = scalar_lea.vmem %s0, %s722
        %p724 = scmp.lt.s32.totalorder %s37, 1
        %s725 = scalar_select %p724, %s37, 1
        %s726 = smul.addr %s725, 2
        %s727 = smul.addr %s726, 4
        %s728 = scalar_lea.vmem %s1, %s727
        %p729 = scmp.lt.s32.totalorder %s37, 1
        %s730 = scalar_select %p729, %s37, 1
        %s731 = scalar_lea.vmem %s2, %s730
        %p732 = scmp.lt.s32.totalorder %s37, 1
        %s733 = scalar_select %p732, %s37, 1
        %s734 = scalar_lea.vmem %s3, %s733
        %s735 = smul.u32 2, %s38
        %p736 = scmp.lt.s32.totalorder %s37, 1
        %s737 = scalar_select %p736, %s37, 1
        %p738 = scmp.lt.s32.totalorder %s735, 1
        %s739 = scalar_select %p738, %s735, 1
        %s740 = smul.addr %s737, 2
        %s741 = sadd.s32 %s739, %s740
        %s742 = smul.addr %s741, 4
        %s743 = scalar_lea.vmem %s21, %s742
        %s744 = smul.u32 2, %s38
        %v746 = vld [vmem:[%s723] sm:$0xf]
        %v747 = vld [vmem:[%s723 + $0x4] sm:$0xf]
        %v748 = vlaneseq
        %v749 = vshrl.u32 %v748, 7
        %v750 = vadd.s32 %v749, 8
        %v751 = vlaneseq
        %v752 = vand.u32 %v751, 127
        %v753 = vld [vmem:[%s731] sm:$0x1]
        %vm754 = vcmp.gt.s32.totalorder %v752, %v749
        %vm755 = vcmp.gt.s32.totalorder %v752, %v750
        %v756 = vsel %vm754, -1e+09, 0.0
        %v757 = vsel %vm755, -1e+09, 0.0
        %v759 = vperm.slane %v753, 0
        %v761 = vadd.f32 %v759, %v756
        %v762 = vadd.f32 %v759, %v757
        %v763 = vld [vmem:[%s4] sm:$0xff]
        %v764 = vld [vmem:[%s4 + $0x8] sm:$0xf]
        %v765 = vld [vmem:[%s4 + $0xc] sm:$0xff]
        %v766 = vld [vmem:[%s4 + $0x14] sm:$0xf]
        %v767 = vld [vmem:[%s4 + $0x18] sm:$0xff]
        %v768 = vld [vmem:[%s4 + $0x20] sm:$0xf]
        %v769 = vld [vmem:[%s4 + $0x24] sm:$0xff]
        %v770 = vld [vmem:[%s4 + $0x2c] sm:$0xf]
        %v771 = vld [vmem:[%s4 + $0x30] sm:$0xff]
        %v772 = vld [vmem:[%s4 + $0x38] sm:$0xf]
        %v773 = vld [vmem:[%s4 + $0x3c] sm:$0xff]
        %v774 = vld [vmem:[%s4 + $0x44] sm:$0xf]
        %v775 = vld [vmem:[%s4 + $0x48] sm:$0xff]
        %v776 = vld [vmem:[%s4 + $0x50] sm:$0xf]
        %v777 = vld [vmem:[%s4 + $0x54] sm:$0xff]
        %v778 = vld [vmem:[%s4 + $0x5c] sm:$0xf]
        %v779 = vld [vmem:[%s4 + $0x60] sm:$0xff]
        %v780 = vld [vmem:[%s4 + $0x68] sm:$0xf]
        %v781 = vld [vmem:[%s4 + $0x6c] sm:$0xff]
        %v782 = vld [vmem:[%s4 + $0x74] sm:$0xf]
        %v783 = vld [vmem:[%s4 + $0x78] sm:$0xff]
        %v784 = vld [vmem:[%s4 + $0x80] sm:$0xf]
        %v785 = vld [vmem:[%s4 + $0x84] sm:$0xff]
        %v786 = vld [vmem:[%s4 + $0x8c] sm:$0xf]
        %v787 = vld [vmem:[%s4 + $0x90] sm:$0xff]
        %v788 = vld [vmem:[%s4 + $0x98] sm:$0xf]
        %v789 = vld [vmem:[%s4 + $0x9c] sm:$0xff]
        %v790 = vld [vmem:[%s4 + $0xa4] sm:$0xf]
        %v791 = vld [vmem:[%s4 + $0xa8] sm:$0xff]
        %v792 = vld [vmem:[%s4 + $0xb0] sm:$0xf]
        %v793 = vld [vmem:[%s4 + $0xb4] sm:$0xff]
        %v794 = vld [vmem:[%s4 + $0xbc] sm:$0xf]
        %v797 = vunpack.c.l.b16 %v746
        %v798 = vunpack.c.l.b16 %v747
        %v799 = vpack.c.b16 %v798, %v797
        %v833 = vunpack.c.l.b16 %v763
        %v834 = vunpack.c.h.b16 %v763
        %v835 = vunpack.c.l.b16 %v764
        %v836 = vunpack.c.l.b16 %v765
        %v837 = vunpack.c.h.b16 %v765
        %v838 = vunpack.c.l.b16 %v766
        %v839 = vunpack.c.l.b16 %v767
        %v840 = vunpack.c.h.b16 %v767
        %v841 = vunpack.c.l.b16 %v768
        %v842 = vunpack.c.l.b16 %v769
        %v843 = vunpack.c.h.b16 %v769
        %v844 = vunpack.c.l.b16 %v770
        %v845 = vunpack.c.l.b16 %v771
        %v846 = vunpack.c.h.b16 %v771
        %v847 = vunpack.c.l.b16 %v772
        %v848 = vunpack.c.l.b16 %v773
        %v849 = vunpack.c.h.b16 %v773
        %v850 = vunpack.c.l.b16 %v774
        %v851 = vunpack.c.l.b16 %v775
        %v852 = vunpack.c.h.b16 %v775
        %v853 = vunpack.c.l.b16 %v776
        %v854 = vunpack.c.l.b16 %v777
        %v855 = vunpack.c.h.b16 %v777
        %v856 = vunpack.c.l.b16 %v778
        %v857 = vunpack.c.l.b16 %v779
        %v858 = vunpack.c.h.b16 %v779
        %v859 = vunpack.c.l.b16 %v780
        %v860 = vunpack.c.l.b16 %v781
        %v861 = vunpack.c.h.b16 %v781
        %v862 = vunpack.c.l.b16 %v782
        %v863 = vunpack.c.l.b16 %v783
        %v864 = vunpack.c.h.b16 %v783
        %v865 = vunpack.c.l.b16 %v784
        %v866 = vunpack.c.l.b16 %v785
        %v867 = vunpack.c.h.b16 %v785
        %v868 = vunpack.c.l.b16 %v786
        %v869 = vunpack.c.l.b16 %v787
        %v870 = vunpack.c.h.b16 %v787
        %v871 = vunpack.c.l.b16 %v788
        %v872 = vunpack.c.l.b16 %v789
        %v873 = vunpack.c.h.b16 %v789
        %v874 = vunpack.c.l.b16 %v790
        %v875 = vunpack.c.l.b16 %v791
        %v876 = vunpack.c.h.b16 %v791
        %v877 = vunpack.c.l.b16 %v792
        %v878 = vunpack.c.l.b16 %v793
        %v879 = vunpack.c.h.b16 %v793
        %v880 = vunpack.c.l.b16 %v794
        %v881 = vpack.c.b16 %v836, %v833
        %v882 = vpack.c.b16 %v837, %v834
        %v883 = vpack.c.b16 %v838, %v835
        %v884 = vpack.c.b16 %v842, %v839
        %v885 = vpack.c.b16 %v843, %v840
        %v886 = vpack.c.b16 %v844, %v841
        %v887 = vpack.c.b16 %v848, %v845
        %v888 = vpack.c.b16 %v849, %v846
        %v889 = vpack.c.b16 %v850, %v847
        %v890 = vpack.c.b16 %v854, %v851
        %v891 = vpack.c.b16 %v855, %v852
        %v892 = vpack.c.b16 %v856, %v853
        %v893 = vpack.c.b16 %v860, %v857
        %v894 = vpack.c.b16 %v861, %v858
        %v895 = vpack.c.b16 %v862, %v859
        %v896 = vpack.c.b16 %v866, %v863
        %v897 = vpack.c.b16 %v867, %v864
        %v898 = vpack.c.b16 %v868, %v865
        %v899 = vpack.c.b16 %v872, %v869
        %v900 = vpack.c.b16 %v873, %v870
        %v901 = vpack.c.b16 %v874, %v871
        %v902 = vpack.c.b16 %v878, %v875
        %v903 = vpack.c.b16 %v879, %v876
        %v904 = vpack.c.b16 %v880, %v877
        %929 = vmatpush.bf16.msra.mxu0 %v902
        %930 = vmatpush.bf16.msra.mxu0 %v899
        %931 = vmatpush.bf16.msra.mxu0 %v896
        %932 = vmatpush.bf16.msra.mxu0 %v893
        %933 = vmatpush.bf16.msra.mxu0 %v890
        %934 = vmatpush.bf16.msra.mxu0 %v887
        %935 = vmatpush.bf16.msra.mxu0 %v884
        %936 = vmatpush.bf16.msra.mxu0 %v881
        %937 = vmatmul.bf16.gmra.mxu0 %v799
        %v938 = vpop.f32.mrf.mxu0
        %v939 = vadd.f32 0.0, %v938
        %v940 = vpop.f32.mrf.mxu0
        %v941 = vadd.f32 0.0, %v940
        %942 = vdwg.mxu0
        %943 = vmatpush.bf16.msra.mxu0 %v903
        %944 = vmatpush.bf16.msra.mxu0 %v900
        %945 = vmatpush.bf16.msra.mxu0 %v897
        %946 = vmatpush.bf16.msra.mxu0 %v894
        %947 = vmatpush.bf16.msra.mxu0 %v891
        %948 = vmatpush.bf16.msra.mxu0 %v888
        %949 = vmatpush.bf16.msra.mxu0 %v885
        %950 = vmatpush.bf16.msra.mxu0 %v882
        %951 = vmatmul.bf16.gmra.mxu0 %v799
        %v952 = vpop.f32.mrf.mxu0
        %v953 = vadd.f32 0.0, %v952
        %v954 = vpop.f32.mrf.mxu0
        %v955 = vadd.f32 0.0, %v954
        %956 = vdwg.mxu0
        %957 = vmatpush.bf16.msra.mxu0 %v904
        %958 = vmatpush.bf16.msra.mxu0 %v901
        %959 = vmatpush.bf16.msra.mxu0 %v898
        %960 = vmatpush.bf16.msra.mxu0 %v895
        %961 = vmatpush.bf16.msra.mxu0 %v892
        %962 = vmatpush.bf16.msra.mxu0 %v889
        %963 = vmatpush.bf16.msra.mxu0 %v886
        %964 = vmatpush.bf16.msra.mxu0 %v883
        %965 = vmatmul.bf16.gmra.mxu0 %v799
        %v966 = vpop.f32.mrf.mxu0
        %v967 = vadd.f32 0.0, %v966
        %v968 = vpop.f32.mrf.mxu0
        %v969 = vadd.f32 0.0, %v968
        %970 = vdwg.mxu0
        %v971 = vmul.f32 %v939, 0.088388346
        %v972 = vmul.f32 %v941, 0.088388346
        %v973 = vpack.c.bf16 %v953, %v953
        %v974 = vpack.c.bf16 %v955, %v955
        %v975 = vpack.c.bf16 %v967, %v967
        %v976 = vpack.c.bf16 %v969, %v969
        %v977 = vpack.c.bf16 %v971, %v971
        %v978 = vpack.c.bf16 %v972, %v972
        %v981 = vunpack.c.l.b16 %v977
        %v982 = vunpack.c.l.b16 %v978
        %v983 = vpack.c.b16 %v982, %v981
        %v986 = vunpack.c.l.b16 %v973
        %v987 = vunpack.c.l.b16 %v974
        %v988 = vpack.c.b16 %v987, %v986
        %vm989 = vcmask 523264
        %v991 = vsel %vm989, %v983, 0
        %v994 = vsel %vm989, %v988, 0
        %996 = vmatpush.bf16.xpose.msra.mxu0 0
        %997 = vmatpush.bf16.xpose.msra.mxu0 0
        %998 = vmatpush.bf16.xpose.msra.mxu0 0
        %999 = vmatpush.bf16.xpose.msra.mxu0 0
        %1000 = vmatpush.bf16.xpose.msra.mxu0 0
        %1001 = vmatpush.bf16.xpose.msra.mxu0 0
        %1002 = vmatpush.bf16.xpose.msra.mxu0 0
        %1003 = vmatpush.bf16.xpose.msra.mxu0 %v994
        %1004 = vmatmul.bf16.gmra.mxu0 %v991
        %v1005 = vpop.f32.mrf.mxu0
        %v1006 = vadd.f32 %v761, %v1005
        %v1007 = vpop.f32.mrf.mxu0
        %v1008 = vadd.f32 %v762, %v1007
        %1009 = vdwg.mxu0
        %vm1010 = vcmask 130048
        %v1011 = vsel %vm1010, %v1006, -inf
        %1012 = vmax.xlane.f32.xlu0 %v1011
        %v1013 = vpop.xlane.xlu0 %1012
        %v1014 = vsel %vm1010, %v1008, -inf
        %1015 = vmax.xlane.f32.xlu0 %v1014
        %v1016 = vpop.xlane.xlu0 %1015
        %v1017 = vsub.f32 %v1006, %v1013
        %v1018 = vsub.f32 %v1008, %v1016
        %v1019 = vmul.f32 %v1017, 1.442695
        %v1020 = vpow.pop %v1019
        %v1021 = vmul.f32 %v1018, 1.442695
        %v1022 = vpow.pop %v1021
        %v1023 = vsel %vm1010, %v1020, 0.0
        %1024 = vadd.xlane.f32.xlu0 %v1023
        %v1025 = vpop.xlane.xlu0 %1024
        %v1026 = vsel %vm1010, %v1022, 0.0
        %1027 = vadd.xlane.f32.xlu0 %v1026
        %v1028 = vpop.xlane.xlu0 %1027
        %v1029 = vrcp.pop %v1025
        %v1030 = vrcp.pop %v1028
        %v1031 = vmul.f32 %v1020, %v1029
        %v1032 = vmul.f32 %v1022, %v1030
        %v1033 = vpack.c.bf16 %v1032, %v1031
        %v1036 = vunpack.c.l.b16 %v975
        %v1037 = vunpack.c.l.b16 %v976
        %v1038 = vpack.c.b16 %v1037, %v1036
        %v1041 = vsel %vm1010, %v1033, 0
        %1043 = vmatpush.bf16.msra.mxu0 0
        %1044 = vmatpush.bf16.msra.mxu0 0
        %1045 = vmatpush.bf16.msra.mxu0 0
        %1046 = vmatpush.bf16.msra.mxu0 0
        %1047 = vmatpush.bf16.msra.mxu0 0
        %1048 = vmatpush.bf16.msra.mxu0 0
        %1049 = vmatpush.bf16.msra.mxu0 0
        %1050 = vmatpush.bf16.msra.mxu0 %v1038
        %1051 = vmatmul.bf16.gmra.mxu0 %v1041
        %v1052 = vpop.f32.mrf.mxu0
        %v1053 = vadd.f32 0.0, %v1052
        %v1054 = vpop.f32.mrf.mxu0
        %v1055 = vadd.f32 0.0, %v1054
        %1056 = vdwg.mxu0
        %v1057 = vpack.c.bf16 %v1053, %v1053
        %v1058 = vpack.c.bf16 %v1055, %v1055
        %vm1059 = vcmask 519168
        %1060 = vst.msk [vmem:[#allocation2] sm:$0xf] %vm1059, %v1057
        %1061 = vst.msk [vmem:[#allocation2 + $0x4] sm:$0xf] %vm1059, %v1058
        %1062 = vrot.lane.b32.xlu0 %v983, 64
        %v1063 = vpop.permute.xlu0 %1062
        %1064 = vrot.lane.b32.xlu0 %v988, 64
        %v1065 = vpop.permute.xlu0 %1064
        %v1067 = vsel %vm989, %v1063, 0
        %v1070 = vsel %vm989, %v1065, 0
        %1072 = vmatpush.bf16.xpose.msra.mxu0 0
        %1073 = vmatpush.bf16.xpose.msra.mxu0 0
        %1074 = vmatpush.bf16.xpose.msra.mxu0 0
        %1075 = vmatpush.bf16.xpose.msra.mxu0 0
        %1076 = vmatpush.bf16.xpose.msra.mxu0 0
        %1077 = vmatpush.bf16.xpose.msra.mxu0 0
        %1078 = vmatpush.bf16.xpose.msra.mxu0 0
        %1079 = vmatpush.bf16.xpose.msra.mxu0 %v1070
        %1080 = vmatmul.bf16.gmra.mxu0 %v1067
        %v1081 = vpop.f32.mrf.mxu0
        %v1082 = vadd.f32 %v761, %v1081
        %v1083 = vpop.f32.mrf.mxu0
        %v1084 = vadd.f32 %v762, %v1083
        %1085 = vdwg.mxu0
        %v1086 = vsel %vm1010, %v1082, -inf
        %1087 = vmax.xlane.f32.xlu0 %v1086
        %v1088 = vpop.xlane.xlu0 %1087
        %v1089 = vsel %vm1010, %v1084, -inf
        %1090 = vmax.xlane.f32.xlu0 %v1089
        %v1091 = vpop.xlane.xlu0 %1090
        %v1092 = vsub.f32 %v1082, %v1088
        %v1093 = vsub.f32 %v1084, %v1091
        %v1094 = vmul.f32 %v1092, 1.442695
        %v1095 = vpow.pop %v1094
        %v1096 = vmul.f32 %v1093, 1.442695
        %v1097 = vpow.pop %v1096
        %v1098 = vsel %vm1010, %v1095, 0.0
        %1099 = vadd.xlane.f32.xlu0 %v1098
        %v1100 = vpop.xlane.xlu0 %1099
        %v1101 = vsel %vm1010, %v1097, 0.0
        %1102 = vadd.xlane.f32.xlu0 %v1101
        %v1103 = vpop.xlane.xlu0 %1102
        %v1104 = vrcp.pop %v1100
        %v1105 = vrcp.pop %v1103
        %v1106 = vmul.f32 %v1095, %v1104
        %v1107 = vmul.f32 %v1097, %v1105
        %v1108 = vpack.c.bf16 %v1107, %v1106
        %1109 = vrot.lane.b32.xlu0 %v1038, 64
        %v1110 = vpop.permute.xlu0 %1109
        %v1113 = vsel %vm1010, %v1108, 0
        %1115 = vmatpush.bf16.msra.mxu0 0
        %1116 = vmatpush.bf16.msra.mxu0 0
        %1117 = vmatpush.bf16.msra.mxu0 0
        %1118 = vmatpush.bf16.msra.mxu0 0
        %1119 = vmatpush.bf16.msra.mxu0 0
        %1120 = vmatpush.bf16.msra.mxu0 0
        %1121 = vmatpush.bf16.msra.mxu0 0
        %1122 = vmatpush.bf16.msra.mxu0 %v1110
        %1123 = vmatmul.bf16.gmra.mxu0 %v1113
        %v1124 = vpop.f32.mrf.mxu0
        %v1125 = vadd.f32 0.0, %v1124
        %v1126 = vpop.f32.mrf.mxu0
        %v1127 = vadd.f32 0.0, %v1126
        %1128 = vdwg.mxu0
        %v1129 = vpack.c.bf16 %v1125, %v1125
        %v1130 = vpack.c.bf16 %v1127, %v1127
        %1133 = vrot.lane.b32.xlu0 %v1129, 64
        %v1134 = vpop.permute.xlu0 %1133
        %1135 = vrot.lane.b32.xlu0 %v1130, 64
        %v1136 = vpop.permute.xlu0 %1135
        %vm1139 = vcmask 1043968
        %1140 = vst.msk [vmem:[#allocation2] sm:$0xf] %vm1139, %v1134
        %1141 = vst.msk [vmem:[#allocation2 + $0x4] sm:$0xf] %vm1139, %v1136
        %v1142 = vld [vmem:[#allocation2] sm:$0xf]
        %v1143 = vld [vmem:[#allocation2 + $0x4] sm:$0xf]
        %v1144 = vld [vmem:[%s5] sm:$0xf]
        %v1145 = vld [vmem:[%s5 + $0x4] sm:$0xf]
        %v1146 = vld [vmem:[%s5 + $0x8] sm:$0xf]
        %v1147 = vld [vmem:[%s5 + $0xc] sm:$0xf]
        %v1148 = vld [vmem:[%s5 + $0x10] sm:$0xf]
        %v1149 = vld [vmem:[%s5 + $0x14] sm:$0xf]
        %v1150 = vld [vmem:[%s5 + $0x18] sm:$0xf]
        %v1151 = vld [vmem:[%s5 + $0x1c] sm:$0xf]
        %v1152 = vld [vmem:[%s5 + $0x20] sm:$0xf]
        %v1153 = vld [vmem:[%s5 + $0x24] sm:$0xf]
        %v1154 = vld [vmem:[%s5 + $0x28] sm:$0xf]
        %v1155 = vld [vmem:[%s5 + $0x2c] sm:$0xf]
        %v1156 = vld [vmem:[%s5 + $0x30] sm:$0xf]
        %v1157 = vld [vmem:[%s5 + $0x34] sm:$0xf]
        %v1158 = vld [vmem:[%s5 + $0x38] sm:$0xf]
        %v1159 = vld [vmem:[%s5 + $0x3c] sm:$0xf]
        %v1160 = vld [vmem:[%s6] sm:$0x1]
        %v1162 = vperm.slane %v1160, 0
        %v1166 = vunpack.c.l.b16 %v1142
        %v1167 = vunpack.c.l.b16 %v1143
        %v1168 = vpack.c.b16 %v1167, %v1166
        %v1186 = vunpack.c.l.b16 %v1144
        %v1187 = vunpack.c.l.b16 %v1145
        %v1188 = vunpack.c.l.b16 %v1146
        %v1189 = vunpack.c.l.b16 %v1147
        %v1190 = vunpack.c.l.b16 %v1148
        %v1191 = vunpack.c.l.b16 %v1149
        %v1192 = vunpack.c.l.b16 %v1150
        %v1193 = vunpack.c.l.b16 %v1151
        %v1194 = vunpack.c.l.b16 %v1152
        %v1195 = vunpack.c.l.b16 %v1153
        %v1196 = vunpack.c.l.b16 %v1154
        %v1197 = vunpack.c.l.b16 %v1155
        %v1198 = vunpack.c.l.b16 %v1156
        %v1199 = vunpack.c.l.b16 %v1157
        %v1200 = vunpack.c.l.b16 %v1158
        %v1201 = vunpack.c.l.b16 %v1159
        %v1202 = vpack.c.b16 %v1187, %v1186
        %v1203 = vpack.c.b16 %v1189, %v1188
        %v1204 = vpack.c.b16 %v1191, %v1190
        %v1205 = vpack.c.b16 %v1193, %v1192
        %v1206 = vpack.c.b16 %v1195, %v1194
        %v1207 = vpack.c.b16 %v1197, %v1196
        %v1208 = vpack.c.b16 %v1199, %v1198
        %v1209 = vpack.c.b16 %v1201, %v1200
        %1218 = vmatpush.bf16.msra.mxu0 %v1209
        %1219 = vmatpush.bf16.msra.mxu0 %v1208
        %1220 = vmatpush.bf16.msra.mxu0 %v1207
        %1221 = vmatpush.bf16.msra.mxu0 %v1206
        %1222 = vmatpush.bf16.msra.mxu0 %v1205
        %1223 = vmatpush.bf16.msra.mxu0 %v1204
        %1224 = vmatpush.bf16.msra.mxu0 %v1203
        %1225 = vmatpush.bf16.msra.mxu0 %v1202
        %1226 = vmatmul.bf16.gmra.mxu0 %v1168
        %v1227 = vpop.f32.mrf.mxu0
        %v1228 = vadd.f32 %v1162, %v1227
        %v1229 = vpop.f32.mrf.mxu0
        %v1230 = vadd.f32 %v1162, %v1229
        %1231 = vdwg.mxu0
        %v1232 = vunpack.c.l.bf16 %v746
        %v1233 = vunpack.c.l.bf16 %v747
        %v1234 = vadd.f32 %v1228, %v1232
        %v1235 = vadd.f32 %v1230, %v1233
        %v1236 = vld [vmem:[%s7] sm:$0x1]
        %v1237 = vld [vmem:[%s8] sm:$0x1]
        %1238 = vadd.xlane.f32.xlu0 %v1234
        %v1239 = vpop.xlane.xlu0 %1238
        %1240 = vadd.xlane.f32.xlu0 %v1235
        %v1241 = vpop.xlane.xlu0 %1240
        %v1242 = vrcp.pop 128.0
        %v1243 = vmul.f32 128.0, %v1242
        %v1244 = vsub.f32 1.0, %v1243
        %v1245 = vmul.f32 %v1242, %v1244
        %v1246 = vadd.f32 %v1242, %v1245
        %vm1247 = vweird.f32 %v1242
        %v1248 = vsel %vm1247, %v1242, %v1246
        %v1249 = vmul.f32 %v1239, %v1248
        %v1250 = vmul.f32 %v1241, %v1248
        %v1251 = vsub.f32 %v1234, %v1249
        %v1252 = vsub.f32 %v1235, %v1250
        %v1253 = vmul.f32 %v1251, %v1251
        %v1254 = vmul.f32 %v1252, %v1252
        %1255 = vadd.xlane.f32.xlu0 %v1253
        %v1256 = vpop.xlane.xlu0 %1255
        %1257 = vadd.xlane.f32.xlu0 %v1254
        %v1258 = vpop.xlane.xlu0 %1257
        %v1259 = vmul.f32 %v1256, %v1248
        %v1260 = vmul.f32 %v1258, %v1248
        %v1261 = vadd.f32 %v1259, 1e-06
        %v1262 = vadd.f32 %v1260, 1e-06
        %v1263 = vrsqrt.pop %v1261
        %v1264 = vmul.f32 %v1263, %v1261
        %v1265 = vmul.f32 %v1264, %v1263
        %v1266 = vmul.f32 0.5, %v1265
        %v1267 = vsub.f32 1.5, %v1266
        %v1268 = vmul.f32 %v1263, %v1267
        %vm1269 = vweird.f32 %v1261
        %vm1270 = vweird.f32 %v1263
        %vm1271 = vmor %vm1269, %vm1270
        %v1272 = vsel %vm1271, %v1263, %v1268
        %v1273 = vrsqrt.pop %v1262
        %v1274 = vmul.f32 %v1273, %v1262
        %v1275 = vmul.f32 %v1274, %v1273
        %v1276 = vmul.f32 0.5, %v1275
        %v1277 = vsub.f32 1.5, %v1276
        %v1278 = vmul.f32 %v1273, %v1277
        %vm1279 = vweird.f32 %v1262
        %vm1280 = vweird.f32 %v1273
        %vm1281 = vmor %vm1279, %vm1280
        %v1282 = vsel %vm1281, %v1273, %v1278
        %v1283 = vmul.f32 %v1251, %v1272
        %v1284 = vmul.f32 %v1252, %v1282
        %v1286 = vperm.slane %v1236, 0
        %v1288 = vmul.f32 %v1283, %v1286
        %v1289 = vmul.f32 %v1284, %v1286
        %v1291 = vperm.slane %v1237, 0
        %v1293 = vadd.f32 %v1288, %v1291
        %v1294 = vadd.f32 %v1289, %v1291
        %v1295 = vld [vmem:[%s728] sm:$0xf]
        %v1296 = vld [vmem:[%s728 + $0x4] sm:$0xf]
        %v1297 = vpack.c.bf16 %v1294, %v1293
        %v1298 = vld [vmem:[%s9] sm:$0xf]
        %v1299 = vld [vmem:[%s9 + $0x4] sm:$0xf]
        %v1300 = vld [vmem:[%s9 + $0x8] sm:$0xf]
        %v1301 = vld [vmem:[%s9 + $0xc] sm:$0xf]
        %v1302 = vld [vmem:[%s9 + $0x10] sm:$0xf]
        %v1303 = vld [vmem:[%s9 + $0x14] sm:$0xf]
        %v1304 = vld [vmem:[%s9 + $0x18] sm:$0xf]
        %v1305 = vld [vmem:[%s9 + $0x1c] sm:$0xf]
        %v1306 = vld [vmem:[%s9 + $0x20] sm:$0xf]
        %v1307 = vld [vmem:[%s9 + $0x24] sm:$0xf]
        %v1308 = vld [vmem:[%s9 + $0x28] sm:$0xf]
        %v1309 = vld [vmem:[%s9 + $0x2c] sm:$0xf]
        %v1310 = vld [vmem:[%s9 + $0x30] sm:$0xf]
        %v1311 = vld [vmem:[%s9 + $0x34] sm:$0xf]
        %v1312 = vld [vmem:[%s9 + $0x38] sm:$0xf]
        %v1313 = vld [vmem:[%s9 + $0x3c] sm:$0xf]
        %v1330 = vunpack.c.l.b16 %v1298
        %v1331 = vunpack.c.l.b16 %v1299
        %v1332 = vunpack.c.l.b16 %v1300
        %v1333 = vunpack.c.l.b16 %v1301
        %v1334 = vunpack.c.l.b16 %v1302
        %v1335 = vunpack.c.l.b16 %v1303
        %v1336 = vunpack.c.l.b16 %v1304
        %v1337 = vunpack.c.l.b16 %v1305
        %v1338 = vunpack.c.l.b16 %v1306
        %v1339 = vunpack.c.l.b16 %v1307
        %v1340 = vunpack.c.l.b16 %v1308
        %v1341 = vunpack.c.l.b16 %v1309
        %v1342 = vunpack.c.l.b16 %v1310
        %v1343 = vunpack.c.l.b16 %v1311
        %v1344 = vunpack.c.l.b16 %v1312
        %v1345 = vunpack.c.l.b16 %v1313
        %v1346 = vpack.c.b16 %v1331, %v1330
        %v1347 = vpack.c.b16 %v1333, %v1332
        %v1348 = vpack.c.b16 %v1335, %v1334
        %v1349 = vpack.c.b16 %v1337, %v1336
        %v1350 = vpack.c.b16 %v1339, %v1338
        %v1351 = vpack.c.b16 %v1341, %v1340
        %v1352 = vpack.c.b16 %v1343, %v1342
        %v1353 = vpack.c.b16 %v1345, %v1344
        %1362 = vmatpush.bf16.msra.mxu0 %v1353
        %1363 = vmatpush.bf16.msra.mxu0 %v1352
        %1364 = vmatpush.bf16.msra.mxu0 %v1351
        %1365 = vmatpush.bf16.msra.mxu0 %v1350
        %1366 = vmatpush.bf16.msra.mxu0 %v1349
        %1367 = vmatpush.bf16.msra.mxu0 %v1348
        %1368 = vmatpush.bf16.msra.mxu0 %v1347
        %1369 = vmatpush.bf16.msra.mxu0 %v1346
        %1370 = vmatmul.bf16.gmra.mxu0 %v1297
        %v1371 = vpop.f32.mrf.mxu0
        %v1372 = vadd.f32 0.0, %v1371
        %v1373 = vpop.f32.mrf.mxu0
        %v1374 = vadd.f32 0.0, %v1373
        %1375 = vdwg.mxu0
        %v1376 = vmul.f32 %v1372, 0.088388346
        %v1377 = vmul.f32 %v1374, 0.088388346
        %v1378 = vld [vmem:[%s10] sm:$0xff]
        %v1379 = vld [vmem:[%s10 + $0x8] sm:$0xff]
        %v1380 = vld [vmem:[%s10 + $0x10] sm:$0xff]
        %v1381 = vld [vmem:[%s10 + $0x18] sm:$0xff]
        %v1382 = vld [vmem:[%s10 + $0x20] sm:$0xff]
        %v1383 = vld [vmem:[%s10 + $0x28] sm:$0xff]
        %v1384 = vld [vmem:[%s10 + $0x30] sm:$0xff]
        %v1385 = vld [vmem:[%s10 + $0x38] sm:$0xff]
        %v1386 = vld [vmem:[%s10 + $0x40] sm:$0xff]
        %v1387 = vld [vmem:[%s10 + $0x48] sm:$0xff]
        %v1388 = vld [vmem:[%s10 + $0x50] sm:$0xff]
        %v1389 = vld [vmem:[%s10 + $0x58] sm:$0xff]
        %v1390 = vld [vmem:[%s10 + $0x60] sm:$0xff]
        %v1391 = vld [vmem:[%s10 + $0x68] sm:$0xff]
        %v1392 = vld [vmem:[%s10 + $0x70] sm:$0xff]
        %v1393 = vld [vmem:[%s10 + $0x78] sm:$0xff]
        %v1396 = vunpack.c.l.b16 %v1295
        %v1397 = vunpack.c.l.b16 %v1296
        %v1398 = vpack.c.b16 %v1397, %v1396
        %v1416 = vunpack.c.l.b16 %v1378
        %v1417 = vunpack.c.h.b16 %v1378
        %v1418 = vunpack.c.l.b16 %v1379
        %v1419 = vunpack.c.h.b16 %v1379
        %v1420 = vunpack.c.l.b16 %v1380
        %v1421 = vunpack.c.h.b16 %v1380
        %v1422 = vunpack.c.l.b16 %v1381
        %v1423 = vunpack.c.h.b16 %v1381
        %v1424 = vunpack.c.l.b16 %v1382
        %v1425 = vunpack.c.h.b16 %v1382
        %v1426 = vunpack.c.l.b16 %v1383
        %v1427 = vunpack.c.h.b16 %v1383
        %v1428 = vunpack.c.l.b16 %v1384
        %v1429 = vunpack.c.h.b16 %v1384
        %v1430 = vunpack.c.l.b16 %v1385
        %v1431 = vunpack.c.h.b16 %v1385
        %v1432 = vunpack.c.l.b16 %v1386
        %v1433 = vunpack.c.h.b16 %v1386
        %v1434 = vunpack.c.l.b16 %v1387
        %v1435 = vunpack.c.h.b16 %v1387
        %v1436 = vunpack.c.l.b16 %v1388
        %v1437 = vunpack.c.h.b16 %v1388
        %v1438 = vunpack.c.l.b16 %v1389
        %v1439 = vunpack.c.h.b16 %v1389
        %v1440 = vunpack.c.l.b16 %v1390
        %v1441 = vunpack.c.h.b16 %v1390
        %v1442 = vunpack.c.l.b16 %v1391
        %v1443 = vunpack.c.h.b16 %v1391
        %v1444 = vunpack.c.l.b16 %v1392
        %v1445 = vunpack.c.h.b16 %v1392
        %v1446 = vunpack.c.l.b16 %v1393
        %v1447 = vunpack.c.h.b16 %v1393
        %v1448 = vpack.c.b16 %v1418, %v1416
        %v1449 = vpack.c.b16 %v1419, %v1417
        %v1450 = vpack.c.b16 %v1422, %v1420
        %v1451 = vpack.c.b16 %v1423, %v1421
        %v1452 = vpack.c.b16 %v1426, %v1424
        %v1453 = vpack.c.b16 %v1427, %v1425
        %v1454 = vpack.c.b16 %v1430, %v1428
        %v1455 = vpack.c.b16 %v1431, %v1429
        %v1456 = vpack.c.b16 %v1434, %v1432
        %v1457 = vpack.c.b16 %v1435, %v1433
        %v1458 = vpack.c.b16 %v1438, %v1436
        %v1459 = vpack.c.b16 %v1439, %v1437
        %v1460 = vpack.c.b16 %v1442, %v1440
        %v1461 = vpack.c.b16 %v1443, %v1441
        %v1462 = vpack.c.b16 %v1446, %v1444
        %v1463 = vpack.c.b16 %v1447, %v1445
        %1480 = vmatpush.bf16.msra.mxu0 %v1462
        %1481 = vmatpush.bf16.msra.mxu0 %v1460
        %1482 = vmatpush.bf16.msra.mxu0 %v1458
        %1483 = vmatpush.bf16.msra.mxu0 %v1456
        %1484 = vmatpush.bf16.msra.mxu0 %v1454
        %1485 = vmatpush.bf16.msra.mxu0 %v1452
        %1486 = vmatpush.bf16.msra.mxu0 %v1450
        %1487 = vmatpush.bf16.msra.mxu0 %v1448
        %1488 = vmatmul.bf16.gmra.mxu0 %v1398
        %v1489 = vpop.f32.mrf.mxu0
        %v1490 = vadd.f32 0.0, %v1489
        %v1491 = vpop.f32.mrf.mxu0
        %v1492 = vadd.f32 0.0, %v1491
        %1493 = vdwg.mxu0
        %1494 = vmatpush.bf16.msra.mxu0 %v1463
        %1495 = vmatpush.bf16.msra.mxu0 %v1461
        %1496 = vmatpush.bf16.msra.mxu0 %v1459
        %1497 = vmatpush.bf16.msra.mxu0 %v1457
        %1498 = vmatpush.bf16.msra.mxu0 %v1455
        %1499 = vmatpush.bf16.msra.mxu0 %v1453
        %1500 = vmatpush.bf16.msra.mxu0 %v1451
        %1501 = vmatpush.bf16.msra.mxu0 %v1449
        %1502 = vmatmul.bf16.gmra.mxu0 %v1398
        %v1503 = vpop.f32.mrf.mxu0
        %v1504 = vadd.f32 0.0, %v1503
        %v1505 = vpop.f32.mrf.mxu0
        %v1506 = vadd.f32 0.0, %v1505
        %1507 = vdwg.mxu0
        %v1508 = vpack.c.bf16 %v1490, %v1490
        %v1509 = vpack.c.bf16 %v1492, %v1492
        %v1510 = vpack.c.bf16 %v1504, %v1504
        %v1511 = vpack.c.bf16 %v1506, %v1506
        %v1512 = vld [vmem:[%s734] sm:$0x1]
        %v1513 = vpack.c.bf16 %v1376, %v1376
        %v1514 = vpack.c.bf16 %v1377, %v1377
        %v1516 = vperm.slane %v1512, 0
        %v1520 = vunpack.c.l.b16 %v1513
        %v1521 = vunpack.c.l.b16 %v1514
        %v1522 = vpack.c.b16 %v1521, %v1520
        %v1525 = vunpack.c.l.b16 %v1508
        %v1526 = vunpack.c.l.b16 %v1509
        %v1527 = vpack.c.b16 %v1526, %v1525
        %v1529 = vsel %vm989, %v1522, 0
        %v1532 = vsel %vm989, %v1527, 0
        %1534 = vmatpush.bf16.xpose.msra.mxu0 0
        %1535 = vmatpush.bf16.xpose.msra.mxu0 0
        %1536 = vmatpush.bf16.xpose.msra.mxu0 0
        %1537 = vmatpush.bf16.xpose.msra.mxu0 0
        %1538 = vmatpush.bf16.xpose.msra.mxu0 0
        %1539 = vmatpush.bf16.xpose.msra.mxu0 0
        %1540 = vmatpush.bf16.xpose.msra.mxu0 0
        %1541 = vmatpush.bf16.xpose.msra.mxu0 %v1532
        %1542 = vmatmul.bf16.gmra.mxu0 %v1529
        %v1543 = vpop.f32.mrf.mxu0
        %v1544 = vadd.f32 %v1516, %v1543
        %v1545 = vpop.f32.mrf.mxu0
        %v1546 = vadd.f32 %v1516, %v1545
        %1547 = vdwg.mxu0
        %v1548 = vsel %vm1010, %v1544, -inf
        %1549 = vmax.xlane.f32.xlu0 %v1548
        %v1550 = vpop.xlane.xlu0 %1549
        %v1551 = vsel %vm1010, %v1546, -inf
        %1552 = vmax.xlane.f32.xlu0 %v1551
        %v1553 = vpop.xlane.xlu0 %1552
        %v1554 = vsub.f32 %v1544, %v1550
        %v1555 = vsub.f32 %v1546, %v1553
        %v1556 = vmul.f32 %v1554, 1.442695
        %v1557 = vpow.pop %v1556
        %v1558 = vmul.f32 %v1555, 1.442695
        %v1559 = vpow.pop %v1558
        %v1560 = vsel %vm1010, %v1557, 0.0
        %1561 = vadd.xlane.f32.xlu0 %v1560
        %v1562 = vpop.xlane.xlu0 %1561
        %v1563 = vsel %vm1010, %v1559, 0.0
        %1564 = vadd.xlane.f32.xlu0 %v1563
        %v1565 = vpop.xlane.xlu0 %1564
        %v1566 = vrcp.pop %v1562
        %v1567 = vrcp.pop %v1565
        %v1568 = vmul.f32 %v1557, %v1566
        %v1569 = vmul.f32 %v1559, %v1567
        %v1570 = vpack.c.bf16 %v1569, %v1568
        %v1573 = vunpack.c.l.b16 %v1510
        %v1574 = vunpack.c.l.b16 %v1511
        %v1575 = vpack.c.b16 %v1574, %v1573
        %v1578 = vsel %vm1010, %v1570, 0
        %1580 = vmatpush.bf16.msra.mxu0 0
        %1581 = vmatpush.bf16.msra.mxu0 0
        %1582 = vmatpush.bf16.msra.mxu0 0
        %1583 = vmatpush.bf16.msra.mxu0 0
        %1584 = vmatpush.bf16.msra.mxu0 0
        %1585 = vmatpush.bf16.msra.mxu0 0
        %1586 = vmatpush.bf16.msra.mxu0 0
        %1587 = vmatpush.bf16.msra.mxu0 %v1575
        %1588 = vmatmul.bf16.gmra.mxu0 %v1578
        %v1589 = vpop.f32.mrf.mxu0
        %v1590 = vadd.f32 0.0, %v1589
        %v1591 = vpop.f32.mrf.mxu0
        %v1592 = vadd.f32 0.0, %v1591
        %1593 = vdwg.mxu0
        %v1594 = vpack.c.bf16 %v1590, %v1590
        %v1595 = vpack.c.bf16 %v1592, %v1592
        %1596 = vst.msk [vmem:[#allocation2] sm:$0xf] %vm1059, %v1594
        %1597 = vst.msk [vmem:[#allocation2 + $0x4] sm:$0xf] %vm1059, %v1595
        %1598 = vrot.lane.b32.xlu0 %v1522, 64
        %v1599 = vpop.permute.xlu0 %1598
        %1600 = vrot.lane.b32.xlu0 %v1527, 64
        %v1601 = vpop.permute.xlu0 %1600
        %v1603 = vsel %vm989, %v1599, 0
        %v1606 = vsel %vm989, %v1601, 0
        %1608 = vmatpush.bf16.xpose.msra.mxu0 0
        %1609 = vmatpush.bf16.xpose.msra.mxu0 0
        %1610 = vmatpush.bf16.xpose.msra.mxu0 0
        %1611 = vmatpush.bf16.xpose.msra.mxu0 0
        %1612 = vmatpush.bf16.xpose.msra.mxu0 0
        %1613 = vmatpush.bf16.xpose.msra.mxu0 0
        %1614 = vmatpush.bf16.xpose.msra.mxu0 0
        %1615 = vmatpush.bf16.xpose.msra.mxu0 %v1606
        %1616 = vmatmul.bf16.gmra.mxu0 %v1603
        %v1617 = vpop.f32.mrf.mxu0
        %v1618 = vadd.f32 %v1516, %v1617
        %v1619 = vpop.f32.mrf.mxu0
        %v1620 = vadd.f32 %v1516, %v1619
        %1621 = vdwg.mxu0
        %v1622 = vsel %vm1010, %v1618, -inf
        %1623 = vmax.xlane.f32.xlu0 %v1622
        %v1624 = vpop.xlane.xlu0 %1623
        %v1625 = vsel %vm1010, %v1620, -inf
        %1626 = vmax.xlane.f32.xlu0 %v1625
        %v1627 = vpop.xlane.xlu0 %1626
        %v1628 = vsub.f32 %v1618, %v1624
        %v1629 = vsub.f32 %v1620, %v1627
        %v1630 = vmul.f32 %v1628, 1.442695
        %v1631 = vpow.pop %v1630
        %v1632 = vmul.f32 %v1629, 1.442695
        %v1633 = vpow.pop %v1632
        %v1634 = vsel %vm1010, %v1631, 0.0
        %1635 = vadd.xlane.f32.xlu0 %v1634
        %v1636 = vpop.xlane.xlu0 %1635
        %v1637 = vsel %vm1010, %v1633, 0.0
        %1638 = vadd.xlane.f32.xlu0 %v1637
        %v1639 = vpop.xlane.xlu0 %1638
        %v1640 = vrcp.pop %v1636
        %v1641 = vrcp.pop %v1639
        %v1642 = vmul.f32 %v1631, %v1640
        %v1643 = vmul.f32 %v1633, %v1641
        %v1644 = vpack.c.bf16 %v1643, %v1642
        %1645 = vrot.lane.b32.xlu0 %v1575, 64
        %v1646 = vpop.permute.xlu0 %1645
        %v1649 = vsel %vm1010, %v1644, 0
        %1651 = vmatpush.bf16.msra.mxu0 0
        %1652 = vmatpush.bf16.msra.mxu0 0
        %1653 = vmatpush.bf16.msra.mxu0 0
        %1654 = vmatpush.bf16.msra.mxu0 0
        %1655 = vmatpush.bf16.msra.mxu0 0
        %1656 = vmatpush.bf16.msra.mxu0 0
        %1657 = vmatpush.bf16.msra.mxu0 0
        %1658 = vmatpush.bf16.msra.mxu0 %v1646
        %1659 = vmatmul.bf16.gmra.mxu0 %v1649
        %v1660 = vpop.f32.mrf.mxu0
        %v1661 = vadd.f32 0.0, %v1660
        %v1662 = vpop.f32.mrf.mxu0
        %v1663 = vadd.f32 0.0, %v1662
        %1664 = vdwg.mxu0
        %v1665 = vpack.c.bf16 %v1661, %v1661
        %v1666 = vpack.c.bf16 %v1663, %v1663
        %1669 = vrot.lane.b32.xlu0 %v1665, 64
        %v1670 = vpop.permute.xlu0 %1669
        %1671 = vrot.lane.b32.xlu0 %v1666, 64
        %v1672 = vpop.permute.xlu0 %1671
        %1675 = vst.msk [vmem:[#allocation2] sm:$0xf] %vm1139, %v1670
        %1676 = vst.msk [vmem:[#allocation2 + $0x4] sm:$0xf] %vm1139, %v1672
        %v1677 = vld [vmem:[#allocation2] sm:$0xf]
        %v1678 = vld [vmem:[#allocation2 + $0x4] sm:$0xf]
        %v1679 = vld [vmem:[#allocation3] sm:$0xf]
        %v1680 = vld [vmem:[#allocation3 + $0x4] sm:$0xf]
        %v1681 = vld [vmem:[#allocation3 + $0x8] sm:$0xf]
        %v1682 = vld [vmem:[#allocation3 + $0xc] sm:$0xf]
        %v1683 = vld [vmem:[#allocation3 + $0x10] sm:$0xf]
        %v1684 = vld [vmem:[#allocation3 + $0x14] sm:$0xf]
        %v1685 = vld [vmem:[#allocation3 + $0x18] sm:$0xf]
        %v1686 = vld [vmem:[#allocation3 + $0x1c] sm:$0xf]
        %v1687 = vld [vmem:[#allocation3 + $0x20] sm:$0xf]
        %v1688 = vld [vmem:[#allocation3 + $0x24] sm:$0xf]
        %v1689 = vld [vmem:[#allocation3 + $0x28] sm:$0xf]
        %v1690 = vld [vmem:[#allocation3 + $0x2c] sm:$0xf]
        %v1691 = vld [vmem:[#allocation3 + $0x30] sm:$0xf]
        %v1692 = vld [vmem:[#allocation3 + $0x34] sm:$0xf]
        %v1693 = vld [vmem:[#allocation3 + $0x38] sm:$0xf]
        %v1694 = vld [vmem:[#allocation3 + $0x3c] sm:$0xf]
        %v1695 = vld [vmem:[%s12] sm:$0x1]
        %v1697 = vperm.slane %v1695, 0
        %v1701 = vunpack.c.l.b16 %v1677
        %v1702 = vunpack.c.l.b16 %v1678
        %v1703 = vpack.c.b16 %v1702, %v1701
        %v1721 = vunpack.c.l.b16 %v1679
        %v1722 = vunpack.c.l.b16 %v1680
        %v1723 = vunpack.c.l.b16 %v1681
        %v1724 = vunpack.c.l.b16 %v1682
        %v1725 = vunpack.c.l.b16 %v1683
        %v1726 = vunpack.c.l.b16 %v1684
        %v1727 = vunpack.c.l.b16 %v1685
        %v1728 = vunpack.c.l.b16 %v1686
        %v1729 = vunpack.c.l.b16 %v1687
        %v1730 = vunpack.c.l.b16 %v1688
        %v1731 = vunpack.c.l.b16 %v1689
        %v1732 = vunpack.c.l.b16 %v1690
        %v1733 = vunpack.c.l.b16 %v1691
        %v1734 = vunpack.c.l.b16 %v1692
        %v1735 = vunpack.c.l.b16 %v1693
        %v1736 = vunpack.c.l.b16 %v1694
        %v1737 = vpack.c.b16 %v1722, %v1721
        %v1738 = vpack.c.b16 %v1724, %v1723
        %v1739 = vpack.c.b16 %v1726, %v1725
        %v1740 = vpack.c.b16 %v1728, %v1727
        %v1741 = vpack.c.b16 %v1730, %v1729
        %v1742 = vpack.c.b16 %v1732, %v1731
        %v1743 = vpack.c.b16 %v1734, %v1733
        %v1744 = vpack.c.b16 %v1736, %v1735
        %1753 = vmatpush.bf16.msra.mxu0 %v1744
        %1754 = vmatpush.bf16.msra.mxu0 %v1743
        %1755 = vmatpush.bf16.msra.mxu0 %v1742
        %1756 = vmatpush.bf16.msra.mxu0 %v1741
        %1757 = vmatpush.bf16.msra.mxu0 %v1740
        %1758 = vmatpush.bf16.msra.mxu0 %v1739
        %1759 = vmatpush.bf16.msra.mxu0 %v1738
        %1760 = vmatpush.bf16.msra.mxu0 %v1737
        %1761 = vmatmul.bf16.gmra.mxu0 %v1703
        %v1762 = vpop.f32.mrf.mxu0
        %v1763 = vadd.f32 %v1697, %v1762
        %v1764 = vpop.f32.mrf.mxu0
        %v1765 = vadd.f32 %v1697, %v1764
        %1766 = vdwg.mxu0
        %v1767 = vadd.f32 %v1763, %v1293
        %v1768 = vadd.f32 %v1765, %v1294
        %v1769 = vld [vmem:[%s13] sm:$0x1]
        %v1770 = vld [vmem:[%s14] sm:$0x1]
        %1771 = vadd.xlane.f32.xlu0 %v1767
        %v1772 = vpop.xlane.xlu0 %1771
        %1773 = vadd.xlane.f32.xlu0 %v1768
        %v1774 = vpop.xlane.xlu0 %1773
        %v1775 = vmul.f32 %v1772, %v1248
        %v1776 = vmul.f32 %v1774, %v1248
        %v1777 = vsub.f32 %v1767, %v1775
        %v1778 = vsub.f32 %v1768, %v1776
        %v1779 = vmul.f32 %v1777, %v1777
        %v1780 = vmul.f32 %v1778, %v1778
        %1781 = vadd.xlane.f32.xlu0 %v1779
        %v1782 = vpop.xlane.xlu0 %1781
        %1783 = vadd.xlane.f32.xlu0 %v1780
        %v1784 = vpop.xlane.xlu0 %1783
        %v1785 = vmul.f32 %v1782, %v1248
        %v1786 = vmul.f32 %v1784, %v1248
        %v1787 = vadd.f32 %v1785, 1e-06
        %v1788 = vadd.f32 %v1786, 1e-06
        %v1789 = vrsqrt.pop %v1787
        %v1790 = vmul.f32 %v1789, %v1787
        %v1791 = vmul.f32 %v1790, %v1789
        %v1792 = vmul.f32 0.5, %v1791
        %v1793 = vsub.f32 1.5, %v1792
        %v1794 = vmul.f32 %v1789, %v1793
        %vm1795 = vweird.f32 %v1787
        %vm1796 = vweird.f32 %v1789
        %vm1797 = vmor %vm1795, %vm1796
        %v1798 = vsel %vm1797, %v1789, %v1794
        %v1799 = vrsqrt.pop %v1788
        %v1800 = vmul.f32 %v1799, %v1788
        %v1801 = vmul.f32 %v1800, %v1799
        %v1802 = vmul.f32 0.5, %v1801
        %v1803 = vsub.f32 1.5, %v1802
        %v1804 = vmul.f32 %v1799, %v1803
        %vm1805 = vweird.f32 %v1788
        %vm1806 = vweird.f32 %v1799
        %vm1807 = vmor %vm1805, %vm1806
        %v1808 = vsel %vm1807, %v1799, %v1804
        %v1809 = vmul.f32 %v1777, %v1798
        %v1810 = vmul.f32 %v1778, %v1808
        %v1812 = vperm.slane %v1769, 0
        %v1814 = vmul.f32 %v1809, %v1812
        %v1815 = vmul.f32 %v1810, %v1812
        %v1817 = vperm.slane %v1770, 0
        %v1819 = vadd.f32 %v1814, %v1817
        %v1820 = vadd.f32 %v1815, %v1817
        %v1821 = vpack.c.bf16 %v1820, %v1819
        %v1822 = vld [vmem:[%s15] sm:$0xff]
        %v1823 = vld [vmem:[%s15 + $0x8] sm:$0xff]
        %v1824 = vld [vmem:[%s15 + $0x10] sm:$0xff]
        %v1825 = vld [vmem:[%s15 + $0x18] sm:$0xff]
        %v1826 = vld [vmem:[%s15 + $0x20] sm:$0xff]
        %v1827 = vld [vmem:[%s15 + $0x28] sm:$0xff]
        %v1828 = vld [vmem:[%s15 + $0x30] sm:$0xff]
        %v1829 = vld [vmem:[%s15 + $0x38] sm:$0xff]
        %v1830 = vld [vmem:[%s15 + $0x40] sm:$0xff]
        %v1831 = vld [vmem:[%s15 + $0x48] sm:$0xff]
        %v1832 = vld [vmem:[%s15 + $0x50] sm:$0xff]
        %v1833 = vld [vmem:[%s15 + $0x58] sm:$0xff]
        %v1834 = vld [vmem:[%s15 + $0x60] sm:$0xff]
        %v1835 = vld [vmem:[%s15 + $0x68] sm:$0xff]
        %v1836 = vld [vmem:[%s15 + $0x70] sm:$0xff]
        %v1837 = vld [vmem:[%s15 + $0x78] sm:$0xff]
        %v1838 = vld [vmem:[%s16] sm:$0x3]
        %v1840 = vperm.slane %v1838, 0
        %v1841 = vperm.slane %v1838, 1
        %v1860 = vunpack.c.l.b16 %v1822
        %v1861 = vunpack.c.h.b16 %v1822
        %v1862 = vunpack.c.l.b16 %v1823
        %v1863 = vunpack.c.h.b16 %v1823
        %v1864 = vunpack.c.l.b16 %v1824
        %v1865 = vunpack.c.h.b16 %v1824
        %v1866 = vunpack.c.l.b16 %v1825
        %v1867 = vunpack.c.h.b16 %v1825
        %v1868 = vunpack.c.l.b16 %v1826
        %v1869 = vunpack.c.h.b16 %v1826
        %v1870 = vunpack.c.l.b16 %v1827
        %v1871 = vunpack.c.h.b16 %v1827
        %v1872 = vunpack.c.l.b16 %v1828
        %v1873 = vunpack.c.h.b16 %v1828
        %v1874 = vunpack.c.l.b16 %v1829
        %v1875 = vunpack.c.h.b16 %v1829
        %v1876 = vunpack.c.l.b16 %v1830
        %v1877 = vunpack.c.h.b16 %v1830
        %v1878 = vunpack.c.l.b16 %v1831
        %v1879 = vunpack.c.h.b16 %v1831
        %v1880 = vunpack.c.l.b16 %v1832
        %v1881 = vunpack.c.h.b16 %v1832
        %v1882 = vunpack.c.l.b16 %v1833
        %v1883 = vunpack.c.h.b16 %v1833
        %v1884 = vunpack.c.l.b16 %v1834
        %v1885 = vunpack.c.h.b16 %v1834
        %v1886 = vunpack.c.l.b16 %v1835
        %v1887 = vunpack.c.h.b16 %v1835
        %v1888 = vunpack.c.l.b16 %v1836
        %v1889 = vunpack.c.h.b16 %v1836
        %v1890 = vunpack.c.l.b16 %v1837
        %v1891 = vunpack.c.h.b16 %v1837
        %v1892 = vpack.c.b16 %v1862, %v1860
        %v1893 = vpack.c.b16 %v1863, %v1861
        %v1894 = vpack.c.b16 %v1866, %v1864
        %v1895 = vpack.c.b16 %v1867, %v1865
        %v1896 = vpack.c.b16 %v1870, %v1868
        %v1897 = vpack.c.b16 %v1871, %v1869
        %v1898 = vpack.c.b16 %v1874, %v1872
        %v1899 = vpack.c.b16 %v1875, %v1873
        %v1900 = vpack.c.b16 %v1878, %v1876
        %v1901 = vpack.c.b16 %v1879, %v1877
        %v1902 = vpack.c.b16 %v1882, %v1880
        %v1903 = vpack.c.b16 %v1883, %v1881
        %v1904 = vpack.c.b16 %v1886, %v1884
        %v1905 = vpack.c.b16 %v1887, %v1885
        %v1906 = vpack.c.b16 %v1890, %v1888
        %v1907 = vpack.c.b16 %v1891, %v1889
        %1924 = vmatpush.bf16.msra.mxu0 %v1906
        %1925 = vmatpush.bf16.msra.mxu0 %v1904
        %1926 = vmatpush.bf16.msra.mxu0 %v1902
        %1927 = vmatpush.bf16.msra.mxu0 %v1900
        %1928 = vmatpush.bf16.msra.mxu0 %v1898
        %1929 = vmatpush.bf16.msra.mxu0 %v1896
        %1930 = vmatpush.bf16.msra.mxu0 %v1894
        %1931 = vmatpush.bf16.msra.mxu0 %v1892
        %1932 = vmatmul.bf16.gmra.mxu0 %v1821
        %v1933 = vpop.f32.mrf.mxu0
        %v1934 = vadd.f32 %v1840, %v1933
        %v1935 = vpop.f32.mrf.mxu0
        %v1936 = vadd.f32 %v1840, %v1935
        %1937 = vdwg.mxu0
        %1938 = vmatpush.bf16.msra.mxu0 %v1907
        %1939 = vmatpush.bf16.msra.mxu0 %v1905
        %1940 = vmatpush.bf16.msra.mxu0 %v1903
        %1941 = vmatpush.bf16.msra.mxu0 %v1901
        %1942 = vmatpush.bf16.msra.mxu0 %v1899
        %1943 = vmatpush.bf16.msra.mxu0 %v1897
        %1944 = vmatpush.bf16.msra.mxu0 %v1895
        %1945 = vmatpush.bf16.msra.mxu0 %v1893
        %1946 = vmatmul.bf16.gmra.mxu0 %v1821
        %v1947 = vpop.f32.mrf.mxu0
        %v1948 = vadd.f32 %v1841, %v1947
        %v1949 = vpop.f32.mrf.mxu0
        %v1950 = vadd.f32 %v1841, %v1949
        %1951 = vdwg.mxu0
        %v1952 = vmax.f32 %v1934, 0.0
        %v1953 = vmax.f32 %v1948, 0.0
        %v1954 = vmax.f32 %v1936, 0.0
        %v1955 = vmax.f32 %v1950, 0.0
        %v1956 = vpack.c.bf16 %v1954, %v1952
        %v1957 = vpack.c.bf16 %v1955, %v1953
        %v1958 = vld [vmem:[%s17] sm:$0xf]
        %v1959 = vld [vmem:[%s17 + $0x4] sm:$0xf]
        %v1960 = vld [vmem:[%s17 + $0x8] sm:$0xf]
        %v1961 = vld [vmem:[%s17 + $0xc] sm:$0xf]
        %v1962 = vld [vmem:[%s17 + $0x10] sm:$0xf]
        %v1963 = vld [vmem:[%s17 + $0x14] sm:$0xf]
        %v1964 = vld [vmem:[%s17 + $0x18] sm:$0xf]
        %v1965 = vld [vmem:[%s17 + $0x1c] sm:$0xf]
        %v1966 = vld [vmem:[%s17 + $0x20] sm:$0xf]
        %v1967 = vld [vmem:[%s17 + $0x24] sm:$0xf]
        %v1968 = vld [vmem:[%s17 + $0x28] sm:$0xf]
        %v1969 = vld [vmem:[%s17 + $0x2c] sm:$0xf]
        %v1970 = vld [vmem:[%s17 + $0x30] sm:$0xf]
        %v1971 = vld [vmem:[%s17 + $0x34] sm:$0xf]
        %v1972 = vld [vmem:[%s17 + $0x38] sm:$0xf]
        %v1973 = vld [vmem:[%s17 + $0x3c] sm:$0xf]
        %v1974 = vld [vmem:[%s17 + $0x40] sm:$0xf]
        %v1975 = vld [vmem:[%s17 + $0x44] sm:$0xf]
        %v1976 = vld [vmem:[%s17 + $0x48] sm:$0xf]
        %v1977 = vld [vmem:[%s17 + $0x4c] sm:$0xf]
        %v1978 = vld [vmem:[%s17 + $0x50] sm:$0xf]
        %v1979 = vld [vmem:[%s17 + $0x54] sm:$0xf]
        %v1980 = vld [vmem:[%s17 + $0x58] sm:$0xf]
        %v1981 = vld [vmem:[%s17 + $0x5c] sm:$0xf]
        %v1982 = vld [vmem:[%s17 + $0x60] sm:$0xf]
        %v1983 = vld [vmem:[%s17 + $0x64] sm:$0xf]
        %v1984 = vld [vmem:[%s17 + $0x68] sm:$0xf]
        %v1985 = vld [vmem:[%s17 + $0x6c] sm:$0xf]
        %v1986 = vld [vmem:[%s17 + $0x70] sm:$0xf]
        %v1987 = vld [vmem:[%s17 + $0x74] sm:$0xf]
        %v1988 = vld [vmem:[%s17 + $0x78] sm:$0xf]
        %v1989 = vld [vmem:[%s17 + $0x7c] sm:$0xf]
        %v1990 = vld [vmem:[%s18] sm:$0x1]
        %v1992 = vperm.slane %v1990, 0
        %v2026 = vunpack.c.l.b16 %v1958
        %v2027 = vunpack.c.l.b16 %v1959
        %v2028 = vunpack.c.l.b16 %v1960
        %v2029 = vunpack.c.l.b16 %v1961
        %v2030 = vunpack.c.l.b16 %v1962
        %v2031 = vunpack.c.l.b16 %v1963
        %v2032 = vunpack.c.l.b16 %v1964
        %v2033 = vunpack.c.l.b16 %v1965
        %v2034 = vunpack.c.l.b16 %v1966
        %v2035 = vunpack.c.l.b16 %v1967
        %v2036 = vunpack.c.l.b16 %v1968
        %v2037 = vunpack.c.l.b16 %v1969
        %v2038 = vunpack.c.l.b16 %v1970
        %v2039 = vunpack.c.l.b16 %v1971
        %v2040 = vunpack.c.l.b16 %v1972
        %v2041 = vunpack.c.l.b16 %v1973
        %v2042 = vunpack.c.l.b16 %v1974
        %v2043 = vunpack.c.l.b16 %v1975
        %v2044 = vunpack.c.l.b16 %v1976
        %v2045 = vunpack.c.l.b16 %v1977
        %v2046 = vunpack.c.l.b16 %v1978
        %v2047 = vunpack.c.l.b16 %v1979
        %v2048 = vunpack.c.l.b16 %v1980
        %v2049 = vunpack.c.l.b16 %v1981
        %v2050 = vunpack.c.l.b16 %v1982
        %v2051 = vunpack.c.l.b16 %v1983
        %v2052 = vunpack.c.l.b16 %v1984
        %v2053 = vunpack.c.l.b16 %v1985
        %v2054 = vunpack.c.l.b16 %v1986
        %v2055 = vunpack.c.l.b16 %v1987
        %v2056 = vunpack.c.l.b16 %v1988
        %v2057 = vunpack.c.l.b16 %v1989
        %v2058 = vpack.c.b16 %v2027, %v2026
        %v2059 = vpack.c.b16 %v2029, %v2028
        %v2060 = vpack.c.b16 %v2031, %v2030
        %v2061 = vpack.c.b16 %v2033, %v2032
        %v2062 = vpack.c.b16 %v2035, %v2034
        %v2063 = vpack.c.b16 %v2037, %v2036
        %v2064 = vpack.c.b16 %v2039, %v2038
        %v2065 = vpack.c.b16 %v2041, %v2040
        %v2066 = vpack.c.b16 %v2043, %v2042
        %v2067 = vpack.c.b16 %v2045, %v2044
        %v2068 = vpack.c.b16 %v2047, %v2046
        %v2069 = vpack.c.b16 %v2049, %v2048
        %v2070 = vpack.c.b16 %v2051, %v2050
        %v2071 = vpack.c.b16 %v2053, %v2052
        %v2072 = vpack.c.b16 %v2055, %v2054
        %v2073 = vpack.c.b16 %v2057, %v2056
        %2090 = vmatpush.bf16.msra.mxu0 %v2065
        %2091 = vmatpush.bf16.msra.mxu0 %v2064
        %2092 = vmatpush.bf16.msra.mxu0 %v2063
        %2093 = vmatpush.bf16.msra.mxu0 %v2062
        %2094 = vmatpush.bf16.msra.mxu0 %v2061
        %2095 = vmatpush.bf16.msra.mxu0 %v2060
        %2096 = vmatpush.bf16.msra.mxu0 %v2059
        %2097 = vmatpush.bf16.msra.mxu0 %v2058
        %2098 = vmatmul.bf16.gmra.mxu0 %v1956
        %v2099 = vpop.f32.mrf.mxu0
        %v2100 = vadd.f32 %v1992, %v2099
        %v2101 = vpop.f32.mrf.mxu0
        %v2102 = vadd.f32 %v1992, %v2101
        %2103 = vdwg.mxu0
        %2104 = vmatpush.bf16.msra.mxu0 %v2073
        %2105 = vmatpush.bf16.msra.mxu0 %v2072
        %2106 = vmatpush.bf16.msra.mxu0 %v2071
        %2107 = vmatpush.bf16.msra.mxu0 %v2070
        %2108 = vmatpush.bf16.msra.mxu0 %v2069
        %2109 = vmatpush.bf16.msra.mxu0 %v2068
        %2110 = vmatpush.bf16.msra.mxu0 %v2067
        %2111 = vmatpush.bf16.msra.mxu0 %v2066
        %2112 = vmatmul.bf16.gmra.mxu0 %v1957
        %v2113 = vpop.f32.mrf.mxu0
        %v2114 = vadd.f32 %v2100, %v2113
        %v2115 = vpop.f32.mrf.mxu0
        %v2116 = vadd.f32 %v2102, %v2115
        %2117 = vdwg.mxu0
        %v2118 = vadd.f32 %v2114, %v1819
        %v2119 = vadd.f32 %v2116, %v1820
        %v2120 = vld [vmem:[%s19] sm:$0x1]
        %v2121 = vld [vmem:[%s20] sm:$0x1]
        %2122 = vadd.xlane.f32.xlu0 %v2118
        %v2123 = vpop.xlane.xlu0 %2122
        %2124 = vadd.xlane.f32.xlu0 %v2119
        %v2125 = vpop.xlane.xlu0 %2124
        %v2126 = vmul.f32 %v2123, %v1248
        %v2127 = vmul.f32 %v2125, %v1248
        %v2128 = vsub.f32 %v2118, %v2126
        %v2129 = vsub.f32 %v2119, %v2127
        %v2130 = vmul.f32 %v2128, %v2128
        %v2131 = vmul.f32 %v2129, %v2129
        %2132 = vadd.xlane.f32.xlu0 %v2130
        %v2133 = vpop.xlane.xlu0 %2132
        %2134 = vadd.xlane.f32.xlu0 %v2131
        %v2135 = vpop.xlane.xlu0 %2134
        %v2136 = vmul.f32 %v2133, %v1248
        %v2137 = vmul.f32 %v2135, %v1248
        %v2138 = vadd.f32 %v2136, 1e-06
        %v2139 = vadd.f32 %v2137, 1e-06
        %v2140 = vrsqrt.pop %v2138
        %v2141 = vmul.f32 %v2140, %v2138
        %v2142 = vmul.f32 %v2141, %v2140
        %v2143 = vmul.f32 0.5, %v2142
        %v2144 = vsub.f32 1.5, %v2143
        %v2145 = vmul.f32 %v2140, %v2144
        %vm2146 = vweird.f32 %v2138
        %vm2147 = vweird.f32 %v2140
        %vm2148 = vmor %vm2146, %vm2147
        %v2149 = vsel %vm2148, %v2140, %v2145
        %v2150 = vrsqrt.pop %v2139
        %v2151 = vmul.f32 %v2150, %v2139
        %v2152 = vmul.f32 %v2151, %v2150
        %v2153 = vmul.f32 0.5, %v2152
        %v2154 = vsub.f32 1.5, %v2153
        %v2155 = vmul.f32 %v2150, %v2154
        %vm2156 = vweird.f32 %v2139
        %vm2157 = vweird.f32 %v2150
        %vm2158 = vmor %vm2156, %vm2157
        %v2159 = vsel %vm2158, %v2150, %v2155
        %v2160 = vmul.f32 %v2128, %v2149
        %v2161 = vmul.f32 %v2129, %v2159
        %v2163 = vperm.slane %v2120, 0
        %v2165 = vmul.f32 %v2160, %v2163
        %v2166 = vmul.f32 %v2161, %v2163
        %v2168 = vperm.slane %v2121, 0
        %v2170 = vadd.f32 %v2165, %v2168
        %v2171 = vadd.f32 %v2166, %v2168
        %v2172 = vpack.c.bf16 %v2170, %v2170
        %v2173 = vpack.c.bf16 %v2171, %v2171
        %2174 = vst [vmem:[%s743] sm:$0xf] %v2172
        %2175 = vst [vmem:[%s743 + $0x4] sm:$0xf] %v2173
        %s2176 = smul.u32 2, %s38
        %p2177 = scmp.lt.s32.totalorder %s37, 1
        %s2178 = scalar_select %p2177, %s37, 1
        %p2179 = scmp.lt.s32.totalorder %s2176, 1
        %s2180 = scalar_select %p2179, %s2176, 1
        %s2181 = smul.addr %s2178, 2
        %s2182 = sadd.s32 %s2180, %s2181
        %s2183 = smul.addr %s2182, 4
        %s2184 = scalar_lea.vmem %s21, %s2183
        // Predicated region
        $region109: #{decoder_forward.2} parent=103 // pred_check
          %p2185 = pneg %p526
        $region110: #{decoder_forward.2} parent=103 // pred_check_branch
          %2187 = sbr.rel (%p2185) target = $region112
        $region111: #{decoder_forward.2} parent=103 // pred_region
          %s2188 = smul.u32 2, %s38
        $region112: #{decoder_forward.2} parent=103 // pred_fallthru
          _
      $region104: #{decoder_forward.2} parent=5 // pred_fallthru
        _
      %p2189 = scmp.le.s32.totalorder 2, %s28
      // Predicated region
      $region113: #{decoder_forward.2} parent=5 // pred_check
        %p2190 = pneg %p2189
      $region114: #{decoder_forward.2} parent=5 // pred_check_branch
        %2192 = sbr.rel (%p2190) target = $region116
      $region115: #{decoder_forward.2} parent=5 // pred_region
        %s2193 = ssub.s32 %s28, 2
        // Predicated region
        $region117: #{decoder_forward.2} parent=115 // pred_check
          %p2194 = pneg %p532
        $region118: #{decoder_forward.2} parent=115 // pred_check_branch
          %2196 = sbr.rel (%p2194) target = $region120
        $region119: #{decoder_forward.2} parent=115 // pred_region
          %s2197 = smul.u32 2, %s40
          %p2198 = scmp.lt.s32.totalorder %s39, 1
          %s2199 = scalar_select %p2198, %s39, 1
          %p2200 = scmp.lt.s32.totalorder %s2197, 1
          %s2201 = scalar_select %p2200, %s2197, 1
          %s2202 = smul.addr %s2199, 2
          %s2203 = sadd.s32 %s2201, %s2202
          %s2204 = smul.addr %s2203, 4
          %s2205 = scalar_lea.vmem %s21, %s2204
        $region120: #{decoder_forward.2} parent=115 // pred_fallthru
          _
      $region116: #{decoder_forward.2} parent=5 // pred_fallthru
        _
    $region6: #{decoder_forward.2} parent=1 // loop_footer
      %s32 = sadd.s32 1, %s28
    $region7: #{decoder_forward.2} parent=1 // loop_footer_branch
      %27 = sbr.rel target = $region3
    $region8: #{decoder_forward.2} parent=1 // loop_exit
      _
    %2206 = vsyncpa [#allocation4], 1
    %s2207 = scalar_lea.sflag [#allocation4], 1
    %2208 = vsyncpa %s2207, 1

// kernel: decoder_forward.3
$region0: #{decoder_forward.3}
  #allocation0 [shape = 'u32[]', space=smem, size = 0x4, offset = 0x4, fixed_abs, tag = 'smem constant byte address 0x4 - core index']
  #allocation1 [shape = 'u32[72,128]{1,0:T(1,128)}', space=vmem, size = 0x9000, scoped, tag = 'internal scratch']
  #allocation2 [shape = 'bf16[16,128]{1,0:T(8,128)(2,1)}', space=vmem, size = 0x1000, scoped, tag = 'scratch operand']
  %s0 = inlined_call_operand.vmem [shape: bf16[2,16,128], index: 0, kind: input, shape index: {}]
  %s1 = inlined_call_operand.vmem [shape: bf16[2,16,128], index: 1, kind: input, shape index: {}]
  %s2 = inlined_call_operand.vmem [shape: f32[2,1,16], index: 2, kind: input, shape index: {}]
  %s3 = inlined_call_operand.vmem [shape: f32[2,1,16], index: 3, kind: input, shape index: {}]
  %s4 = inlined_call_operand.vmem [shape: bf16[128,384], index: 4, kind: input, shape index: {}]
  %s5 = inlined_call_operand.vmem [shape: bf16[128,128], index: 5, kind: input, shape index: {}]
  %s6 = inlined_call_operand.vmem [shape: f32[1,128], index: 6, kind: input, shape index: {}]
  %s7 = inlined_call_operand.vmem [shape: f32[1,128], index: 7, kind: input, shape index: {}]
  %s8 = inlined_call_operand.vmem [shape: f32[1,128], index: 8, kind: input, shape index: {}]
  %s9 = inlined_call_operand.vmem [shape: bf16[128,128], index: 9, kind: input, shape index: {}]
  %s10 = inlined_call_operand.vmem [shape: bf16[128,256], index: 10, kind: input, shape index: {}]
  %s11 = inlined_call_operand.vmem [shape: bf16[128,128], index: 11, kind: input, shape index: {}]
  %s12 = inlined_call_operand.vmem [shape: f32[1,128], index: 12, kind: input, shape index: {}]
  %s13 = inlined_call_operand.vmem [shape: f32[1,128], index: 13, kind: input, shape index: {}]
  %s14 = inlined_call_operand.vmem [shape: f32[1,128], index: 14, kind: input, shape index: {}]
  %s15 = inlined_call_operand.vmem [shape: bf16[128,256], index: 15, kind: input, shape index: {}]
  %s16 = inlined_call_operand.vmem [shape: f32[1,256], index: 16, kind: input, shape index: {}]
  %s17 = inlined_call_operand.vmem [shape: bf16[256,128], index: 17, kind: input, shape index: {}]
  %s18 = inlined_call_operand.vmem [shape: f32[1,128], index: 18, kind: input, shape index: {}]
  %s19 = inlined_call_operand.vmem [shape: f32[1,128], index: 19, kind: input, shape index: {}]
  %s20 = inlined_call_operand.vmem [shape: f32[1,128], index: 20, kind: input, shape index: {}]
  %s21 = inlined_call_operand.vmem [shape: bf16[2,16,128], index: 21, kind: output, shape index: {}]
  %s22 = sld [smem:[#allocation0]]
  $region117: #{decoder_forward.3} parent=0
    _
  %s24 = ssub.s32 1, %s22
  %s25 = scalar_select 0, %s24, %s22
  loop: start=0, step=1, limit=4
  $region2: #{decoder_forward.3} parent=0 // loop_pre_header
    _
  $region3: #{decoder_forward.3} parent=0 // loop_header
    %s27 = sphi 0, %s31
    %p28 = scmp.ge.s32.totalorder %s27, 4
    %s34 = sphi 0, %s46
    %s35 = sphi 0, %s42
    %s36 = sphi 0, %s34
    %s37 = sphi 0, %s35
    %s38 = sphi 0, %s36
    %s39 = sphi 0, %s37
    %s49 = sphi 0, %s51
    %s52 = sphi 0, %s49
    %s53 = sphi 0, %s52
    %s69 = sphi 0, %s53
    %s75 = sphi 0, %s77
    %s78 = sphi 0, %s75
    %s79 = sphi 0, %s78
    %s95 = sphi 0, %s79
    %s101 = sphi 0, %s103
    %s104 = sphi 0, %s101
    %s105 = sphi 0, %s104
    %s121 = sphi 0, %s105
    %s127 = sphi 0, %s129
    %s130 = sphi 0, %s127
    %s131 = sphi 0, %s130
    %s147 = sphi 0, %s131
    %s151 = sphi 0, %s151
    %s153 = sphi 0, %s151
    %s154 = sphi 0, %s153
    %s168 = sphi 0, %s154
    %s172 = sphi 0, %s172
    %s174 = sphi 0, %s172
    %s175 = sphi 0, %s174
    %s189 = sphi 0, %s175
    %s193 = sphi 0, %s193
    %s195 = sphi 0, %s193
    %s196 = sphi 0, %s195
    %s210 = sphi 0, %s196
    %s214 = sphi 0, %s214
    %s216 = sphi 0, %s214
    %s217 = sphi 0, %s216
    %s231 = sphi 0, %s217
    %s235 = sphi 0, %s235
    %s237 = sphi 0, %s235
    %s238 = sphi 0, %s237
    %s252 = sphi 0, %s238
    %s256 = sphi 0, %s256
    %s258 = sphi 0, %s256
    %s259 = sphi 0, %s258
    %s273 = sphi 0, %s259
    %s277 = sphi 0, %s277
    %s279 = sphi 0, %s277
    %s280 = sphi 0, %s279
    %s294 = sphi 0, %s280
    %s298 = sphi 0, %s298
    %s300 = sphi 0, %s298
    %s301 = sphi 0, %s300
    %s315 = sphi 0, %s301
    %s319 = sphi 0, %s319
    %s321 = sphi 0, %s319
    %s322 = sphi 0, %s321
    %s336 = sphi 0, %s322
    %s340 = sphi 0, %s340
    %s342 = sphi 0, %s340
    %s343 = sphi 0, %s342
    %s357 = sphi 0, %s343
    %s361 = sphi 0, %s361
    %s363 = sphi 0, %s361
    %s364 = sphi 0, %s363
    %s378 = sphi 0, %s364
    %s382 = sphi 0, %s382
    %s384 = sphi 0, %s382
    %s385 = sphi 0, %s384
    %s399 = sphi 0, %s385
    %s403 = sphi 0, %s403
    %s405 = sphi 0, %s403
    %s406 = sphi 0, %s405
    %s420 = sphi 0, %s406
    %s424 = sphi 0, %s424
    %s426 = sphi 0, %s424
    %s427 = sphi 0, %s426
    %s441 = sphi 0, %s427
    %s445 = sphi 0, %s445
    %s447 = sphi 0, %s445
    %s448 = sphi 0, %s447
    %s462 = sphi 0, %s448
    %s466 = sphi 0, %s466
    %s468 = sphi 0, %s466
    %s469 = sphi 0, %s468
    %s483 = sphi 0, %s469
    %s487 = sphi 0, %s487
    %s489 = sphi 0, %s487
    %s490 = sphi 0, %s489
    %s504 = sphi 0, %s490
    %s512 = sphi 0, %s514
    %s515 = sphi 0, %s512
    %s516 = sphi 0, %s515
    %s532 = sphi 0, %s516
  $region4: #{decoder_forward.3} parent=0 // loop_header_branch
    %30 = sbr.rel (%p28) target = $region8
  $region5: #{decoder_forward.3} parent=0 // loop_body
    %s32 = ssub.s32 %s27, 1
    %s33 = ssub.s32 %s27, 2
    %s40 = sadd.s32 1, %s35
    %p41 = scmp.ge.s32.totalorder %s40, 1
    %s42 = scalar_select %p41, 0, %s40
    %s43 = sadd.s32 1, %s34
    %s44 = scalar_select %p41, %s43, %s34
    %p45 = scmp.ge.s32.totalorder %s44, 2
    %s46 = scalar_select %p45, 0, %s44
    %s47 = ssub.s32 %s34, %s46
    %p48 = scmp.eq.s32.totalorder %s47, 0
    %s50 = sadd.s32 %s49, 1
    %s51 = scalar_select %p48, %s49, %s50
    %p54 = pneg %p48
    %p55 = scmp.eq.s32.totalorder %s27, 1
    %p56 = por %p54, %p55
    %p57 = scmp.ne.s32.totalorder %s49, %s52
    %p58 = scmp.eq.s32.totalorder %s27, 0
    %p59 = por %p57, %p58
    %p60 = scmp.ne.s32.totalorder %s49, %s52
    %p61 = scmp.eq.s32.totalorder %s32, 1
    %p62 = por %p60, %p61
    %p63 = scmp.ne.s32.totalorder %s52, %s53
    %p64 = scmp.eq.s32.totalorder %s32, 0
    %p65 = por %p63, %p64
    %p66 = scmp.ne.s32.totalorder %s52, %s53
    %p67 = scmp.eq.s32.totalorder %s33, 1
    %p68 = por %p66, %p67
    %p70 = scmp.ne.s32.totalorder %s53, %s69
    %p71 = scmp.eq.s32.totalorder %s33, 0
    %p72 = por %p70, %p71
    %s73 = ssub.s32 %s34, %s46
    %p74 = scmp.eq.s32.totalorder %s73, 0
    %s76 = sadd.s32 %s75, 1
    %s77 = scalar_select %p74, %s75, %s76
    %p80 = pneg %p74
    %p81 = scmp.eq.s32.totalorder %s27, 1
    %p82 = por %p80, %p81
    %p83 = scmp.ne.s32.totalorder %s75, %s78
    %p84 = scmp.eq.s32.totalorder %s27, 0
    %p85 = por %p83, %p84
    %p86 = scmp.ne.s32.totalorder %s75, %s78
    %p87 = scmp.eq.s32.totalorder %s32, 1
    %p88 = por %p86, %p87
    %p89 = scmp.ne.s32.totalorder %s78, %s79
    %p90 = scmp.eq.s32.totalorder %s32, 0
    %p91 = por %p89, %p90
    %p92 = scmp.ne.s32.totalorder %s78, %s79
    %p93 = scmp.eq.s32.totalorder %s33, 1
    %p94 = por %p92, %p93
    %p96 = scmp.ne.s32.totalorder %s79, %s95
    %p97 = scmp.eq.s32.totalorder %s33, 0
    %p98 = por %p96, %p97
    %s99 = ssub.s32 %s34, %s46
    %p100 = scmp.eq.s32.totalorder %s99, 0
    %s102 = sadd.s32 %s101, 1
    %s103 = scalar_select %p100, %s101, %s102
    %p106 = pneg %p100
    %p107 = scmp.eq.s32.totalorder %s27, 1
    %p108 = por %p106, %p107
    %p109 = scmp.ne.s32.totalorder %s101, %s104
    %p110 = scmp.eq.s32.totalorder %s27, 0
    %p111 = por %p109, %p110
    %p112 = scmp.ne.s32.totalorder %s101, %s104
    %p113 = scmp.eq.s32.totalorder %s32, 1
    %p114 = por %p112, %p113
    %p115 = scmp.ne.s32.totalorder %s104, %s105
    %p116 = scmp.eq.s32.totalorder %s32, 0
    %p117 = por %p115, %p116
    %p118 = scmp.ne.s32.totalorder %s104, %s105
    %p119 = scmp.eq.s32.totalorder %s33, 1
    %p120 = por %p118, %p119
    %p122 = scmp.ne.s32.totalorder %s105, %s121
    %p123 = scmp.eq.s32.totalorder %s33, 0
    %p124 = por %p122, %p123
    %s125 = ssub.s32 %s34, %s46
    %p126 = scmp.eq.s32.totalorder %s125, 0
    %s128 = sadd.s32 %s127, 1
    %s129 = scalar_select %p126, %s127, %s128
    %p132 = pneg %p126
    %p133 = scmp.eq.s32.totalorder %s27, 1
    %p134 = por %p132, %p133
    %p135 = scmp.ne.s32.totalorder %s127, %s130
    %p136 = scmp.eq.s32.totalorder %s27, 0
    %p137 = por %p135, %p136
    %p138 = scmp.ne.s32.totalorder %s127, %s130
    %p139 = scmp.eq.s32.totalorder %s32, 1
    %p140 = por %p138, %p139
    %p141 = scmp.ne.s32.totalorder %s130, %s131
    %p142 = scmp.eq.s32.totalorder %s32, 0
    %p143 = por %p141, %p142
    %p144 = scmp.ne.s32.totalorder %s130, %s131
    %p145 = scmp.eq.s32.totalorder %s33, 1
    %p146 = por %p144, %p145
    %p148 = scmp.ne.s32.totalorder %s131, %s147
    %p149 = scmp.eq.s32.totalorder %s33, 0
    %p150 = por %p148, %p149
    %s152 = sadd.s32 %s151, 1
    %p155 = scmp.eq.s32.totalorder %s27, 1
    %p156 = scmp.ne.s32.totalorder %s151, %s153
    %p157 = scmp.eq.s32.totalorder %s27, 0
    %p158 = por %p156, %p157
    %p159 = scmp.ne.s32.totalorder %s151, %s153
    %p160 = scmp.eq.s32.totalorder %s32, 1
    %p161 = por %p159, %p160
    %p162 = scmp.ne.s32.totalorder %s153, %s154
    %p163 = scmp.eq.s32.totalorder %s32, 0
    %p164 = por %p162, %p163
    %p165 = scmp.ne.s32.totalorder %s153, %s154
    %p166 = scmp.eq.s32.totalorder %s33, 1
    %p167 = por %p165, %p166
    %p169 = scmp.ne.s32.totalorder %s154, %s168
    %p170 = scmp.eq.s32.totalorder %s33, 0
    %p171 = por %p169, %p170
    %s173 = sadd.s32 %s172, 1
    %p176 = scmp.eq.s32.totalorder %s27, 1
    %p177 = scmp.ne.s32.totalorder %s172, %s174
    %p178 = scmp.eq.s32.totalorder %s27, 0
    %p179 = por %p177, %p178
    %p180 = scmp.ne.s32.totalorder %s172, %s174
    %p181 = scmp.eq.s32.totalorder %s32, 1
    %p182 = por %p180, %p181
    %p183 = scmp.ne.s32.totalorder %s174, %s175
    %p184 = scmp.eq.s32.totalorder %s32, 0
    %p185 = por %p183, %p184
    %p186 = scmp.ne.s32.totalorder %s174, %s175
    %p187 = scmp.eq.s32.totalorder %s33, 1
    %p188 = por %p186, %p187
    %p190 = scmp.ne.s32.totalorder %s175, %s189
    %p191 = scmp.eq.s32.totalorder %s33, 0
    %p192 = por %p190, %p191
    %s194 = sadd.s32 %s193, 1
    %p197 = scmp.eq.s32.totalorder %s27, 1
    %p198 = scmp.ne.s32.totalorder %s193, %s195
    %p199 = scmp.eq.s32.totalorder %s27, 0
    %p200 = por %p198, %p199
    %p201 = scmp.ne.s32.totalorder %s193, %s195
    %p202 = scmp.eq.s32.totalorder %s32, 1
    %p203 = por %p201, %p202
    %p204 = scmp.ne.s32.totalorder %s195, %s196
    %p205 = scmp.eq.s32.totalorder %s32, 0
    %p206 = por %p204, %p205
    %p207 = scmp.ne.s32.totalorder %s195, %s196
    %p208 = scmp.eq.s32.totalorder %s33, 1
    %p209 = por %p207, %p208
    %p211 = scmp.ne.s32.totalorder %s196, %s210
    %p212 = scmp.eq.s32.totalorder %s33, 0
    %p213 = por %p211, %p212
    %s215 = sadd.s32 %s214, 1
    %p218 = scmp.eq.s32.totalorder %s27, 1
    %p219 = scmp.ne.s32.totalorder %s214, %s216
    %p220 = scmp.eq.s32.totalorder %s27, 0
    %p221 = por %p219, %p220
    %p222 = scmp.ne.s32.totalorder %s214, %s216
    %p223 = scmp.eq.s32.totalorder %s32, 1
    %p224 = por %p222, %p223
    %p225 = scmp.ne.s32.totalorder %s216, %s217
    %p226 = scmp.eq.s32.totalorder %s32, 0
    %p227 = por %p225, %p226
    %p228 = scmp.ne.s32.totalorder %s216, %s217
    %p229 = scmp.eq.s32.totalorder %s33, 1
    %p230 = por %p228, %p229
    %p232 = scmp.ne.s32.totalorder %s217, %s231
    %p233 = scmp.eq.s32.totalorder %s33, 0
    %p234 = por %p232, %p233
    %s236 = sadd.s32 %s235, 1
    %p239 = scmp.eq.s32.totalorder %s27, 1
    %p240 = scmp.ne.s32.totalorder %s235, %s237
    %p241 = scmp.eq.s32.totalorder %s27, 0
    %p242 = por %p240, %p241
    %p243 = scmp.ne.s32.totalorder %s235, %s237
    %p244 = scmp.eq.s32.totalorder %s32, 1
    %p245 = por %p243, %p244
    %p246 = scmp.ne.s32.totalorder %s237, %s238
    %p247 = scmp.eq.s32.totalorder %s32, 0
    %p248 = por %p246, %p247
    %p249 = scmp.ne.s32.totalorder %s237, %s238
    %p250 = scmp.eq.s32.totalorder %s33, 1
    %p251 = por %p249, %p250
    %p253 = scmp.ne.s32.totalorder %s238, %s252
    %p254 = scmp.eq.s32.totalorder %s33, 0
    %p255 = por %p253, %p254
    %s257 = sadd.s32 %s256, 1
    %p260 = scmp.eq.s32.totalorder %s27, 1
    %p261 = scmp.ne.s32.totalorder %s256, %s258
    %p262 = scmp.eq.s32.totalorder %s27, 0
    %p263 = por %p261, %p262
    %p264 = scmp.ne.s32.totalorder %s256, %s258
    %p265 = scmp.eq.s32.totalorder %s32, 1
    %p266 = por %p264, %p265
    %p267 = scmp.ne.s32.totalorder %s258, %s259
    %p268 = scmp.eq.s32.totalorder %s32, 0
    %p269 = por %p267, %p268
    %p270 = scmp.ne.s32.totalorder %s258, %s259
    %p271 = scmp.eq.s32.totalorder %s33, 1
    %p272 = por %p270, %p271
    %p274 = scmp.ne.s32.totalorder %s259, %s273
    %p275 = scmp.eq.s32.totalorder %s33, 0
    %p276 = por %p274, %p275
    %s278 = sadd.s32 %s277, 1
    %p281 = scmp.eq.s32.totalorder %s27, 1
    %p282 = scmp.ne.s32.totalorder %s277, %s279
    %p283 = scmp.eq.s32.totalorder %s27, 0
    %p284 = por %p282, %p283
    %p285 = scmp.ne.s32.totalorder %s277, %s279
    %p286 = scmp.eq.s32.totalorder %s32, 1
    %p287 = por %p285, %p286
    %p288 = scmp.ne.s32.totalorder %s279, %s280
    %p289 = scmp.eq.s32.totalorder %s32, 0
    %p290 = por %p288, %p289
    %p291 = scmp.ne.s32.totalorder %s279, %s280
    %p292 = scmp.eq.s32.totalorder %s33, 1
    %p293 = por %p291, %p292
    %p295 = scmp.ne.s32.totalorder %s280, %s294
    %p296 = scmp.eq.s32.totalorder %s33, 0
    %p297 = por %p295, %p296
    %s299 = sadd.s32 %s298, 1
    %p302 = scmp.eq.s32.totalorder %s27, 1
    %p303 = scmp.ne.s32.totalorder %s298, %s300
    %p304 = scmp.eq.s32.totalorder %s27, 0
    %p305 = por %p303, %p304
    %p306 = scmp.ne.s32.totalorder %s298, %s300
    %p307 = scmp.eq.s32.totalorder %s32, 1
    %p308 = por %p306, %p307
    %p309 = scmp.ne.s32.totalorder %s300, %s301
    %p310 = scmp.eq.s32.totalorder %s32, 0
    %p311 = por %p309, %p310
    %p312 = scmp.ne.s32.totalorder %s300, %s301
    %p313 = scmp.eq.s32.totalorder %s33, 1
    %p314 = por %p312, %p313
    %p316 = scmp.ne.s32.totalorder %s301, %s315
    %p317 = scmp.eq.s32.totalorder %s33, 0
    %p318 = por %p316, %p317
    %s320 = sadd.s32 %s319, 1
    %p323 = scmp.eq.s32.totalorder %s27, 1
    %p324 = scmp.ne.s32.totalorder %s319, %s321
    %p325 = scmp.eq.s32.totalorder %s27, 0
    %p326 = por %p324, %p325
    %p327 = scmp.ne.s32.totalorder %s319, %s321
    %p328 = scmp.eq.s32.totalorder %s32, 1
    %p329 = por %p327, %p328
    %p330 = scmp.ne.s32.totalorder %s321, %s322
    %p331 = scmp.eq.s32.totalorder %s32, 0
    %p332 = por %p330, %p331
    %p333 = scmp.ne.s32.totalorder %s321, %s322
    %p334 = scmp.eq.s32.totalorder %s33, 1
    %p335 = por %p333, %p334
    %p337 = scmp.ne.s32.totalorder %s322, %s336
    %p338 = scmp.eq.s32.totalorder %s33, 0
    %p339 = por %p337, %p338
    %s341 = sadd.s32 %s340, 1
    %p344 = scmp.eq.s32.totalorder %s27, 1
    %p345 = scmp.ne.s32.totalorder %s340, %s342
    %p346 = scmp.eq.s32.totalorder %s27, 0
    %p347 = por %p345, %p346
    %p348 = scmp.ne.s32.totalorder %s340, %s342
    %p349 = scmp.eq.s32.totalorder %s32, 1
    %p350 = por %p348, %p349
    %p351 = scmp.ne.s32.totalorder %s342, %s343
    %p352 = scmp.eq.s32.totalorder %s32, 0
    %p353 = por %p351, %p352
    %p354 = scmp.ne.s32.totalorder %s342, %s343
    %p355 = scmp.eq.s32.totalorder %s33, 1
    %p356 = por %p354, %p355
    %p358 = scmp.ne.s32.totalorder %s343, %s357
    %p359 = scmp.eq.s32.totalorder %s33, 0
    %p360 = por %p358, %p359
    %s362 = sadd.s32 %s361, 1
    %p365 = scmp.eq.s32.totalorder %s27, 1
    %p366 = scmp.ne.s32.totalorder %s361, %s363
    %p367 = scmp.eq.s32.totalorder %s27, 0
    %p368 = por %p366, %p367
    %p369 = scmp.ne.s32.totalorder %s361, %s363
    %p370 = scmp.eq.s32.totalorder %s32, 1
    %p371 = por %p369, %p370
    %p372 = scmp.ne.s32.totalorder %s363, %s364
    %p373 = scmp.eq.s32.totalorder %s32, 0
    %p374 = por %p372, %p373
    %p375 = scmp.ne.s32.totalorder %s363, %s364
    %p376 = scmp.eq.s32.totalorder %s33, 1
    %p377 = por %p375, %p376
    %p379 = scmp.ne.s32.totalorder %s364, %s378
    %p380 = scmp.eq.s32.totalorder %s33, 0
    %p381 = por %p379, %p380
    %s383 = sadd.s32 %s382, 1
    %p386 = scmp.eq.s32.totalorder %s27, 1
    %p387 = scmp.ne.s32.totalorder %s382, %s384
    %p388 = scmp.eq.s32.totalorder %s27, 0
    %p389 = por %p387, %p388
    %p390 = scmp.ne.s32.totalorder %s382, %s384
    %p391 = scmp.eq.s32.totalorder %s32, 1
    %p392 = por %p390, %p391
    %p393 = scmp.ne.s32.totalorder %s384, %s385
    %p394 = scmp.eq.s32.totalorder %s32, 0
    %p395 = por %p393, %p394
    %p396 = scmp.ne.s32.totalorder %s384, %s385
    %p397 = scmp.eq.s32.totalorder %s33, 1
    %p398 = por %p396, %p397
    %p400 = scmp.ne.s32.totalorder %s385, %s399
    %p401 = scmp.eq.s32.totalorder %s33, 0
    %p402 = por %p400, %p401
    %s404 = sadd.s32 %s403, 1
    %p407 = scmp.eq.s32.totalorder %s27, 1
    %p408 = scmp.ne.s32.totalorder %s403, %s405
    %p409 = scmp.eq.s32.totalorder %s27, 0
    %p410 = por %p408, %p409
    %p411 = scmp.ne.s32.totalorder %s403, %s405
    %p412 = scmp.eq.s32.totalorder %s32, 1
    %p413 = por %p411, %p412
    %p414 = scmp.ne.s32.totalorder %s405, %s406
    %p415 = scmp.eq.s32.totalorder %s32, 0
    %p416 = por %p414, %p415
    %p417 = scmp.ne.s32.totalorder %s405, %s406
    %p418 = scmp.eq.s32.totalorder %s33, 1
    %p419 = por %p417, %p418
    %p421 = scmp.ne.s32.totalorder %s406, %s420
    %p422 = scmp.eq.s32.totalorder %s33, 0
    %p423 = por %p421, %p422
    %s425 = sadd.s32 %s424, 1
    %p428 = scmp.eq.s32.totalorder %s27, 1
    %p429 = scmp.ne.s32.totalorder %s424, %s426
    %p430 = scmp.eq.s32.totalorder %s27, 0
    %p431 = por %p429, %p430
    %p432 = scmp.ne.s32.totalorder %s424, %s426
    %p433 = scmp.eq.s32.totalorder %s32, 1
    %p434 = por %p432, %p433
    %p435 = scmp.ne.s32.totalorder %s426, %s427
    %p436 = scmp.eq.s32.totalorder %s32, 0
    %p437 = por %p435, %p436
    %p438 = scmp.ne.s32.totalorder %s426, %s427
    %p439 = scmp.eq.s32.totalorder %s33, 1
    %p440 = por %p438, %p439
    %p442 = scmp.ne.s32.totalorder %s427, %s441
    %p443 = scmp.eq.s32.totalorder %s33, 0
    %p444 = por %p442, %p443
    %s446 = sadd.s32 %s445, 1
    %p449 = scmp.eq.s32.totalorder %s27, 1
    %p450 = scmp.ne.s32.totalorder %s445, %s447
    %p451 = scmp.eq.s32.totalorder %s27, 0
    %p452 = por %p450, %p451
    %p453 = scmp.ne.s32.totalorder %s445, %s447
    %p454 = scmp.eq.s32.totalorder %s32, 1
    %p455 = por %p453, %p454
    %p456 = scmp.ne.s32.totalorder %s447, %s448
    %p457 = scmp.eq.s32.totalorder %s32, 0
    %p458 = por %p456, %p457
    %p459 = scmp.ne.s32.totalorder %s447, %s448
    %p460 = scmp.eq.s32.totalorder %s33, 1
    %p461 = por %p459, %p460
    %p463 = scmp.ne.s32.totalorder %s448, %s462
    %p464 = scmp.eq.s32.totalorder %s33, 0
    %p465 = por %p463, %p464
    %s467 = sadd.s32 %s466, 1
    %p470 = scmp.eq.s32.totalorder %s27, 1
    %p471 = scmp.ne.s32.totalorder %s466, %s468
    %p472 = scmp.eq.s32.totalorder %s27, 0
    %p473 = por %p471, %p472
    %p474 = scmp.ne.s32.totalorder %s466, %s468
    %p475 = scmp.eq.s32.totalorder %s32, 1
    %p476 = por %p474, %p475
    %p477 = scmp.ne.s32.totalorder %s468, %s469
    %p478 = scmp.eq.s32.totalorder %s32, 0
    %p479 = por %p477, %p478
    %p480 = scmp.ne.s32.totalorder %s468, %s469
    %p481 = scmp.eq.s32.totalorder %s33, 1
    %p482 = por %p480, %p481
    %p484 = scmp.ne.s32.totalorder %s469, %s483
    %p485 = scmp.eq.s32.totalorder %s33, 0
    %p486 = por %p484, %p485
    %s488 = sadd.s32 %s487, 1
    %p491 = scmp.eq.s32.totalorder %s27, 1
    %p492 = scmp.ne.s32.totalorder %s487, %s489
    %p493 = scmp.eq.s32.totalorder %s27, 0
    %p494 = por %p492, %p493
    %p495 = scmp.ne.s32.totalorder %s487, %s489
    %p496 = scmp.eq.s32.totalorder %s32, 1
    %p497 = por %p495, %p496
    %p498 = scmp.ne.s32.totalorder %s489, %s490
    %p499 = scmp.eq.s32.totalorder %s32, 0
    %p500 = por %p498, %p499
    %p501 = scmp.ne.s32.totalorder %s489, %s490
    %p502 = scmp.eq.s32.totalorder %s33, 1
    %p503 = por %p501, %p502
    %p505 = scmp.ne.s32.totalorder %s490, %s504
    %p506 = scmp.eq.s32.totalorder %s33, 0
    %p507 = por %p505, %p506
    %s508 = ssub.s32 %s34, %s46
    %s509 = ssub.s32 %s35, %s42
    %s510 = sor.u32 %s508, %s509
    %p511 = scmp.eq.s32.totalorder %s510, 0
    %s513 = sadd.s32 %s512, 1
    %s514 = scalar_select %p511, %s512, %s513
    %p517 = pneg %p511
    %p518 = scmp.eq.s32.totalorder %s27, 1
    %p519 = por %p517, %p518
    %p520 = scmp.ne.s32.totalorder %s512, %s515
    %p521 = scmp.eq.s32.totalorder %s27, 0
    %p522 = por %p520, %p521
    %p523 = scmp.ne.s32.totalorder %s512, %s515
    %p524 = scmp.eq.s32.totalorder %s32, 1
    %p525 = por %p523, %p524
    %p526 = scmp.ne.s32.totalorder %s515, %s516
    %p527 = scmp.eq.s32.totalorder %s32, 0
    %p528 = por %p526, %p527
    %p529 = scmp.ne.s32.totalorder %s515, %s516
    %p530 = scmp.eq.s32.totalorder %s33, 1
    %p531 = por %p529, %p530
    %p533 = scmp.ne.s32.totalorder %s516, %s532
    %p534 = scmp.eq.s32.totalorder %s33, 0
    %p535 = por %p533, %p534
    %p536 = scmp.le.s32.totalorder 1, %s27
    %p537 = scmp.lt.s32.totalorder %s27, 3
    %p538 = pnand %p536, %p537
    %p539 = pneg %p538
    // Predicated region
    $region9: #{decoder_forward.3} parent=5 // pred_check
      _
    $region10: #{decoder_forward.3} parent=5 // pred_check_branch
      %541 = sbr.rel (%p538) target = $region12
    $region11: #{decoder_forward.3} parent=5 // pred_region
      %s542 = ssub.s32 %s27, 1
      // Predicated region
      $region13: #{decoder_forward.3} parent=11 // pred_check
        %p543 = pneg %p164
      $region14: #{decoder_forward.3} parent=11 // pred_check_branch
        %545 = sbr.rel (%p543) target = $region16
      $region15: #{decoder_forward.3} parent=11 // pred_region
        _
      $region16: #{decoder_forward.3} parent=11 // pred_fallthru
        _
      // Predicated region
      $region17: #{decoder_forward.3} parent=11 // pred_check
        %p546 = pneg %p185
      $region18: #{decoder_forward.3} parent=11 // pred_check_branch
        %548 = sbr.rel (%p546) target = $region20
      $region19: #{decoder_forward.3} parent=11 // pred_region
        _
      $region20: #{decoder_forward.3} parent=11 // pred_fallthru
        _
      // Predicated region
      $region21: #{decoder_forward.3} parent=11 // pred_check
        %p549 = pneg %p206
      $region22: #{decoder_forward.3} parent=11 // pred_check_branch
        %551 = sbr.rel (%p549) target = $region24
      $region23: #{decoder_forward.3} parent=11 // pred_region
        _
      $region24: #{decoder_forward.3} parent=11 // pred_fallthru
        _
      // Predicated region
      $region25: #{decoder_forward.3} parent=11 // pred_check
        %p552 = pneg %p227
      $region26: #{decoder_forward.3} parent=11 // pred_check_branch
        %554 = sbr.rel (%p552) target = $region28
      $region27: #{decoder_forward.3} parent=11 // pred_region
        _
      $region28: #{decoder_forward.3} parent=11 // pred_fallthru
        _
      // Predicated region
      $region29: #{decoder_forward.3} parent=11 // pred_check
        %p555 = pneg %p248
      $region30: #{decoder_forward.3} parent=11 // pred_check_branch
        %557 = sbr.rel (%p555) target = $region32
      $region31: #{decoder_forward.3} parent=11 // pred_region
        _
      $region32: #{decoder_forward.3} parent=11 // pred_fallthru
        _
      // Predicated region
      $region33: #{decoder_forward.3} parent=11 // pred_check
        %p558 = pneg %p269
      $region34: #{decoder_forward.3} parent=11 // pred_check_branch
        %560 = sbr.rel (%p558) target = $region36
      $region35: #{decoder_forward.3} parent=11 // pred_region
        _
      $region36: #{decoder_forward.3} parent=11 // pred_fallthru
        _
      // Predicated region
      $region37: #{decoder_forward.3} parent=11 // pred_check
        %p561 = pneg %p290
      $region38: #{decoder_forward.3} parent=11 // pred_check_branch
        %563 = sbr.rel (%p561) target = $region40
      $region39: #{decoder_forward.3} parent=11 // pred_region
        _
      $region40: #{decoder_forward.3} parent=11 // pred_fallthru
        _
      // Predicated region
      $region41: #{decoder_forward.3} parent=11 // pred_check
        %p564 = pneg %p311
      $region42: #{decoder_forward.3} parent=11 // pred_check_branch
        %566 = sbr.rel (%p564) target = $region44
      $region43: #{decoder_forward.3} parent=11 // pred_region
        _
      $region44: #{decoder_forward.3} parent=11 // pred_fallthru
        _
      // Predicated region
      $region45: #{decoder_forward.3} parent=11 // pred_check
        %p567 = pneg %p332
      $region46: #{decoder_forward.3} parent=11 // pred_check_branch
        %569 = sbr.rel (%p567) target = $region48
      $region47: #{decoder_forward.3} parent=11 // pred_region
        _
      $region48: #{decoder_forward.3} parent=11 // pred_fallthru
        _
      // Predicated region
      $region49: #{decoder_forward.3} parent=11 // pred_check
        %p570 = pneg %p353
      $region50: #{decoder_forward.3} parent=11 // pred_check_branch
        %572 = sbr.rel (%p570) target = $region52
      $region51: #{decoder_forward.3} parent=11 // pred_region
        _
      $region52: #{decoder_forward.3} parent=11 // pred_fallthru
        _
      // Predicated region
      $region53: #{decoder_forward.3} parent=11 // pred_check
        %p573 = pneg %p374
      $region54: #{decoder_forward.3} parent=11 // pred_check_branch
        %575 = sbr.rel (%p573) target = $region56
      $region55: #{decoder_forward.3} parent=11 // pred_region
        _
      $region56: #{decoder_forward.3} parent=11 // pred_fallthru
        _
      // Predicated region
      $region57: #{decoder_forward.3} parent=11 // pred_check
        %p576 = pneg %p395
      $region58: #{decoder_forward.3} parent=11 // pred_check_branch
        %578 = sbr.rel (%p576) target = $region60
      $region59: #{decoder_forward.3} parent=11 // pred_region
        _
      $region60: #{decoder_forward.3} parent=11 // pred_fallthru
        _
      // Predicated region
      $region61: #{decoder_forward.3} parent=11 // pred_check
        %p579 = pneg %p416
      $region62: #{decoder_forward.3} parent=11 // pred_check_branch
        %581 = sbr.rel (%p579) target = $region64
      $region63: #{decoder_forward.3} parent=11 // pred_region
        _
      $region64: #{decoder_forward.3} parent=11 // pred_fallthru
        _
      // Predicated region
      $region65: #{decoder_forward.3} parent=11 // pred_check
        %p582 = pneg %p437
      $region66: #{decoder_forward.3} parent=11 // pred_check_branch
        %584 = sbr.rel (%p582) target = $region68
      $region67: #{decoder_forward.3} parent=11 // pred_region
        _
      $region68: #{decoder_forward.3} parent=11 // pred_fallthru
        _
      // Predicated region
      $region69: #{decoder_forward.3} parent=11 // pred_check
        %p585 = pneg %p458
      $region70: #{decoder_forward.3} parent=11 // pred_check_branch
        %587 = sbr.rel (%p585) target = $region72
      $region71: #{decoder_forward.3} parent=11 // pred_region
        _
      $region72: #{decoder_forward.3} parent=11 // pred_fallthru
        _
      // Predicated region
      $region73: #{decoder_forward.3} parent=11 // pred_check
        %p588 = pneg %p479
      $region74: #{decoder_forward.3} parent=11 // pred_check_branch
        %590 = sbr.rel (%p588) target = $region76
      $region75: #{decoder_forward.3} parent=11 // pred_region
        _
      $region76: #{decoder_forward.3} parent=11 // pred_fallthru
        _
      // Predicated region
      $region77: #{decoder_forward.3} parent=11 // pred_check
        %p591 = pneg %p500
      $region78: #{decoder_forward.3} parent=11 // pred_check_branch
        %593 = sbr.rel (%p591) target = $region80
      $region79: #{decoder_forward.3} parent=11 // pred_region
        _
      $region80: #{decoder_forward.3} parent=11 // pred_fallthru
        _
    $region12: #{decoder_forward.3} parent=5 // pred_fallthru
      _
    %p594 = scmp.lt.s32.totalorder %s27, 2
    // Predicated region
    $region81: #{decoder_forward.3} parent=5 // pred_check
      %p595 = pneg %p594
    $region82: #{decoder_forward.3} parent=5 // pred_check_branch
      %597 = sbr.rel (%p595) target = $region84
    $region83: #{decoder_forward.3} parent=5 // pred_region
      // Predicated region
      $region85: #{decoder_forward.3} parent=83 // pred_check
        %p598 = pneg %p59
      $region86: #{decoder_forward.3} parent=83 // pred_check_branch
        %600 = sbr.rel (%p598) target = $region88
      $region87: #{decoder_forward.3} parent=83 // pred_region
        %p601 = scmp.lt.s32.totalorder %s34, 1
        %s602 = scalar_select %p601, %s34, 1
        %s603 = smul.addr %s602, 2
        %s604 = smul.addr %s603, 4
        %s605 = scalar_lea.vmem %s0, %s604
      $region88: #{decoder_forward.3} parent=83 // pred_fallthru
        _
      // Predicated region
      $region89: #{decoder_forward.3} parent=83 // pred_check
        %p606 = pneg %p85
      $region90: #{decoder_forward.3} parent=83 // pred_check_branch
        %608 = sbr.rel (%p606) target = $region92
      $region91: #{decoder_forward.3} parent=83 // pred_region
        %p609 = scmp.lt.s32.totalorder %s34, 1
        %s610 = scalar_select %p609, %s34, 1
        %s611 = smul.addr %s610, 2
        %s612 = smul.addr %s611, 4
        %s613 = scalar_lea.vmem %s1, %s612
      $region92: #{decoder_forward.3} parent=83 // pred_fallthru
        _
      // Predicated region
      $region93: #{decoder_forward.3} parent=83 // pred_check
        %p614 = pneg %p111
      $region94: #{decoder_forward.3} parent=83 // pred_check_branch
        %616 = sbr.rel (%p614) target = $region96
      $region95: #{decoder_forward.3} parent=83 // pred_region
        %p617 = scmp.lt.s32.totalorder %s34, 1
        %s618 = scalar_select %p617, %s34, 1
        %s619 = scalar_lea.vmem %s2, %s618
      $region96: #{decoder_forward.3} parent=83 // pred_fallthru
        _
      // Predicated region
      $region97: #{decoder_forward.3} parent=83 // pred_check
        %p620 = pneg %p137
      $region98: #{decoder_forward.3} parent=83 // pred_check_branch
        %622 = sbr.rel (%p620) target = $region100
      $region99: #{decoder_forward.3} parent=83 // pred_region
        %p623 = scmp.lt.s32.totalorder %s34, 1
        %s624 = scalar_select %p623, %s34, 1
        %s625 = scalar_lea.vmem %s3, %s624
      $region100: #{decoder_forward.3} parent=83 // pred_fallthru
        _
    $region84: #{decoder_forward.3} parent=5 // pred_fallthru
      _
    %p626 = scmp.le.s32.totalorder 1, %s27
    %p627 = scmp.lt.s32.totalorder %s27, 3
    %p628 = pnand %p626, %p627
    %p629 = pneg %p628
    // Predicated region
    $region101: #{decoder_forward.3} parent=5 // pred_check
      _
    $region102: #{decoder_forward.3} parent=5 // pred_check_branch
      %631 = sbr.rel (%p628) target = $region104
    $region103: #{decoder_forward.3} parent=5 // pred_region
      %s632 = ssub.s32 %s27, 1
      %p633 = scmp.lt.s32.totalorder %s36, 1
      %s634 = scalar_select %p633, %s36, 1
      %s635 = smul.addr %s634, 2
      %s636 = smul.addr %s635, 4
      %s637 = scalar_lea.vmem %s0, %s636
      %p638 = pneg %p65
      %p639 = pneg %p62
      %p640 = scmp.lt.s32.totalorder %s36, 1
      %s641 = scalar_select %p640, %s36, 1
      %s642 = smul.addr %s641, 2
      %s643 = smul.addr %s642, 4
      %s644 = scalar_lea.vmem %s1, %s643
      %p645 = pneg %p91
      %p646 = pneg %p88
      %p647 = scmp.lt.s32.totalorder %s36, 1
      %s648 = scalar_select %p647, %s36, 1
      %s649 = scalar_lea.vmem %s2, %s648
      %p650 = pneg %p117
      %p651 = pneg %p114
      %p652 = scmp.lt.s32.totalorder %s36, 1
      %s653 = scalar_select %p652, %s36, 1
      %s654 = scalar_lea.vmem %s3, %s653
      %p655 = pneg %p143
      %p656 = pneg %p140
      %p657 = pneg %p164
      %p658 = pneg %p161
      %p659 = pneg %p185
      %p660 = pneg %p182
      %p661 = pneg %p206
      %p662 = pneg %p203
      %p663 = pneg %p227
      %p664 = pneg %p224
      %p665 = pneg %p248
      %p666 = pneg %p245
      %p667 = pneg %p269
      %p668 = pneg %p266
      %p669 = pneg %p290
      %p670 = pneg %p287
      %p671 = pneg %p311
      %p672 = pneg %p308
      %p673 = pneg %p332
      %p674 = pneg %p329
      %p675 = pneg %p353
      %p676 = pneg %p350
      %p677 = pneg %p374
      %p678 = pneg %p371
      %p679 = pneg %p395
      %p680 = pneg %p392
      %p681 = pneg %p416
      %p682 = pneg %p413
      %p683 = pneg %p437
      %p684 = pneg %p434
      %p685 = pneg %p458
      %p686 = pneg %p455
      %p687 = pneg %p479
      %p688 = pneg %p476
      %p689 = pneg %p500
      %p690 = pneg %p497
      %p691 = pneg %p528
      %p692 = pneg %p525
      %s693 = smul.u32 2, %s37
      %p694 = scmp.lt.s32.totalorder %s36, 1
      %s695 = scalar_select %p694, %s36, 1
      %p696 = scmp.lt.s32.totalorder %s693, 1
      %s697 = scalar_select %p696, %s693, 1
      %s698 = smul.addr %s695, 2
      %s699 = sadd.s32 %s697, %s698
      %s700 = smul.addr %s699, 4
      %s701 = scalar_lea.vmem %s21, %s700
      %p702 = scmp.lt.s32.totalorder %s36, 1
      %s703 = scalar_select %p702, %s36, 1
      %s704 = smul.addr %s703, 2
      %s705 = smul.addr %s704, 4
      %s706 = scalar_lea.vmem %s0, %s705
      %p707 = scmp.lt.s32.totalorder %s36, 1
      %s708 = scalar_select %p707, %s36, 1
      %s709 = smul.addr %s708, 2
      %s710 = smul.addr %s709, 4
      %s711 = scalar_lea.vmem %s1, %s710
      %p712 = scmp.lt.s32.totalorder %s36, 1
      %s713 = scalar_select %p712, %s36, 1
      %s714 = scalar_lea.vmem %s2, %s713
      %p715 = scmp.lt.s32.totalorder %s36, 1
      %s716 = scalar_select %p715, %s36, 1
      %s717 = scalar_lea.vmem %s3, %s716
      %s718 = smul.u32 2, %s37
      %p719 = scmp.lt.s32.totalorder %s36, 1
      %s720 = scalar_select %p719, %s36, 1
      %p721 = scmp.lt.s32.totalorder %s718, 1
      %s722 = scalar_select %p721, %s718, 1
      %s723 = smul.addr %s720, 2
      %s724 = sadd.s32 %s722, %s723
      %s725 = smul.addr %s724, 4
      %s726 = scalar_lea.vmem %s21, %s725
      %s727 = smul.u32 2, %s37
      %v729 = vld [vmem:[%s706] sm:$0xf]
      %v730 = vld [vmem:[%s706 + $0x4] sm:$0xf]
      %v731 = vlaneseq
      %v732 = vshrl.u32 %v731, 7
      %v733 = vadd.s32 %v732, 8
      %v734 = vlaneseq
      %v735 = vand.u32 %v734, 127
      %v736 = vld [vmem:[%s714] sm:$0x1]
      %vm737 = vcmp.gt.s32.totalorder %v735, %v732
      %vm738 = vcmp.gt.s32.totalorder %v735, %v733
      %v739 = vsel %vm737, -1e+09, 0.0
      %v740 = vsel %vm738, -1e+09, 0.0
      %v742 = vperm.slane %v736, 0
      %v744 = vadd.f32 %v742, %v739
      %v745 = vadd.f32 %v742, %v740
      %v746 = vld [vmem:[%s4] sm:$0xff]
      %v747 = vld [vmem:[%s4 + $0x8] sm:$0xf]
      %v748 = vld [vmem:[%s4 + $0xc] sm:$0xff]
      %v749 = vld [vmem:[%s4 + $0x14] sm:$0xf]
      %v750 = vld [vmem:[%s4 + $0x18] sm:$0xff]
      %v751 = vld [vmem:[%s4 + $0x20] sm:$0xf]
      %v752 = vld [vmem:[%s4 + $0x24] sm:$0xff]
      %v753 = vld [vmem:[%s4 + $0x2c] sm:$0xf]
      %v754 = vld [vmem:[%s4 + $0x30] sm:$0xff]
      %v755 = vld [vmem:[%s4 + $0x38] sm:$0xf]
      %v756 = vld [vmem:[%s4 + $0x3c] sm:$0xff]
      %v757 = vld [vmem:[%s4 + $0x44] sm:$0xf]
      %v758 = vld [vmem:[%s4 + $0x48] sm:$0xff]
      %v759 = vld [vmem:[%s4 + $0x50] sm:$0xf]
      %v760 = vld [vmem:[%s4 + $0x54] sm:$0xff]
      %v761 = vld [vmem:[%s4 + $0x5c] sm:$0xf]
      %v762 = vld [vmem:[%s4 + $0x60] sm:$0xff]
      %v763 = vld [vmem:[%s4 + $0x68] sm:$0xf]
      %v764 = vld [vmem:[%s4 + $0x6c] sm:$0xff]
      %v765 = vld [vmem:[%s4 + $0x74] sm:$0xf]
      %v766 = vld [vmem:[%s4 + $0x78] sm:$0xff]
      %v767 = vld [vmem:[%s4 + $0x80] sm:$0xf]
      %v768 = vld [vmem:[%s4 + $0x84] sm:$0xff]
      %v769 = vld [vmem:[%s4 + $0x8c] sm:$0xf]
      %v770 = vld [vmem:[%s4 + $0x90] sm:$0xff]
      %v771 = vld [vmem:[%s4 + $0x98] sm:$0xf]
      %v772 = vld [vmem:[%s4 + $0x9c] sm:$0xff]
      %v773 = vld [vmem:[%s4 + $0xa4] sm:$0xf]
      %v774 = vld [vmem:[%s4 + $0xa8] sm:$0xff]
      %v775 = vld [vmem:[%s4 + $0xb0] sm:$0xf]
      %v776 = vld [vmem:[%s4 + $0xb4] sm:$0xff]
      %v777 = vld [vmem:[%s4 + $0xbc] sm:$0xf]
      %v780 = vunpack.c.l.b16 %v729
      %v781 = vunpack.c.l.b16 %v730
      %v782 = vpack.c.b16 %v781, %v780
      %v816 = vunpack.c.l.b16 %v746
      %v817 = vunpack.c.h.b16 %v746
      %v818 = vunpack.c.l.b16 %v747
      %v819 = vunpack.c.l.b16 %v748
      %v820 = vunpack.c.h.b16 %v748
      %v821 = vunpack.c.l.b16 %v749
      %v822 = vunpack.c.l.b16 %v750
      %v823 = vunpack.c.h.b16 %v750
      %v824 = vunpack.c.l.b16 %v751
      %v825 = vunpack.c.l.b16 %v752
      %v826 = vunpack.c.h.b16 %v752
      %v827 = vunpack.c.l.b16 %v753
      %v828 = vunpack.c.l.b16 %v754
      %v829 = vunpack.c.h.b16 %v754
      %v830 = vunpack.c.l.b16 %v755
      %v831 = vunpack.c.l.b16 %v756
      %v832 = vunpack.c.h.b16 %v756
      %v833 = vunpack.c.l.b16 %v757
      %v834 = vunpack.c.l.b16 %v758
      %v835 = vunpack.c.h.b16 %v758
      %v836 = vunpack.c.l.b16 %v759
      %v837 = vunpack.c.l.b16 %v760
      %v838 = vunpack.c.h.b16 %v760
      %v839 = vunpack.c.l.b16 %v761
      %v840 = vunpack.c.l.b16 %v762
      %v841 = vunpack.c.h.b16 %v762
      %v842 = vunpack.c.l.b16 %v763
      %v843 = vunpack.c.l.b16 %v764
      %v844 = vunpack.c.h.b16 %v764
      %v845 = vunpack.c.l.b16 %v765
      %v846 = vunpack.c.l.b16 %v766
      %v847 = vunpack.c.h.b16 %v766
      %v848 = vunpack.c.l.b16 %v767
      %v849 = vunpack.c.l.b16 %v768
      %v850 = vunpack.c.h.b16 %v768
      %v851 = vunpack.c.l.b16 %v769
      %v852 = vunpack.c.l.b16 %v770
      %v853 = vunpack.c.h.b16 %v770
      %v854 = vunpack.c.l.b16 %v771
      %v855 = vunpack.c.l.b16 %v772
      %v856 = vunpack.c.h.b16 %v772
      %v857 = vunpack.c.l.b16 %v773
      %v858 = vunpack.c.l.b16 %v774
      %v859 = vunpack.c.h.b16 %v774
      %v860 = vunpack.c.l.b16 %v775
      %v861 = vunpack.c.l.b16 %v776
      %v862 = vunpack.c.h.b16 %v776
      %v863 = vunpack.c.l.b16 %v777
      %v864 = vpack.c.b16 %v819, %v816
      %v865 = vpack.c.b16 %v820, %v817
      %v866 = vpack.c.b16 %v821, %v818
      %v867 = vpack.c.b16 %v825, %v822
      %v868 = vpack.c.b16 %v826, %v823
      %v869 = vpack.c.b16 %v827, %v824
      %v870 = vpack.c.b16 %v831, %v828
      %v871 = vpack.c.b16 %v832, %v829
      %v872 = vpack.c.b16 %v833, %v830
      %v873 = vpack.c.b16 %v837, %v834
      %v874 = vpack.c.b16 %v838, %v835
      %v875 = vpack.c.b16 %v839, %v836
      %v876 = vpack.c.b16 %v843, %v840
      %v877 = vpack.c.b16 %v844, %v841
      %v878 = vpack.c.b16 %v845, %v842
      %v879 = vpack.c.b16 %v849, %v846
      %v880 = vpack.c.b16 %v850, %v847
      %v881 = vpack.c.b16 %v851, %v848
      %v882 = vpack.c.b16 %v855, %v852
      %v883 = vpack.c.b16 %v856, %v853
      %v884 = vpack.c.b16 %v857, %v854
      %v885 = vpack.c.b16 %v861, %v858
      %v886 = vpack.c.b16 %v862, %v859
      %v887 = vpack.c.b16 %v863, %v860
      %912 = vmatpush.bf16.msra.mxu0 %v885
      %913 = vmatpush.bf16.msra.mxu0 %v882
      %914 = vmatpush.bf16.msra.mxu0 %v879
      %915 = vmatpush.bf16.msra.mxu0 %v876
      %916 = vmatpush.bf16.msra.mxu0 %v873
      %917 = vmatpush.bf16.msra.mxu0 %v870
      %918 = vmatpush.bf16.msra.mxu0 %v867
      %919 = vmatpush.bf16.msra.mxu0 %v864
      %920 = vmatmul.bf16.gmra.mxu0 %v782
      %v921 = vpop.f32.mrf.mxu0
      %v922 = vadd.f32 0.0, %v921
      %v923 = vpop.f32.mrf.mxu0
      %v924 = vadd.f32 0.0, %v923
      %925 = vdwg.mxu0
      %926 = vmatpush.bf16.msra.mxu0 %v886
      %927 = vmatpush.bf16.msra.mxu0 %v883
      %928 = vmatpush.bf16.msra.mxu0 %v880
      %929 = vmatpush.bf16.msra.mxu0 %v877
      %930 = vmatpush.bf16.msra.mxu0 %v874
      %931 = vmatpush.bf16.msra.mxu0 %v871
      %932 = vmatpush.bf16.msra.mxu0 %v868
      %933 = vmatpush.bf16.msra.mxu0 %v865
      %934 = vmatmul.bf16.gmra.mxu0 %v782
      %v935 = vpop.f32.mrf.mxu0
      %v936 = vadd.f32 0.0, %v935
      %v937 = vpop.f32.mrf.mxu0
      %v938 = vadd.f32 0.0, %v937
      %939 = vdwg.mxu0
      %940 = vmatpush.bf16.msra.mxu0 %v887
      %941 = vmatpush.bf16.msra.mxu0 %v884
      %942 = vmatpush.bf16.msra.mxu0 %v881
      %943 = vmatpush.bf16.msra.mxu0 %v878
      %944 = vmatpush.bf16.msra.mxu0 %v875
      %945 = vmatpush.bf16.msra.mxu0 %v872
      %946 = vmatpush.bf16.msra.mxu0 %v869
      %947 = vmatpush.bf16.msra.mxu0 %v866
      %948 = vmatmul.bf16.gmra.mxu0 %v782
      %v949 = vpop.f32.mrf.mxu0
      %v950 = vadd.f32 0.0, %v949
      %v951 = vpop.f32.mrf.mxu0
      %v952 = vadd.f32 0.0, %v951
      %953 = vdwg.mxu0
      %v954 = vmul.f32 %v922, 0.088388346
      %v955 = vmul.f32 %v924, 0.088388346
      %v956 = vpack.c.bf16 %v936, %v936
      %v957 = vpack.c.bf16 %v938, %v938
      %v958 = vpack.c.bf16 %v950, %v950
      %v959 = vpack.c.bf16 %v952, %v952
      %v960 = vpack.c.bf16 %v954, %v954
      %v961 = vpack.c.bf16 %v955, %v955
      %v964 = vunpack.c.l.b16 %v960
      %v965 = vunpack.c.l.b16 %v961
      %v966 = vpack.c.b16 %v965, %v964
      %v969 = vunpack.c.l.b16 %v956
      %v970 = vunpack.c.l.b16 %v957
      %v971 = vpack.c.b16 %v970, %v969
      %vm972 = vcmask 523264
      %v974 = vsel %vm972, %v966, 0
      %v977 = vsel %vm972, %v971, 0
      %979 = vmatpush.bf16.xpose.msra.mxu0 0
      %980 = vmatpush.bf16.xpose.msra.mxu0 0
      %981 = vmatpush.bf16.xpose.msra.mxu0 0
      %982 = vmatpush.bf16.xpose.msra.mxu0 0
      %983 = vmatpush.bf16.xpose.msra.mxu0 0
      %984 = vmatpush.bf16.xpose.msra.mxu0 0
      %985 = vmatpush.bf16.xpose.msra.mxu0 0
      %986 = vmatpush.bf16.xpose.msra.mxu0 %v977
      %987 = vmatmul.bf16.gmra.mxu0 %v974
      %v988 = vpop.f32.mrf.mxu0
      %v989 = vadd.f32 %v744, %v988
      %v990 = vpop.f32.mrf.mxu0
      %v991 = vadd.f32 %v745, %v990
      %992 = vdwg.mxu0
      %vm993 = vcmask 130048
      %v994 = vsel %vm993, %v989, -inf
      %995 = vmax.xlane.f32.xlu0 %v994
      %v996 = vpop.xlane.xlu0 %995
      %v997 = vsel %vm993, %v991, -inf
      %998 = vmax.xlane.f32.xlu0 %v997
      %v999 = vpop.xlane.xlu0 %998
      %v1000 = vsub.f32 %v989, %v996
      %v1001 = vsub.f32 %v991, %v999
      %v1002 = vmul.f32 %v1000, 1.442695
      %v1003 = vpow.pop %v1002
      %v1004 = vmul.f32 %v1001, 1.442695
      %v1005 = vpow.pop %v1004
      %v1006 = vsel %vm993, %v1003, 0.0
      %1007 = vadd.xlane.f32.xlu0 %v1006
      %v1008 = vpop.xlane.xlu0 %1007
      %v1009 = vsel %vm993, %v1005, 0.0
      %1010 = vadd.xlane.f32.xlu0 %v1009
      %v1011 = vpop.xlane.xlu0 %1010
      %v1012 = vrcp.pop %v1008
      %v1013 = vrcp.pop %v1011
      %v1014 = vmul.f32 %v1003, %v1012
      %v1015 = vmul.f32 %v1005, %v1013
      %v1016 = vpack.c.bf16 %v1015, %v1014
      %v1019 = vunpack.c.l.b16 %v958
      %v1020 = vunpack.c.l.b16 %v959
      %v1021 = vpack.c.b16 %v1020, %v1019
      %v1024 = vsel %vm993, %v1016, 0
      %1026 = vmatpush.bf16.msra.mxu0 0
      %1027 = vmatpush.bf16.msra.mxu0 0
      %1028 = vmatpush.bf16.msra.mxu0 0
      %1029 = vmatpush.bf16.msra.mxu0 0
      %1030 = vmatpush.bf16.msra.mxu0 0
      %1031 = vmatpush.bf16.msra.mxu0 0
      %1032 = vmatpush.bf16.msra.mxu0 0
      %1033 = vmatpush.bf16.msra.mxu0 %v1021
      %1034 = vmatmul.bf16.gmra.mxu0 %v1024
      %v1035 = vpop.f32.mrf.mxu0
      %v1036 = vadd.f32 0.0, %v1035
      %v1037 = vpop.f32.mrf.mxu0
      %v1038 = vadd.f32 0.0, %v1037
      %1039 = vdwg.mxu0
      %v1040 = vpack.c.bf16 %v1036, %v1036
      %v1041 = vpack.c.bf16 %v1038, %v1038
      %vm1042 = vcmask 519168
      %1043 = vst.msk [vmem:[#allocation2] sm:$0xf] %vm1042, %v1040
      %1044 = vst.msk [vmem:[#allocation2 + $0x4] sm:$0xf] %vm1042, %v1041
      %1045 = vrot.lane.b32.xlu0 %v966, 64
      %v1046 = vpop.permute.xlu0 %1045
      %1047 = vrot.lane.b32.xlu0 %v971, 64
      %v1048 = vpop.permute.xlu0 %1047
      %v1050 = vsel %vm972, %v1046, 0
      %v1053 = vsel %vm972, %v1048, 0
      %1055 = vmatpush.bf16.xpose.msra.mxu0 0
      %1056 = vmatpush.bf16.xpose.msra.mxu0 0
      %1057 = vmatpush.bf16.xpose.msra.mxu0 0
      %1058 = vmatpush.bf16.xpose.msra.mxu0 0
      %1059 = vmatpush.bf16.xpose.msra.mxu0 0
      %1060 = vmatpush.bf16.xpose.msra.mxu0 0
      %1061 = vmatpush.bf16.xpose.msra.mxu0 0
      %1062 = vmatpush.bf16.xpose.msra.mxu0 %v1053
      %1063 = vmatmul.bf16.gmra.mxu0 %v1050
      %v1064 = vpop.f32.mrf.mxu0
      %v1065 = vadd.f32 %v744, %v1064
      %v1066 = vpop.f32.mrf.mxu0
      %v1067 = vadd.f32 %v745, %v1066
      %1068 = vdwg.mxu0
      %v1069 = vsel %vm993, %v1065, -inf
      %1070 = vmax.xlane.f32.xlu0 %v1069
      %v1071 = vpop.xlane.xlu0 %1070
      %v1072 = vsel %vm993, %v1067, -inf
      %1073 = vmax.xlane.f32.xlu0 %v1072
      %v1074 = vpop.xlane.xlu0 %1073
      %v1075 = vsub.f32 %v1065, %v1071
      %v1076 = vsub.f32 %v1067, %v1074
      %v1077 = vmul.f32 %v1075, 1.442695
      %v1078 = vpow.pop %v1077
      %v1079 = vmul.f32 %v1076, 1.442695
      %v1080 = vpow.pop %v1079
      %v1081 = vsel %vm993, %v1078, 0.0
      %1082 = vadd.xlane.f32.xlu0 %v1081
      %v1083 = vpop.xlane.xlu0 %1082
      %v1084 = vsel %vm993, %v1080, 0.0
      %1085 = vadd.xlane.f32.xlu0 %v1084
      %v1086 = vpop.xlane.xlu0 %1085
      %v1087 = vrcp.pop %v1083
      %v1088 = vrcp.pop %v1086
      %v1089 = vmul.f32 %v1078, %v1087
      %v1090 = vmul.f32 %v1080, %v1088
      %v1091 = vpack.c.bf16 %v1090, %v1089
      %1092 = vrot.lane.b32.xlu0 %v1021, 64
      %v1093 = vpop.permute.xlu0 %1092
      %v1096 = vsel %vm993, %v1091, 0
      %1098 = vmatpush.bf16.msra.mxu0 0
      %1099 = vmatpush.bf16.msra.mxu0 0
      %1100 = vmatpush.bf16.msra.mxu0 0
      %1101 = vmatpush.bf16.msra.mxu0 0
      %1102 = vmatpush.bf16.msra.mxu0 0
      %1103 = vmatpush.bf16.msra.mxu0 0
      %1104 = vmatpush.bf16.msra.mxu0 0
      %1105 = vmatpush.bf16.msra.mxu0 %v1093
      %1106 = vmatmul.bf16.gmra.mxu0 %v1096
      %v1107 = vpop.f32.mrf.mxu0
      %v1108 = vadd.f32 0.0, %v1107
      %v1109 = vpop.f32.mrf.mxu0
      %v1110 = vadd.f32 0.0, %v1109
      %1111 = vdwg.mxu0
      %v1112 = vpack.c.bf16 %v1108, %v1108
      %v1113 = vpack.c.bf16 %v1110, %v1110
      %1116 = vrot.lane.b32.xlu0 %v1112, 64
      %v1117 = vpop.permute.xlu0 %1116
      %1118 = vrot.lane.b32.xlu0 %v1113, 64
      %v1119 = vpop.permute.xlu0 %1118
      %vm1122 = vcmask 1043968
      %1123 = vst.msk [vmem:[#allocation2] sm:$0xf] %vm1122, %v1117
      %1124 = vst.msk [vmem:[#allocation2 + $0x4] sm:$0xf] %vm1122, %v1119
      %v1125 = vld [vmem:[#allocation2] sm:$0xf]
      %v1126 = vld [vmem:[#allocation2 + $0x4] sm:$0xf]
      %v1127 = vld [vmem:[%s5] sm:$0xf]
      %v1128 = vld [vmem:[%s5 + $0x4] sm:$0xf]
      %v1129 = vld [vmem:[%s5 + $0x8] sm:$0xf]
      %v1130 = vld [vmem:[%s5 + $0xc] sm:$0xf]
      %v1131 = vld [vmem:[%s5 + $0x10] sm:$0xf]
      %v1132 = vld [vmem:[%s5 + $0x14] sm:$0xf]
      %v1133 = vld [vmem:[%s5 + $0x18] sm:$0xf]
      %v1134 = vld [vmem:[%s5 + $0x1c] sm:$0xf]
      %v1135 = vld [vmem:[%s5 + $0x20] sm:$0xf]
      %v1136 = vld [vmem:[%s5 + $0x24] sm:$0xf]
      %v1137 = vld [vmem:[%s5 + $0x28] sm:$0xf]
      %v1138 = vld [vmem:[%s5 + $0x2c] sm:$0xf]
      %v1139 = vld [vmem:[%s5 + $0x30] sm:$0xf]
      %v1140 = vld [vmem:[%s5 + $0x34] sm:$0xf]
      %v1141 = vld [vmem:[%s5 + $0x38] sm:$0xf]
      %v1142 = vld [vmem:[%s5 + $0x3c] sm:$0xf]
      %v1143 = vld [vmem:[%s6] sm:$0x1]
      %v1145 = vperm.slane %v1143, 0
      %v1149 = vunpack.c.l.b16 %v1125
      %v1150 = vunpack.c.l.b16 %v1126
      %v1151 = vpack.c.b16 %v1150, %v1149
      %v1169 = vunpack.c.l.b16 %v1127
      %v1170 = vunpack.c.l.b16 %v1128
      %v1171 = vunpack.c.l.b16 %v1129
      %v1172 = vunpack.c.l.b16 %v1130
      %v1173 = vunpack.c.l.b16 %v1131
      %v1174 = vunpack.c.l.b16 %v1132
      %v1175 = vunpack.c.l.b16 %v1133
      %v1176 = vunpack.c.l.b16 %v1134
      %v1177 = vunpack.c.l.b16 %v1135
      %v1178 = vunpack.c.l.b16 %v1136
      %v1179 = vunpack.c.l.b16 %v1137
      %v1180 = vunpack.c.l.b16 %v1138
      %v1181 = vunpack.c.l.b16 %v1139
      %v1182 = vunpack.c.l.b16 %v1140
      %v1183 = vunpack.c.l.b16 %v1141
      %v1184 = vunpack.c.l.b16 %v1142
      %v1185 = vpack.c.b16 %v1170, %v1169
      %v1186 = vpack.c.b16 %v1172, %v1171
      %v1187 = vpack.c.b16 %v1174, %v1173
      %v1188 = vpack.c.b16 %v1176, %v1175
      %v1189 = vpack.c.b16 %v1178, %v1177
      %v1190 = vpack.c.b16 %v1180, %v1179
      %v1191 = vpack.c.b16 %v1182, %v1181
      %v1192 = vpack.c.b16 %v1184, %v1183
      %1201 = vmatpush.bf16.msra.mxu0 %v1192
      %1202 = vmatpush.bf16.msra.mxu0 %v1191
      %1203 = vmatpush.bf16.msra.mxu0 %v1190
      %1204 = vmatpush.bf16.msra.mxu0 %v1189
      %1205 = vmatpush.bf16.msra.mxu0 %v1188
      %1206 = vmatpush.bf16.msra.mxu0 %v1187
      %1207 = vmatpush.bf16.msra.mxu0 %v1186
      %1208 = vmatpush.bf16.msra.mxu0 %v1185
      %1209 = vmatmul.bf16.gmra.mxu0 %v1151
      %v1210 = vpop.f32.mrf.mxu0
      %v1211 = vadd.f32 %v1145, %v1210
      %v1212 = vpop.f32.mrf.mxu0
      %v1213 = vadd.f32 %v1145, %v1212
      %1214 = vdwg.mxu0
      %v1215 = vunpack.c.l.bf16 %v729
      %v1216 = vunpack.c.l.bf16 %v730
      %v1217 = vadd.f32 %v1211, %v1215
      %v1218 = vadd.f32 %v1213, %v1216
      %v1219 = vld [vmem:[%s7] sm:$0x1]
      %v1220 = vld [vmem:[%s8] sm:$0x1]
      %1221 = vadd.xlane.f32.xlu0 %v1217
      %v1222 = vpop.xlane.xlu0 %1221
      %1223 = vadd.xlane.f32.xlu0 %v1218
      %v1224 = vpop.xlane.xlu0 %1223
      %v1225 = vrcp.pop 128.0
      %v1226 = vmul.f32 128.0, %v1225
      %v1227 = vsub.f32 1.0, %v1226
      %v1228 = vmul.f32 %v1225, %v1227
      %v1229 = vadd.f32 %v1225, %v1228
      %vm1230 = vweird.f32 %v1225
      %v1231 = vsel %vm1230, %v1225, %v1229
      %v1232 = vmul.f32 %v1222, %v1231
      %v1233 = vmul.f32 %v1224, %v1231
      %v1234 = vsub.f32 %v1217, %v1232
      %v1235 = vsub.f32 %v1218, %v1233
      %v1236 = vmul.f32 %v1234, %v1234
      %v1237 = vmul.f32 %v1235, %v1235
      %1238 = vadd.xlane.f32.xlu0 %v1236
      %v1239 = vpop.xlane.xlu0 %1238
      %1240 = vadd.xlane.f32.xlu0 %v1237
      %v1241 = vpop.xlane.xlu0 %1240
      %v1242 = vmul.f32 %v1239, %v1231
      %v1243 = vmul.f32 %v1241, %v1231
      %v1244 = vadd.f32 %v1242, 1e-06
      %v1245 = vadd.f32 %v1243, 1e-06
      %v1246 = vrsqrt.pop %v1244
      %v1247 = vmul.f32 %v1246, %v1244
      %v1248 = vmul.f32 %v1247, %v1246
      %v1249 = vmul.f32 0.5, %v1248
      %v1250 = vsub.f32 1.5, %v1249
      %v1251 = vmul.f32 %v1246, %v1250
      %vm1252 = vweird.f32 %v1244
      %vm1253 = vweird.f32 %v1246
      %vm1254 = vmor %vm1252, %vm1253
      %v1255 = vsel %vm1254, %v1246, %v1251
      %v1256 = vrsqrt.pop %v1245
      %v1257 = vmul.f32 %v1256, %v1245
      %v1258 = vmul.f32 %v1257, %v1256
      %v1259 = vmul.f32 0.5, %v1258
      %v1260 = vsub.f32 1.5, %v1259
      %v1261 = vmul.f32 %v1256, %v1260
      %vm1262 = vweird.f32 %v1245
      %vm1263 = vweird.f32 %v1256
      %vm1264 = vmor %vm1262, %vm1263
      %v1265 = vsel %vm1264, %v1256, %v1261
      %v1266 = vmul.f32 %v1234, %v1255
      %v1267 = vmul.f32 %v1235, %v1265
      %v1269 = vperm.slane %v1219, 0
      %v1271 = vmul.f32 %v1266, %v1269
      %v1272 = vmul.f32 %v1267, %v1269
      %v1274 = vperm.slane %v1220, 0
      %v1276 = vadd.f32 %v1271, %v1274
      %v1277 = vadd.f32 %v1272, %v1274
      %v1278 = vld [vmem:[%s711] sm:$0xf]
      %v1279 = vld [vmem:[%s711 + $0x4] sm:$0xf]
      %v1280 = vpack.c.bf16 %v1277, %v1276
      %v1281 = vld [vmem:[%s9] sm:$0xf]
      %v1282 = vld [vmem:[%s9 + $0x4] sm:$0xf]
      %v1283 = vld [vmem:[%s9 + $0x8] sm:$0xf]
      %v1284 = vld [vmem:[%s9 + $0xc] sm:$0xf]
      %v1285 = vld [vmem:[%s9 + $0x10] sm:$0xf]
      %v1286 = vld [vmem:[%s9 + $0x14] sm:$0xf]
      %v1287 = vld [vmem:[%s9 + $0x18] sm:$0xf]
      %v1288 = vld [vmem:[%s9 + $0x1c] sm:$0xf]
      %v1289 = vld [vmem:[%s9 + $0x20] sm:$0xf]
      %v1290 = vld [vmem:[%s9 + $0x24] sm:$0xf]
      %v1291 = vld [vmem:[%s9 + $0x28] sm:$0xf]
      %v1292 = vld [vmem:[%s9 + $0x2c] sm:$0xf]
      %v1293 = vld [vmem:[%s9 + $0x30] sm:$0xf]
      %v1294 = vld [vmem:[%s9 + $0x34] sm:$0xf]
      %v1295 = vld [vmem:[%s9 + $0x38] sm:$0xf]
      %v1296 = vld [vmem:[%s9 + $0x3c] sm:$0xf]
      %v1313 = vunpack.c.l.b16 %v1281
      %v1314 = vunpack.c.l.b16 %v1282
      %v1315 = vunpack.c.l.b16 %v1283
      %v1316 = vunpack.c.l.b16 %v1284
      %v1317 = vunpack.c.l.b16 %v1285
      %v1318 = vunpack.c.l.b16 %v1286
      %v1319 = vunpack.c.l.b16 %v1287
      %v1320 = vunpack.c.l.b16 %v1288
      %v1321 = vunpack.c.l.b16 %v1289
      %v1322 = vunpack.c.l.b16 %v1290
      %v1323 = vunpack.c.l.b16 %v1291
      %v1324 = vunpack.c.l.b16 %v1292
      %v1325 = vunpack.c.l.b16 %v1293
      %v1326 = vunpack.c.l.b16 %v1294
      %v1327 = vunpack.c.l.b16 %v1295
      %v1328 = vunpack.c.l.b16 %v1296
      %v1329 = vpack.c.b16 %v1314, %v1313
      %v1330 = vpack.c.b16 %v1316, %v1315
      %v1331 = vpack.c.b16 %v1318, %v1317
      %v1332 = vpack.c.b16 %v1320, %v1319
      %v1333 = vpack.c.b16 %v1322, %v1321
      %v1334 = vpack.c.b16 %v1324, %v1323
      %v1335 = vpack.c.b16 %v1326, %v1325
      %v1336 = vpack.c.b16 %v1328, %v1327
      %1345 = vmatpush.bf16.msra.mxu0 %v1336
      %1346 = vmatpush.bf16.msra.mxu0 %v1335
      %1347 = vmatpush.bf16.msra.mxu0 %v1334
      %1348 = vmatpush.bf16.msra.mxu0 %v1333
      %1349 = vmatpush.bf16.msra.mxu0 %v1332
      %1350 = vmatpush.bf16.msra.mxu0 %v1331
      %1351 = vmatpush.bf16.msra.mxu0 %v1330
      %1352 = vmatpush.bf16.msra.mxu0 %v1329
      %1353 = vmatmul.bf16.gmra.mxu0 %v1280
      %v1354 = vpop.f32.mrf.mxu0
      %v1355 = vadd.f32 0.0, %v1354
      %v1356 = vpop.f32.mrf.mxu0
      %v1357 = vadd.f32 0.0, %v1356
      %1358 = vdwg.mxu0
      %v1359 = vmul.f32 %v1355, 0.088388346
      %v1360 = vmul.f32 %v1357, 0.088388346
      %v1361 = vld [vmem:[%s10] sm:$0xff]
      %v1362 = vld [vmem:[%s10 + $0x8] sm:$0xff]
      %v1363 = vld [vmem:[%s10 + $0x10] sm:$0xff]
      %v1364 = vld [vmem:[%s10 + $0x18] sm:$0xff]
      %v1365 = vld [vmem:[%s10 + $0x20] sm:$0xff]
      %v1366 = vld [vmem:[%s10 + $0x28] sm:$0xff]
      %v1367 = vld [vmem:[%s10 + $0x30] sm:$0xff]
      %v1368 = vld [vmem:[%s10 + $0x38] sm:$0xff]
      %v1369 = vld [vmem:[%s10 + $0x40] sm:$0xff]
      %v1370 = vld [vmem:[%s10 + $0x48] sm:$0xff]
      %v1371 = vld [vmem:[%s10 + $0x50] sm:$0xff]
      %v1372 = vld [vmem:[%s10 + $0x58] sm:$0xff]
      %v1373 = vld [vmem:[%s10 + $0x60] sm:$0xff]
      %v1374 = vld [vmem:[%s10 + $0x68] sm:$0xff]
      %v1375 = vld [vmem:[%s10 + $0x70] sm:$0xff]
      %v1376 = vld [vmem:[%s10 + $0x78] sm:$0xff]
      %v1379 = vunpack.c.l.b16 %v1278
      %v1380 = vunpack.c.l.b16 %v1279
      %v1381 = vpack.c.b16 %v1380, %v1379
      %v1399 = vunpack.c.l.b16 %v1361
      %v1400 = vunpack.c.h.b16 %v1361
      %v1401 = vunpack.c.l.b16 %v1362
      %v1402 = vunpack.c.h.b16 %v1362
      %v1403 = vunpack.c.l.b16 %v1363
      %v1404 = vunpack.c.h.b16 %v1363
      %v1405 = vunpack.c.l.b16 %v1364
      %v1406 = vunpack.c.h.b16 %v1364
      %v1407 = vunpack.c.l.b16 %v1365
      %v1408 = vunpack.c.h.b16 %v1365
      %v1409 = vunpack.c.l.b16 %v1366
      %v1410 = vunpack.c.h.b16 %v1366
      %v1411 = vunpack.c.l.b16 %v1367
      %v1412 = vunpack.c.h.b16 %v1367
      %v1413 = vunpack.c.l.b16 %v1368
      %v1414 = vunpack.c.h.b16 %v1368
      %v1415 = vunpack.c.l.b16 %v1369
      %v1416 = vunpack.c.h.b16 %v1369
      %v1417 = vunpack.c.l.b16 %v1370
      %v1418 = vunpack.c.h.b16 %v1370
      %v1419 = vunpack.c.l.b16 %v1371
      %v1420 = vunpack.c.h.b16 %v1371
      %v1421 = vunpack.c.l.b16 %v1372
      %v1422 = vunpack.c.h.b16 %v1372
      %v1423 = vunpack.c.l.b16 %v1373
      %v1424 = vunpack.c.h.b16 %v1373
      %v1425 = vunpack.c.l.b16 %v1374
      %v1426 = vunpack.c.h.b16 %v1374
      %v1427 = vunpack.c.l.b16 %v1375
      %v1428 = vunpack.c.h.b16 %v1375
      %v1429 = vunpack.c.l.b16 %v1376
      %v1430 = vunpack.c.h.b16 %v1376
      %v1431 = vpack.c.b16 %v1401, %v1399
      %v1432 = vpack.c.b16 %v1402, %v1400
      %v1433 = vpack.c.b16 %v1405, %v1403
      %v1434 = vpack.c.b16 %v1406, %v1404
      %v1435 = vpack.c.b16 %v1409, %v1407
      %v1436 = vpack.c.b16 %v1410, %v1408
      %v1437 = vpack.c.b16 %v1413, %v1411
      %v1438 = vpack.c.b16 %v1414, %v1412
      %v1439 = vpack.c.b16 %v1417, %v1415
      %v1440 = vpack.c.b16 %v1418, %v1416
      %v1441 = vpack.c.b16 %v1421, %v1419
      %v1442 = vpack.c.b16 %v1422, %v1420
      %v1443 = vpack.c.b16 %v1425, %v1423
      %v1444 = vpack.c.b16 %v1426, %v1424
      %v1445 = vpack.c.b16 %v1429, %v1427
      %v1446 = vpack.c.b16 %v1430, %v1428
      %1463 = vmatpush.bf16.msra.mxu0 %v1445
      %1464 = vmatpush.bf16.msra.mxu0 %v1443
      %1465 = vmatpush.bf16.msra.mxu0 %v1441
      %1466 = vmatpush.bf16.msra.mxu0 %v1439
      %1467 = vmatpush.bf16.msra.mxu0 %v1437
      %1468 = vmatpush.bf16.msra.mxu0 %v1435
      %1469 = vmatpush.bf16.msra.mxu0 %v1433
      %1470 = vmatpush.bf16.msra.mxu0 %v1431
      %1471 = vmatmul.bf16.gmra.mxu0 %v1381
      %v1472 = vpop.f32.mrf.mxu0
      %v1473 = vadd.f32 0.0, %v1472
      %v1474 = vpop.f32.mrf.mxu0
      %v1475 = vadd.f32 0.0, %v1474
      %1476 = vdwg.mxu0
      %1477 = vmatpush.bf16.msra.mxu0 %v1446
      %1478 = vmatpush.bf16.msra.mxu0 %v1444
      %1479 = vmatpush.bf16.msra.mxu0 %v1442
      %1480 = vmatpush.bf16.msra.mxu0 %v1440
      %1481 = vmatpush.bf16.msra.mxu0 %v1438
      %1482 = vmatpush.bf16.msra.mxu0 %v1436
      %1483 = vmatpush.bf16.msra.mxu0 %v1434
      %1484 = vmatpush.bf16.msra.mxu0 %v1432
      %1485 = vmatmul.bf16.gmra.mxu0 %v1381
      %v1486 = vpop.f32.mrf.mxu0
      %v1487 = vadd.f32 0.0, %v1486
      %v1488 = vpop.f32.mrf.mxu0
      %v1489 = vadd.f32 0.0, %v1488
      %1490 = vdwg.mxu0
      %v1491 = vpack.c.bf16 %v1473, %v1473
      %v1492 = vpack.c.bf16 %v1475, %v1475
      %v1493 = vpack.c.bf16 %v1487, %v1487
      %v1494 = vpack.c.bf16 %v1489, %v1489
      %v1495 = vld [vmem:[%s717] sm:$0x1]
      %v1496 = vpack.c.bf16 %v1359, %v1359
      %v1497 = vpack.c.bf16 %v1360, %v1360
      %v1499 = vperm.slane %v1495, 0
      %v1503 = vunpack.c.l.b16 %v1496
      %v1504 = vunpack.c.l.b16 %v1497
      %v1505 = vpack.c.b16 %v1504, %v1503
      %v1508 = vunpack.c.l.b16 %v1491
      %v1509 = vunpack.c.l.b16 %v1492
      %v1510 = vpack.c.b16 %v1509, %v1508
      %v1512 = vsel %vm972, %v1505, 0
      %v1515 = vsel %vm972, %v1510, 0
      %1517 = vmatpush.bf16.xpose.msra.mxu0 0
      %1518 = vmatpush.bf16.xpose.msra.mxu0 0
      %1519 = vmatpush.bf16.xpose.msra.mxu0 0
      %1520 = vmatpush.bf16.xpose.msra.mxu0 0
      %1521 = vmatpush.bf16.xpose.msra.mxu0 0
      %1522 = vmatpush.bf16.xpose.msra.mxu0 0
      %1523 = vmatpush.bf16.xpose.msra.mxu0 0
      %1524 = vmatpush.bf16.xpose.msra.mxu0 %v1515
      %1525 = vmatmul.bf16.gmra.mxu0 %v1512
      %v1526 = vpop.f32.mrf.mxu0
      %v1527 = vadd.f32 %v1499, %v1526
      %v1528 = vpop.f32.mrf.mxu0
      %v1529 = vadd.f32 %v1499, %v1528
      %1530 = vdwg.mxu0
      %v1531 = vsel %vm993, %v1527, -inf
      %1532 = vmax.xlane.f32.xlu0 %v1531
      %v1533 = vpop.xlane.xlu0 %1532
      %v1534 = vsel %vm993, %v1529, -inf
      %1535 = vmax.xlane.f32.xlu0 %v1534
      %v1536 = vpop.xlane.xlu0 %1535
      %v1537 = vsub.f32 %v1527, %v1533
      %v1538 = vsub.f32 %v1529, %v1536
      %v1539 = vmul.f32 %v1537, 1.442695
      %v1540 = vpow.pop %v1539
      %v1541 = vmul.f32 %v1538, 1.442695
      %v1542 = vpow.pop %v1541
      %v1543 = vsel %vm993, %v1540, 0.0
      %1544 = vadd.xlane.f32.xlu0 %v1543
      %v1545 = vpop.xlane.xlu0 %1544
      %v1546 = vsel %vm993, %v1542, 0.0
      %1547 = vadd.xlane.f32.xlu0 %v1546
      %v1548 = vpop.xlane.xlu0 %1547
      %v1549 = vrcp.pop %v1545
      %v1550 = vrcp.pop %v1548
      %v1551 = vmul.f32 %v1540, %v1549
      %v1552 = vmul.f32 %v1542, %v1550
      %v1553 = vpack.c.bf16 %v1552, %v1551
      %v1556 = vunpack.c.l.b16 %v1493
      %v1557 = vunpack.c.l.b16 %v1494
      %v1558 = vpack.c.b16 %v1557, %v1556
      %v1561 = vsel %vm993, %v1553, 0
      %1563 = vmatpush.bf16.msra.mxu0 0
      %1564 = vmatpush.bf16.msra.mxu0 0
      %1565 = vmatpush.bf16.msra.mxu0 0
      %1566 = vmatpush.bf16.msra.mxu0 0
      %1567 = vmatpush.bf16.msra.mxu0 0
      %1568 = vmatpush.bf16.msra.mxu0 0
      %1569 = vmatpush.bf16.msra.mxu0 0
      %1570 = vmatpush.bf16.msra.mxu0 %v1558
      %1571 = vmatmul.bf16.gmra.mxu0 %v1561
      %v1572 = vpop.f32.mrf.mxu0
      %v1573 = vadd.f32 0.0, %v1572
      %v1574 = vpop.f32.mrf.mxu0
      %v1575 = vadd.f32 0.0, %v1574
      %1576 = vdwg.mxu0
      %v1577 = vpack.c.bf16 %v1573, %v1573
      %v1578 = vpack.c.bf16 %v1575, %v1575
      %1579 = vst.msk [vmem:[#allocation2] sm:$0xf] %vm1042, %v1577
      %1580 = vst.msk [vmem:[#allocation2 + $0x4] sm:$0xf] %vm1042, %v1578
      %1581 = vrot.lane.b32.xlu0 %v1505, 64
      %v1582 = vpop.permute.xlu0 %1581
      %1583 = vrot.lane.b32.xlu0 %v1510, 64
      %v1584 = vpop.permute.xlu0 %1583
      %v1586 = vsel %vm972, %v1582, 0
      %v1589 = vsel %vm972, %v1584, 0
      %1591 = vmatpush.bf16.xpose.msra.mxu0 0
      %1592 = vmatpush.bf16.xpose.msra.mxu0 0
      %1593 = vmatpush.bf16.xpose.msra.mxu0 0
      %1594 = vmatpush.bf16.xpose.msra.mxu0 0
      %1595 = vmatpush.bf16.xpose.msra.mxu0 0
      %1596 = vmatpush.bf16.xpose.msra.mxu0 0
      %1597 = vmatpush.bf16.xpose.msra.mxu0 0
      %1598 = vmatpush.bf16.xpose.msra.mxu0 %v1589
      %1599 = vmatmul.bf16.gmra.mxu0 %v1586
      %v1600 = vpop.f32.mrf.mxu0
      %v1601 = vadd.f32 %v1499, %v1600
      %v1602 = vpop.f32.mrf.mxu0
      %v1603 = vadd.f32 %v1499, %v1602
      %1604 = vdwg.mxu0
      %v1605 = vsel %vm993, %v1601, -inf
      %1606 = vmax.xlane.f32.xlu0 %v1605
      %v1607 = vpop.xlane.xlu0 %1606
      %v1608 = vsel %vm993, %v1603, -inf
      %1609 = vmax.xlane.f32.xlu0 %v1608
      %v1610 = vpop.xlane.xlu0 %1609
      %v1611 = vsub.f32 %v1601, %v1607
      %v1612 = vsub.f32 %v1603, %v1610
      %v1613 = vmul.f32 %v1611, 1.442695
      %v1614 = vpow.pop %v1613
      %v1615 = vmul.f32 %v1612, 1.442695
      %v1616 = vpow.pop %v1615
      %v1617 = vsel %vm993, %v1614, 0.0
      %1618 = vadd.xlane.f32.xlu0 %v1617
      %v1619 = vpop.xlane.xlu0 %1618
      %v1620 = vsel %vm993, %v1616, 0.0
      %1621 = vadd.xlane.f32.xlu0 %v1620
      %v1622 = vpop.xlane.xlu0 %1621
      %v1623 = vrcp.pop %v1619
      %v1624 = vrcp.pop %v1622
      %v1625 = vmul.f32 %v1614, %v1623
      %v1626 = vmul.f32 %v1616, %v1624
      %v1627 = vpack.c.bf16 %v1626, %v1625
      %1628 = vrot.lane.b32.xlu0 %v1558, 64
      %v1629 = vpop.permute.xlu0 %1628
      %v1632 = vsel %vm993, %v1627, 0
      %1634 = vmatpush.bf16.msra.mxu0 0
      %1635 = vmatpush.bf16.msra.mxu0 0
      %1636 = vmatpush.bf16.msra.mxu0 0
      %1637 = vmatpush.bf16.msra.mxu0 0
      %1638 = vmatpush.bf16.msra.mxu0 0
      %1639 = vmatpush.bf16.msra.mxu0 0
      %1640 = vmatpush.bf16.msra.mxu0 0
      %1641 = vmatpush.bf16.msra.mxu0 %v1629
      %1642 = vmatmul.bf16.gmra.mxu0 %v1632
      %v1643 = vpop.f32.mrf.mxu0
      %v1644 = vadd.f32 0.0, %v1643
      %v1645 = vpop.f32.mrf.mxu0
      %v1646 = vadd.f32 0.0, %v1645
      %1647 = vdwg.mxu0
      %v1648 = vpack.c.bf16 %v1644, %v1644
      %v1649 = vpack.c.bf16 %v1646, %v1646
      %1652 = vrot.lane.b32.xlu0 %v1648, 64
      %v1653 = vpop.permute.xlu0 %1652
      %1654 = vrot.lane.b32.xlu0 %v1649, 64
      %v1655 = vpop.permute.xlu0 %1654
      %1658 = vst.msk [vmem:[#allocation2] sm:$0xf] %vm1122, %v1653
      %1659 = vst.msk [vmem:[#allocation2 + $0x4] sm:$0xf] %vm1122, %v1655
      %v1660 = vld [vmem:[#allocation2] sm:$0xf]
      %v1661 = vld [vmem:[#allocation2 + $0x4] sm:$0xf]
      %v1662 = vld [vmem:[%s11] sm:$0xf]
      %v1663 = vld [vmem:[%s11 + $0x4] sm:$0xf]
      %v1664 = vld [vmem:[%s11 + $0x8] sm:$0xf]
      %v1665 = vld [vmem:[%s11 + $0xc] sm:$0xf]
      %v1666 = vld [vmem:[%s11 + $0x10] sm:$0xf]
      %v1667 = vld [vmem:[%s11 + $0x14] sm:$0xf]
      %v1668 = vld [vmem:[%s11 + $0x18] sm:$0xf]
      %v1669 = vld [vmem:[%s11 + $0x1c] sm:$0xf]
      %v1670 = vld [vmem:[%s11 + $0x20] sm:$0xf]
      %v1671 = vld [vmem:[%s11 + $0x24] sm:$0xf]
      %v1672 = vld [vmem:[%s11 + $0x28] sm:$0xf]
      %v1673 = vld [vmem:[%s11 + $0x2c] sm:$0xf]
      %v1674 = vld [vmem:[%s11 + $0x30] sm:$0xf]
      %v1675 = vld [vmem:[%s11 + $0x34] sm:$0xf]
      %v1676 = vld [vmem:[%s11 + $0x38] sm:$0xf]
      %v1677 = vld [vmem:[%s11 + $0x3c] sm:$0xf]
      %v1678 = vld [vmem:[%s12] sm:$0x1]
      %v1680 = vperm.slane %v1678, 0
      %v1684 = vunpack.c.l.b16 %v1660
      %v1685 = vunpack.c.l.b16 %v1661
      %v1686 = vpack.c.b16 %v1685, %v1684
      %v1704 = vunpack.c.l.b16 %v1662
      %v1705 = vunpack.c.l.b16 %v1663
      %v1706 = vunpack.c.l.b16 %v1664
      %v1707 = vunpack.c.l.b16 %v1665
      %v1708 = vunpack.c.l.b16 %v1666
      %v1709 = vunpack.c.l.b16 %v1667
      %v1710 = vunpack.c.l.b16 %v1668
      %v1711 = vunpack.c.l.b16 %v1669
      %v1712 = vunpack.c.l.b16 %v1670
      %v1713 = vunpack.c.l.b16 %v1671
      %v1714 = vunpack.c.l.b16 %v1672
      %v1715 = vunpack.c.l.b16 %v1673
      %v1716 = vunpack.c.l.b16 %v1674
      %v1717 = vunpack.c.l.b16 %v1675
      %v1718 = vunpack.c.l.b16 %v1676
      %v1719 = vunpack.c.l.b16 %v1677
      %v1720 = vpack.c.b16 %v1705, %v1704
      %v1721 = vpack.c.b16 %v1707, %v1706
      %v1722 = vpack.c.b16 %v1709, %v1708
      %v1723 = vpack.c.b16 %v1711, %v1710
      %v1724 = vpack.c.b16 %v1713, %v1712
      %v1725 = vpack.c.b16 %v1715, %v1714
      %v1726 = vpack.c.b16 %v1717, %v1716
      %v1727 = vpack.c.b16 %v1719, %v1718
      %1736 = vmatpush.bf16.msra.mxu0 %v1727
      %1737 = vmatpush.bf16.msra.mxu0 %v1726
      %1738 = vmatpush.bf16.msra.mxu0 %v1725
      %1739 = vmatpush.bf16.msra.mxu0 %v1724
      %1740 = vmatpush.bf16.msra.mxu0 %v1723
      %1741 = vmatpush.bf16.msra.mxu0 %v1722
      %1742 = vmatpush.bf16.msra.mxu0 %v1721
      %1743 = vmatpush.bf16.msra.mxu0 %v1720
      %1744 = vmatmul.bf16.gmra.mxu0 %v1686
      %v1745 = vpop.f32.mrf.mxu0
      %v1746 = vadd.f32 %v1680, %v1745
      %v1747 = vpop.f32.mrf.mxu0
      %v1748 = vadd.f32 %v1680, %v1747
      %1749 = vdwg.mxu0
      %v1750 = vadd.f32 %v1746, %v1276
      %v1751 = vadd.f32 %v1748, %v1277
      %v1752 = vld [vmem:[%s13] sm:$0x1]
      %v1753 = vld [vmem:[%s14] sm:$0x1]
      %1754 = vadd.xlane.f32.xlu0 %v1750
      %v1755 = vpop.xlane.xlu0 %1754
      %1756 = vadd.xlane.f32.xlu0 %v1751
      %v1757 = vpop.xlane.xlu0 %1756
      %v1758 = vmul.f32 %v1755, %v1231
      %v1759 = vmul.f32 %v1757, %v1231
      %v1760 = vsub.f32 %v1750, %v1758
      %v1761 = vsub.f32 %v1751, %v1759
      %v1762 = vmul.f32 %v1760, %v1760
      %v1763 = vmul.f32 %v1761, %v1761
      %1764 = vadd.xlane.f32.xlu0 %v1762
      %v1765 = vpop.xlane.xlu0 %1764
      %1766 = vadd.xlane.f32.xlu0 %v1763
      %v1767 = vpop.xlane.xlu0 %1766
      %v1768 = vmul.f32 %v1765, %v1231
      %v1769 = vmul.f32 %v1767, %v1231
      %v1770 = vadd.f32 %v1768, 1e-06
      %v1771 = vadd.f32 %v1769, 1e-06
      %v1772 = vrsqrt.pop %v1770
      %v1773 = vmul.f32 %v1772, %v1770
      %v1774 = vmul.f32 %v1773, %v1772
      %v1775 = vmul.f32 0.5, %v1774
      %v1776 = vsub.f32 1.5, %v1775
      %v1777 = vmul.f32 %v1772, %v1776
      %vm1778 = vweird.f32 %v1770
      %vm1779 = vweird.f32 %v1772
      %vm1780 = vmor %vm1778, %vm1779
      %v1781 = vsel %vm1780, %v1772, %v1777
      %v1782 = vrsqrt.pop %v1771
      %v1783 = vmul.f32 %v1782, %v1771
      %v1784 = vmul.f32 %v1783, %v1782
      %v1785 = vmul.f32 0.5, %v1784
      %v1786 = vsub.f32 1.5, %v1785
      %v1787 = vmul.f32 %v1782, %v1786
      %vm1788 = vweird.f32 %v1771
      %vm1789 = vweird.f32 %v1782
      %vm1790 = vmor %vm1788, %vm1789
      %v1791 = vsel %vm1790, %v1782, %v1787
      %v1792 = vmul.f32 %v1760, %v1781
      %v1793 = vmul.f32 %v1761, %v1791
      %v1795 = vperm.slane %v1752, 0
      %v1797 = vmul.f32 %v1792, %v1795
      %v1798 = vmul.f32 %v1793, %v1795
      %v1800 = vperm.slane %v1753, 0
      %v1802 = vadd.f32 %v1797, %v1800
      %v1803 = vadd.f32 %v1798, %v1800
      %v1804 = vpack.c.bf16 %v1803, %v1802
      %v1805 = vld [vmem:[%s15] sm:$0xff]
      %v1806 = vld [vmem:[%s15 + $0x8] sm:$0xff]
      %v1807 = vld [vmem:[%s15 + $0x10] sm:$0xff]
      %v1808 = vld [vmem:[%s15 + $0x18] sm:$0xff]
      %v1809 = vld [vmem:[%s15 + $0x20] sm:$0xff]
      %v1810 = vld [vmem:[%s15 + $0x28] sm:$0xff]
      %v1811 = vld [vmem:[%s15 + $0x30] sm:$0xff]
      %v1812 = vld [vmem:[%s15 + $0x38] sm:$0xff]
      %v1813 = vld [vmem:[%s15 + $0x40] sm:$0xff]
      %v1814 = vld [vmem:[%s15 + $0x48] sm:$0xff]
      %v1815 = vld [vmem:[%s15 + $0x50] sm:$0xff]
      %v1816 = vld [vmem:[%s15 + $0x58] sm:$0xff]
      %v1817 = vld [vmem:[%s15 + $0x60] sm:$0xff]
      %v1818 = vld [vmem:[%s15 + $0x68] sm:$0xff]
      %v1819 = vld [vmem:[%s15 + $0x70] sm:$0xff]
      %v1820 = vld [vmem:[%s15 + $0x78] sm:$0xff]
      %v1821 = vld [vmem:[%s16] sm:$0x3]
      %v1823 = vperm.slane %v1821, 0
      %v1824 = vperm.slane %v1821, 1
      %v1843 = vunpack.c.l.b16 %v1805
      %v1844 = vunpack.c.h.b16 %v1805
      %v1845 = vunpack.c.l.b16 %v1806
      %v1846 = vunpack.c.h.b16 %v1806
      %v1847 = vunpack.c.l.b16 %v1807
      %v1848 = vunpack.c.h.b16 %v1807
      %v1849 = vunpack.c.l.b16 %v1808
      %v1850 = vunpack.c.h.b16 %v1808
      %v1851 = vunpack.c.l.b16 %v1809
      %v1852 = vunpack.c.h.b16 %v1809
      %v1853 = vunpack.c.l.b16 %v1810
      %v1854 = vunpack.c.h.b16 %v1810
      %v1855 = vunpack.c.l.b16 %v1811
      %v1856 = vunpack.c.h.b16 %v1811
      %v1857 = vunpack.c.l.b16 %v1812
      %v1858 = vunpack.c.h.b16 %v1812
      %v1859 = vunpack.c.l.b16 %v1813
      %v1860 = vunpack.c.h.b16 %v1813
      %v1861 = vunpack.c.l.b16 %v1814
      %v1862 = vunpack.c.h.b16 %v1814
      %v1863 = vunpack.c.l.b16 %v1815
      %v1864 = vunpack.c.h.b16 %v1815
      %v1865 = vunpack.c.l.b16 %v1816
      %v1866 = vunpack.c.h.b16 %v1816
      %v1867 = vunpack.c.l.b16 %v1817
      %v1868 = vunpack.c.h.b16 %v1817
      %v1869 = vunpack.c.l.b16 %v1818
      %v1870 = vunpack.c.h.b16 %v1818
      %v1871 = vunpack.c.l.b16 %v1819
      %v1872 = vunpack.c.h.b16 %v1819
      %v1873 = vunpack.c.l.b16 %v1820
      %v1874 = vunpack.c.h.b16 %v1820
      %v1875 = vpack.c.b16 %v1845, %v1843
      %v1876 = vpack.c.b16 %v1846, %v1844
      %v1877 = vpack.c.b16 %v1849, %v1847
      %v1878 = vpack.c.b16 %v1850, %v1848
      %v1879 = vpack.c.b16 %v1853, %v1851
      %v1880 = vpack.c.b16 %v1854, %v1852
      %v1881 = vpack.c.b16 %v1857, %v1855
      %v1882 = vpack.c.b16 %v1858, %v1856
      %v1883 = vpack.c.b16 %v1861, %v1859
      %v1884 = vpack.c.b16 %v1862, %v1860
      %v1885 = vpack.c.b16 %v1865, %v1863
      %v1886 = vpack.c.b16 %v1866, %v1864
      %v1887 = vpack.c.b16 %v1869, %v1867
      %v1888 = vpack.c.b16 %v1870, %v1868
      %v1889 = vpack.c.b16 %v1873, %v1871
      %v1890 = vpack.c.b16 %v1874, %v1872
      %1907 = vmatpush.bf16.msra.mxu0 %v1889
      %1908 = vmatpush.bf16.msra.mxu0 %v1887
      %1909 = vmatpush.bf16.msra.mxu0 %v1885
      %1910 = vmatpush.bf16.msra.mxu0 %v1883
      %1911 = vmatpush.bf16.msra.mxu0 %v1881
      %1912 = vmatpush.bf16.msra.mxu0 %v1879
      %1913 = vmatpush.bf16.msra.mxu0 %v1877
      %1914 = vmatpush.bf16.msra.mxu0 %v1875
      %1915 = vmatmul.bf16.gmra.mxu0 %v1804
      %v1916 = vpop.f32.mrf.mxu0
      %v1917 = vadd.f32 %v1823, %v1916
      %v1918 = vpop.f32.mrf.mxu0
      %v1919 = vadd.f32 %v1823, %v1918
      %1920 = vdwg.mxu0
      %1921 = vmatpush.bf16.msra.mxu0 %v1890
      %1922 = vmatpush.bf16.msra.mxu0 %v1888
      %1923 = vmatpush.bf16.msra.mxu0 %v1886
      %1924 = vmatpush.bf16.msra.mxu0 %v1884
      %1925 = vmatpush.bf16.msra.mxu0 %v1882
      %1926 = vmatpush.bf16.msra.mxu0 %v1880
      %1927 = vmatpush.bf16.msra.mxu0 %v1878
      %1928 = vmatpush.bf16.msra.mxu0 %v1876
      %1929 = vmatmul.bf16.gmra.mxu0 %v1804
      %v1930 = vpop.f32.mrf.mxu0
      %v1931 = vadd.f32 %v1824, %v1930
      %v1932 = vpop.f32.mrf.mxu0
      %v1933 = vadd.f32 %v1824, %v1932
      %1934 = vdwg.mxu0
      %v1935 = vmax.f32 %v1917, 0.0
      %v1936 = vmax.f32 %v1931, 0.0
      %v1937 = vmax.f32 %v1919, 0.0
      %v1938 = vmax.f32 %v1933, 0.0
      %v1939 = vpack.c.bf16 %v1937, %v1935
      %v1940 = vpack.c.bf16 %v1938, %v1936
      %v1941 = vld [vmem:[%s17] sm:$0xf]
      %v1942 = vld [vmem:[%s17 + $0x4] sm:$0xf]
      %v1943 = vld [vmem:[%s17 + $0x8] sm:$0xf]
      %v1944 = vld [vmem:[%s17 + $0xc] sm:$0xf]
      %v1945 = vld [vmem:[%s17 + $0x10] sm:$0xf]
      %v1946 = vld [vmem:[%s17 + $0x14] sm:$0xf]
      %v1947 = vld [vmem:[%s17 + $0x18] sm:$0xf]
      %v1948 = vld [vmem:[%s17 + $0x1c] sm:$0xf]
      %v1949 = vld [vmem:[%s17 + $0x20] sm:$0xf]
      %v1950 = vld [vmem:[%s17 + $0x24] sm:$0xf]
      %v1951 = vld [vmem:[%s17 + $0x28] sm:$0xf]
      %v1952 = vld [vmem:[%s17 + $0x2c] sm:$0xf]
      %v1953 = vld [vmem:[%s17 + $0x30] sm:$0xf]
      %v1954 = vld [vmem:[%s17 + $0x34] sm:$0xf]
      %v1955 = vld [vmem:[%s17 + $0x38] sm:$0xf]
      %v1956 = vld [vmem:[%s17 + $0x3c] sm:$0xf]
      %v1957 = vld [vmem:[%s17 + $0x40] sm:$0xf]
      %v1958 = vld [vmem:[%s17 + $0x44] sm:$0xf]
      %v1959 = vld [vmem:[%s17 + $0x48] sm:$0xf]
      %v1960 = vld [vmem:[%s17 + $0x4c] sm:$0xf]
      %v1961 = vld [vmem:[%s17 + $0x50] sm:$0xf]
      %v1962 = vld [vmem:[%s17 + $0x54] sm:$0xf]
      %v1963 = vld [vmem:[%s17 + $0x58] sm:$0xf]
      %v1964 = vld [vmem:[%s17 + $0x5c] sm:$0xf]
      %v1965 = vld [vmem:[%s17 + $0x60] sm:$0xf]
      %v1966 = vld [vmem:[%s17 + $0x64] sm:$0xf]
      %v1967 = vld [vmem:[%s17 + $0x68] sm:$0xf]
      %v1968 = vld [vmem:[%s17 + $0x6c] sm:$0xf]
      %v1969 = vld [vmem:[%s17 + $0x70] sm:$0xf]
      %v1970 = vld [vmem:[%s17 + $0x74] sm:$0xf]
      %v1971 = vld [vmem:[%s17 + $0x78] sm:$0xf]
      %v1972 = vld [vmem:[%s17 + $0x7c] sm:$0xf]
      %v1973 = vld [vmem:[%s18] sm:$0x1]
      %v1975 = vperm.slane %v1973, 0
      %v2009 = vunpack.c.l.b16 %v1941
      %v2010 = vunpack.c.l.b16 %v1942
      %v2011 = vunpack.c.l.b16 %v1943
      %v2012 = vunpack.c.l.b16 %v1944
      %v2013 = vunpack.c.l.b16 %v1945
      %v2014 = vunpack.c.l.b16 %v1946
      %v2015 = vunpack.c.l.b16 %v1947
      %v2016 = vunpack.c.l.b16 %v1948
      %v2017 = vunpack.c.l.b16 %v1949
      %v2018 = vunpack.c.l.b16 %v1950
      %v2019 = vunpack.c.l.b16 %v1951
      %v2020 = vunpack.c.l.b16 %v1952
      %v2021 = vunpack.c.l.b16 %v1953
      %v2022 = vunpack.c.l.b16 %v1954
      %v2023 = vunpack.c.l.b16 %v1955
      %v2024 = vunpack.c.l.b16 %v1956
      %v2025 = vunpack.c.l.b16 %v1957
      %v2026 = vunpack.c.l.b16 %v1958
      %v2027 = vunpack.c.l.b16 %v1959
      %v2028 = vunpack.c.l.b16 %v1960
      %v2029 = vunpack.c.l.b16 %v1961
      %v2030 = vunpack.c.l.b16 %v1962
      %v2031 = vunpack.c.l.b16 %v1963
      %v2032 = vunpack.c.l.b16 %v1964
      %v2033 = vunpack.c.l.b16 %v1965
      %v2034 = vunpack.c.l.b16 %v1966
      %v2035 = vunpack.c.l.b16 %v1967
      %v2036 = vunpack.c.l.b16 %v1968
      %v2037 = vunpack.c.l.b16 %v1969
      %v2038 = vunpack.c.l.b16 %v1970
      %v2039 = vunpack.c.l.b16 %v1971
      %v2040 = vunpack.c.l.b16 %v1972
      %v2041 = vpack.c.b16 %v2010, %v2009
      %v2042 = vpack.c.b16 %v2012, %v2011
      %v2043 = vpack.c.b16 %v2014, %v2013
      %v2044 = vpack.c.b16 %v2016, %v2015
      %v2045 = vpack.c.b16 %v2018, %v2017
      %v2046 = vpack.c.b16 %v2020, %v2019
      %v2047 = vpack.c.b16 %v2022, %v2021
      %v2048 = vpack.c.b16 %v2024, %v2023
      %v2049 = vpack.c.b16 %v2026, %v2025
      %v2050 = vpack.c.b16 %v2028, %v2027
      %v2051 = vpack.c.b16 %v2030, %v2029
      %v2052 = vpack.c.b16 %v2032, %v2031
      %v2053 = vpack.c.b16 %v2034, %v2033
      %v2054 = vpack.c.b16 %v2036, %v2035
      %v2055 = vpack.c.b16 %v2038, %v2037
      %v2056 = vpack.c.b16 %v2040, %v2039
      %2073 = vmatpush.bf16.msra.mxu0 %v2048
      %2074 = vmatpush.bf16.msra.mxu0 %v2047
      %2075 = vmatpush.bf16.msra.mxu0 %v2046
      %2076 = vmatpush.bf16.msra.mxu0 %v2045
      %2077 = vmatpush.bf16.msra.mxu0 %v2044
      %2078 = vmatpush.bf16.msra.mxu0 %v2043
      %2079 = vmatpush.bf16.msra.mxu0 %v2042
      %2080 = vmatpush.bf16.msra.mxu0 %v2041
      %2081 = vmatmul.bf16.gmra.mxu0 %v1939
      %v2082 = vpop.f32.mrf.mxu0
      %v2083 = vadd.f32 %v1975, %v2082
      %v2084 = vpop.f32.mrf.mxu0
      %v2085 = vadd.f32 %v1975, %v2084
      %2086 = vdwg.mxu0
      %2087 = vmatpush.bf16.msra.mxu0 %v2056
      %2088 = vmatpush.bf16.msra.mxu0 %v2055
      %2089 = vmatpush.bf16.msra.mxu0 %v2054
      %2090 = vmatpush.bf16.msra.mxu0 %v2053
      %2091 = vmatpush.bf16.msra.mxu0 %v2052
      %2092 = vmatpush.bf16.msra.mxu0 %v2051
      %2093 = vmatpush.bf16.msra.mxu0 %v2050
      %2094 = vmatpush.bf16.msra.mxu0 %v2049
      %2095 = vmatmul.bf16.gmra.mxu0 %v1940
      %v2096 = vpop.f32.mrf.mxu0
      %v2097 = vadd.f32 %v2083, %v2096
      %v2098 = vpop.f32.mrf.mxu0
      %v2099 = vadd.f32 %v2085, %v2098
      %2100 = vdwg.mxu0
      %v2101 = vadd.f32 %v2097, %v1802
      %v2102 = vadd.f32 %v2099, %v1803
      %v2103 = vld [vmem:[%s19] sm:$0x1]
      %v2104 = vld [vmem:[%s20] sm:$0x1]
      %2105 = vadd.xlane.f32.xlu0 %v2101
      %v2106 = vpop.xlane.xlu0 %2105
      %2107 = vadd.xlane.f32.xlu0 %v2102
      %v2108 = vpop.xlane.xlu0 %2107
      %v2109 = vmul.f32 %v2106, %v1231
      %v2110 = vmul.f32 %v2108, %v1231
      %v2111 = vsub.f32 %v2101, %v2109
      %v2112 = vsub.f32 %v2102, %v2110
      %v2113 = vmul.f32 %v2111, %v2111
      %v2114 = vmul.f32 %v2112, %v2112
      %2115 = vadd.xlane.f32.xlu0 %v2113
      %v2116 = vpop.xlane.xlu0 %2115
      %2117 = vadd.xlane.f32.xlu0 %v2114
      %v2118 = vpop.xlane.xlu0 %2117
      %v2119 = vmul.f32 %v2116, %v1231
      %v2120 = vmul.f32 %v2118, %v1231
      %v2121 = vadd.f32 %v2119, 1e-06
      %v2122 = vadd.f32 %v2120, 1e-06
      %v2123 = vrsqrt.pop %v2121
      %v2124 = vmul.f32 %v2123, %v2121
      %v2125 = vmul.f32 %v2124, %v2123
      %v2126 = vmul.f32 0.5, %v2125
      %v2127 = vsub.f32 1.5, %v2126
      %v2128 = vmul.f32 %v2123, %v2127
      %vm2129 = vweird.f32 %v2121
      %vm2130 = vweird.f32 %v2123
      %vm2131 = vmor %vm2129, %vm2130
      %v2132 = vsel %vm2131, %v2123, %v2128
      %v2133 = vrsqrt.pop %v2122
      %v2134 = vmul.f32 %v2133, %v2122
      %v2135 = vmul.f32 %v2134, %v2133
      %v2136 = vmul.f32 0.5, %v2135
      %v2137 = vsub.f32 1.5, %v2136
      %v2138 = vmul.f32 %v2133, %v2137
      %vm2139 = vweird.f32 %v2122
      %vm2140 = vweird.f32 %v2133
      %vm2141 = vmor %vm2139, %vm2140
      %v2142 = vsel %vm2141, %v2133, %v2138
      %v2143 = vmul.f32 %v2111, %v2132
      %v2144 = vmul.f32 %v2112, %v2142
      %v2146 = vperm.slane %v2103, 0
      %v2148 = vmul.f32 %v2143, %v2146
      %v2149 = vmul.f32 %v2144, %v2146
      %v2151 = vperm.slane %v2104, 0
      %v2153 = vadd.f32 %v2148, %v2151
      %v2154 = vadd.f32 %v2149, %v2151
      %v2155 = vpack.c.bf16 %v2153, %v2153
      %v2156 = vpack.c.bf16 %v2154, %v2154
      %2157 = vst [vmem:[%s726] sm:$0xf] %v2155
      %2158 = vst [vmem:[%s726 + $0x4] sm:$0xf] %v2156
      %s2159 = smul.u32 2, %s37
      %p2160 = scmp.lt.s32.totalorder %s36, 1
      %s2161 = scalar_select %p2160, %s36, 1
      %p2162 = scmp.lt.s32.totalorder %s2159, 1
      %s2163 = scalar_select %p2162, %s2159, 1
      %s2164 = smul.addr %s2161, 2
      %s2165 = sadd.s32 %s2163, %s2164
      %s2166 = smul.addr %s2165, 4
      %s2167 = scalar_lea.vmem %s21, %s2166
      // Predicated region
      $region105: #{decoder_forward.3} parent=103 // pred_check
        %p2168 = pneg %p525
      $region106: #{decoder_forward.3} parent=103 // pred_check_branch
        %2170 = sbr.rel (%p2168) target = $region108
      $region107: #{decoder_forward.3} parent=103 // pred_region
        %s2171 = smul.u32 2, %s37
      $region108: #{decoder_forward.3} parent=103 // pred_fallthru
        _
    $region104: #{decoder_forward.3} parent=5 // pred_fallthru
      _
    %p2172 = scmp.le.s32.totalorder 2, %s27
    // Predicated region
    $region109: #{decoder_forward.3} parent=5 // pred_check
      %p2173 = pneg %p2172
    $region110: #{decoder_forward.3} parent=5 // pred_check_branch
      %2175 = sbr.rel (%p2173) target = $region112
    $region111: #{decoder_forward.3} parent=5 // pred_region
      %s2176 = ssub.s32 %s27, 2
      // Predicated region
      $region113: #{decoder_forward.3} parent=111 // pred_check
        %p2177 = pneg %p531
      $region114: #{decoder_forward.3} parent=111 // pred_check_branch
        %2179 = sbr.rel (%p2177) target = $region116
      $region115: #{decoder_forward.3} parent=111 // pred_region
        %s2180 = smul.u32 2, %s39
        %p2181 = scmp.lt.s32.totalorder %s38, 1
        %s2182 = scalar_select %p2181, %s38, 1
        %p2183 = scmp.lt.s32.totalorder %s2180, 1
        %s2184 = scalar_select %p2183, %s2180, 1
        %s2185 = smul.addr %s2182, 2
        %s2186 = sadd.s32 %s2184, %s2185
        %s2187 = smul.addr %s2186, 4
        %s2188 = scalar_lea.vmem %s21, %s2187
      $region116: #{decoder_forward.3} parent=111 // pred_fallthru
        _
    $region112: #{decoder_forward.3} parent=5 // pred_fallthru
      _
  $region6: #{decoder_forward.3} parent=0 // loop_footer
    %s31 = sadd.s32 1, %s27
  $region7: #{decoder_forward.3} parent=0 // loop_footer_branch
    %26 = sbr.rel target = $region3
  $region8: #{decoder_forward.3} parent=0 // loop_exit
    _

</llo_original>
